<compile_context>
chip_gen: v5e
topology: v5e:2x2
jax: 0.10.0
libtpu: 0.0.40
codegen_flags: <defaults>
</compile_context>

<pallas_src>
import jax
import jax.numpy as jnp
from jax.experimental import pallas as pl
from jax.experimental.pallas import tpu as pltpu

LANE = 128  # TPU lane width; hidden / gate / MLP dims are padded to this.


# ----------------------------------------------------------------------------
# Pallas kernel
# ----------------------------------------------------------------------------
def _sepsis_kernel(
    x_ref,        # (T+1, Fp) bf16: rows 0..T-1 = [x_t | 1 | (t>0)]; row T = [0 | 0 | 1]
    w_in_ref,     # (Fp, 8Hp) bf16: input projection + folded biases, both layers
    w_rec_ref,    # (2Hp, 8Hp) bf16: fused recurrent block matrix
    wm1_ref, bm1_ref,   # Linear(H  -> 100), padded: (Hp, 128) bf16, (1, 128) f32
    wm2_ref, bm2_ref,   # Linear(100-> 20),  padded: (128,128) bf16, (1, 128) f32
    wm3_ref, bm3_ref,   # Linear(20 -> 2),   padded: (128,128) bf16, (1, 128) f32
    out_ref,      # (1, 128) f32; wrapper slices [:, :2]
    xg_ref,       # scratch: (T+1, 8Hp) f32
):
  n_steps = x_ref.shape[0]        # T + 1 (extra row drives the epilogue L1 step)
  Hp = wm1_ref.shape[0]

  # (1) Hoisted input projection with all biases folded (via the two constant
  #     columns appended to x).  Gate-block lane layout: [i0 i1 f0 f1 o0 o1 g0 g1].
  xg_ref[...] = jnp.dot(x_ref[...], w_in_ref[...],
                        preferred_element_type=jnp.float32)

  w_rec = w_rec_ref[...]

  # (2) Wavefront recurrence, fully unrolled.  Iteration w computes layer-0
  #     step w and layer-1 step w-1 simultaneously from the previous carries.
  #     State is lane-concatenated: h_cat = [h0 | h1], c_cat = [c0 | c1].
  h_cat = jnp.zeros((1, 2 * Hp), jnp.float32)
  c_cat = jnp.zeros((1, 2 * Hp), jnp.float32)

  for w in range(n_steps):
    gates = xg_ref[w:w + 1, :]                          # (1, 8Hp) row load
    if w > 0:  # h_cat == 0 at w == 0: skip the vacuous matmul
      gates = gates + jnp.dot(h_cat.astype(jnp.bfloat16), w_rec,
                              preferred_element_type=jnp.float32)
    sig = jax.nn.sigmoid(gates[:, :6 * Hp])             # [i0 i1 | f0 f1 | o0 o1]
    i_cat = sig[:, 0 * Hp:2 * Hp]
    f_cat = sig[:, 2 * Hp:4 * Hp]
    o_cat = sig[:, 4 * Hp:6 * Hp]
    g_cat = jnp.tanh(gates[:, 6 * Hp:8 * Hp])           # [g0 | g1]
    c_cat = f_cat * c_cat + i_cat * g_cat               # both cells in one slab
    h_cat = o_cat * jnp.tanh(c_cat)

  # After w == T: layer-1 half of h_cat holds its final (t = T-1) hidden state.
  h1 = h_cat[:, Hp:2 * Hp]

  # (3) MLP head on the last timestep of the top LSTM layer (lane-padded dims).
  #     Dropout(p=0.2): identity in eval mode.
  z = jnp.dot(h1.astype(jnp.bfloat16), wm1_ref[...],
              preferred_element_type=jnp.float32) + bm1_ref[...]
  z = jnp.maximum(z, 0.0)
  z = jnp.dot(z.astype(jnp.bfloat16), wm2_ref[...],
              preferred_element_type=jnp.float32) + bm2_ref[...]
  z = jnp.maximum(z, 0.0)
  out_ref[...] = jnp.dot(z.astype(jnp.bfloat16), wm3_ref[...],
                         preferred_element_type=jnp.float32) + bm3_ref[...]


# ----------------------------------------------------------------------------
# Wrapper
# ----------------------------------------------------------------------------
@jax.jit
def sepsis_forward(x, kp):
  """x: (T, F) or (1, T, F) float32 — the PyTorch 2-D / batch==1 path."""
  if x.ndim == 3:
    # TODO(synk): the B>1 PyTorch branch (squeeze()[-1] keeping only the LAST
    # batch element) is not replicated; only the 2-D / B==1 path is supported.
    x = x[0]

  T, F = x.shape
  Fp = kp["w_in"].shape[0]
  Hp = kp["wm1"].shape[0]

  # Augment x with the two bias-selector columns:
  #   col F   = 1           -> applies b0 to the layer-0 gate blocks,
  #   col F+1 = (t > 0)     -> applies b1 to the layer-1 gate blocks (0 at t=0
  #                            keeps the spurious first wavefront L1 step a no-op).
  # One extra all-zero row (with col F+1 = 1) drives the epilogue L1 step.
  ones_col = jnp.ones((T, 1), x.dtype)
  b1_col = jnp.concatenate(
      [jnp.zeros((1, 1), x.dtype), jnp.ones((T - 1, 1), x.dtype)], axis=0)
  x_aug = jnp.concatenate([x, ones_col, b1_col], axis=1)       # (T, F+2)
  x_aug = jnp.pad(x_aug, ((0, 1), (0, Fp - (F + 2))))          # (T+1, Fp)
  x_aug = x_aug.at[T, F + 1].set(1.0)                          # epilogue: b1 only
  x_aug = x_aug.astype(jnp.bfloat16)

  operands = (
      x_aug, kp["w_in"], kp["w_rec"],
      kp["wm1"], kp["bm1"], kp["wm2"], kp["bm2"], kp["wm3"], kp["bm3"],
  )
  vmem = pl.BlockSpec(memory_space=pltpu.MemorySpace.VMEM)
  out_padded = pl.pallas_call(
      _sepsis_kernel,
      out_shape=jax.ShapeDtypeStruct((1, LANE), jnp.float32),
      in_specs=[vmem] * len(operands),
      out_specs=vmem,
      scratch_shapes=[pltpu.VMEM((T + 1, 8 * Hp), jnp.float32)],
  )(*operands)
  return out_padded[:, :2]


# ----------------------------------------------------------------------------
# Parameter construction / layout preparation
# ----------------------------------------------------------------------------
def init_torch_params(key, input_size, H):
  """PyTorch-layout parameters (gate row order i, f, g, o; weights (out, in))."""
  ks = jax.random.split(key, 14)
  u = lambda k, shape: jax.random.uniform(k, shape, jnp.float32, -0.1, 0.1)
  return {
      "w_ih0": u(ks[0], (4 * H, input_size)), "w_hh0": u(ks[1], (4 * H, H)),
      "b_ih0": u(ks[2], (4 * H,)),            "b_hh0": u(ks[3], (4 * H,)),
      "w_ih1": u(ks[4], (4 * H, H)),          "w_hh1": u(ks[5], (4 * H, H)),
      "b_ih1": u(ks[6], (4 * H,)),            "b_hh1": u(ks[7], (4 * H,)),
      "w1": u(ks[8], (100, H)),   "b1": u(ks[9], (100,)),
      "w2": u(ks[10], (20, 100)), "b2": u(ks[11], (20,)),
      "w3": u(ks[12], (2, 20)),   "b3": u(ks[13], (2,)),
  }


def prepare_kernel_params(tp, input_size, H, Hp):
  """Build fused, lane-padded, bf16 kernel weights from PyTorch-layout params.

  Gate-block lane layout (Hp lanes per block): [i0 i1 f0 f1 o0 o1 g0 g1],
  suffix = LSTM layer.  i/f/o feed one wide sigmoid slab, g the tanh slab.
  Biases are folded into W_in via the two constant columns appended to x.
  """
  Fp = ((input_size + 2 + LANE - 1) // LANE) * LANE
  G = 8 * Hp
  TORCH_GATE = {"i": 0, "f": 1, "g": 2, "o": 3}           # torch row order
  BLOCK = {("i", 0): 0, ("i", 1): 1, ("f", 0): 2, ("f", 1): 3,
           ("o", 0): 4, ("o", 1): 5, ("g", 0): 6, ("g", 1): 7}

  def gate_rows(w, g):            # w: (4H, in_dim) torch layout -> (in_dim, H)
    k = TORCH_GATE[g]
    return w[k * H:(k + 1) * H, :].T

  def gate_vec(b, g):
    k = TORCH_GATE[g]
    return b[k * H:(k + 1) * H]

  def place(dst, rows, row_off, g, layer):
    blk = BLOCK[(g, layer)]
    return dst.at[row_off:row_off + rows.shape[0],
                  blk * Hp:blk * Hp + rows.shape[1]].set(rows)

  # --- W_in: x features -> layer-0 gate blocks; two bias rows (b0 / b1).
  w_in = jnp.zeros((Fp, G), jnp.float32)
  b_l0 = tp["b_ih0"] + tp["b_hh0"]
  b_l1 = tp["b_ih1"] + tp["b_hh1"]
  for g in "ifgo":
    w_in = place(w_in, gate_rows(tp["w_ih0"], g), 0, g, 0)
    w_in = place(w_in, gate_vec(b_l0, g)[None, :], input_size, g, 0)
    w_in = place(w_in, gate_vec(b_l1, g)[None, :], input_size + 1, g, 1)

  # --- W_rec: fused block matrix [[Whh0 -> L0, Wih1 -> L1], [0, Whh1 -> L1]].
  w_rec = jnp.zeros((2 * Hp, G), jnp.float32)
  for g in "ifgo":
    w_rec = place(w_rec, gate_rows(tp["w_hh0"], g), 0, g, 0)
    w_rec = place(w_rec, gate_rows(tp["w_ih1"], g), 0, g, 1)
    w_rec = place(w_rec, gate_rows(tp["w_hh1"], g), Hp, g, 1)

  def prep_linear(w, b, in_pad, out_pad):
    wt = jnp.zeros((in_pad, out_pad), jnp.float32)
    wt = wt.at[:w.shape[1], :w.shape[0]].set(w.T)
    bt = jnp.zeros((1, out_pad), jnp.float32).at[0, :b.shape[0]].set(b)
    return wt.astype(jnp.bfloat16), bt

  wm1, bm1 = prep_linear(tp["w1"], tp["b1"], Hp, LANE)
  wm2, bm2 = prep_linear(tp["w2"], tp["b2"], LANE, LANE)
  wm3, bm3 = prep_linear(tp["w3"], tp["b3"], LANE, LANE)

  return {
      "w_in": w_in.astype(jnp.bfloat16),
      "w_rec": w_rec.astype(jnp.bfloat16),
      "wm1": wm1, "bm1": bm1,
      "wm2": wm2, "bm2": bm2,
      "wm3": wm3, "bm3": bm3,
  }


# ----------------------------------------------------------------------------
# Pure-JAX f32 reference (PyTorch semantics) for correctness check
# ----------------------------------------------------------------------------
def ref_forward(x, tp, H):
  def cell(x_t, h, c, w_ih, w_hh, b_ih, b_hh):
    g = x_t @ w_ih.T + h @ w_hh.T + b_ih + b_hh
    i = jax.nn.sigmoid(g[:, 0 * H:1 * H])
    f = jax.nn.sigmoid(g[:, 1 * H:2 * H])
    gg = jnp.tanh(g[:, 2 * H:3 * H])
    o = jax.nn.sigmoid(g[:, 3 * H:4 * H])
    c = f * c + i * gg
    h = o * jnp.tanh(c)
    return h, c

  h0 = c0 = h1 = c1 = jnp.zeros((1, H), jnp.float32)
  for t in range(x.shape[0]):
    x_t = x[t:t + 1]
    h0, c0 = cell(x_t, h0, c0, tp["w_ih0"], tp["w_hh0"], tp["b_ih0"], tp["b_hh0"])
    h1, c1 = cell(h0, h1, c1, tp["w_ih1"], tp["w_hh1"], tp["b_ih1"], tp["b_hh1"])

  z = jnp.maximum(h1 @ tp["w1"].T + tp["b1"], 0.0)
  z = jnp.maximum(z @ tp["w2"].T + tp["b2"], 0.0)
  return z @ tp["w3"].T + tp["b3"]


if __name__ == "__main__":
  T = 8             # sequence length
  INPUT_SIZE = 16   # features per timestep
  HIDDEN = 32       # hidden_dim (module default is 100; kept small, padded to 128)
  Hp = ((HIDDEN + LANE - 1) // LANE) * LANE

  key = jax.random.PRNGKey(0)
  k_x, k_p = jax.random.split(key)
  x = jax.random.normal(k_x, (T, INPUT_SIZE), jnp.float32)

  torch_params = init_torch_params(k_p, INPUT_SIZE, HIDDEN)
  kparams = prepare_kernel_params(torch_params, INPUT_SIZE, HIDDEN, Hp)

  out = sepsis_forward(x, kparams)
  out = jax.block_until_ready(out)

  ref = ref_forward(x, torch_params, HIDDEN)
  assert out.shape == (1, 2), out.shape
  # bf16 weights/activations (f32 accumulation): relaxed tolerance per review.
  assert jnp.allclose(out, ref, atol=2e-2, rtol=2e-2), (out, ref)

  print("KERNEL_OK")
</pallas_src>

<mosaic_0001>
module attributes {stable_mosaic.version = 11 : i64} {
  func.func @_sepsis_kernel(%arg0: memref<9x128xbf16, #tpu.memory_space<vmem>>, %arg1: memref<128x1024xbf16, #tpu.memory_space<vmem>>, %arg2: memref<256x1024xbf16, #tpu.memory_space<vmem>>, %arg3: memref<128x128xbf16, #tpu.memory_space<vmem>>, %arg4: memref<1x128xf32, #tpu.memory_space<vmem>>, %arg5: memref<128x128xbf16, #tpu.memory_space<vmem>>, %arg6: memref<1x128xf32, #tpu.memory_space<vmem>>, %arg7: memref<128x128xbf16, #tpu.memory_space<vmem>>, %arg8: memref<1x128xf32, #tpu.memory_space<vmem>>, %arg9: memref<1x128xf32, #tpu.memory_space<vmem>>, %arg10: memref<9x1024xf32, #tpu.memory_space<vmem>>) attributes {dimension_semantics = [], scalar_prefetch = 0 : i64, scratch_operands = 1 : i64, tpu.core_type = #tpu.core_type<tc>} {
    %c0 = arith.constant 0 : index
    %c0_0 = arith.constant 0 : index
    %0 = vector.load %arg0[%c0, %c0_0] : memref<9x128xbf16, #tpu.memory_space<vmem>>, vector<9x128xbf16>
    %c0_1 = arith.constant 0 : index
    %c0_2 = arith.constant 0 : index
    %1 = vector.load %arg1[%c0_1, %c0_2] : memref<128x1024xbf16, #tpu.memory_space<vmem>>, vector<128x1024xbf16>
    %cst = arith.constant dense<0.000000e+00> : vector<9x1024xf32>
    %2 = tpu.matmul %0, %1, %cst {dimension_numbers = #tpu.dot_dimension_numbers<[1], [0], [0], [1], [0, 0, 1, 1], [], []>} : vector<9x128xbf16>, vector<128x1024xbf16>, vector<9x1024xf32> -> vector<9x1024xf32>
    %c0_3 = arith.constant 0 : index
    %c0_4 = arith.constant 0 : index
    %3 = vector.load %arg10[%c0_3, %c0_4] : memref<9x1024xf32, #tpu.memory_space<vmem>>, vector<9x1024xf32>
    tpu.vector_store %arg10[%c0_3, %c0_4], %2 {strides = array<i32>} : memref<9x1024xf32, #tpu.memory_space<vmem>>, vector<9x1024xf32>,
    %c0_5 = arith.constant 0 : index
    %c0_6 = arith.constant 0 : index
    %4 = vector.load %arg2[%c0_5, %c0_6] : memref<256x1024xbf16, #tpu.memory_space<vmem>>, vector<256x1024xbf16>
    %cst_7 = arith.constant 0.000000e+00 : f32
    %5 = vector.broadcast %cst_7 : f32 to vector<1x256xf32>
    %c0_8 = arith.constant 0 : index
    %c0_9 = arith.constant 0 : index
    %6 = vector.load %arg10[%c0_8, %c0_9] : memref<9x1024xf32, #tpu.memory_space<vmem>>, vector<1x1024xf32>
    %7 = vector.extract_strided_slice %6 {offsets = [0, 0], sizes = [1, 768], strides = [1, 1]} : vector<1x1024xf32> to vector<1x768xf32>
    %8 = arith.negf %7 : vector<1x768xf32>
    %9 = math.exp %8 : vector<1x768xf32>
    %cst_10 = arith.constant 1.000000e+00 : f32
    %10 = vector.broadcast %cst_10 : f32 to vector<1x768xf32>
    %11 = arith.addf %10, %9 : vector<1x768xf32>
    %12 = arith.divf %10, %11 : vector<1x768xf32>
    %13 = vector.extract_strided_slice %12 {offsets = [0, 0], sizes = [1, 256], strides = [1, 1]} : vector<1x768xf32> to vector<1x256xf32>
    %14 = vector.extract_strided_slice %12 {offsets = [0, 256], sizes = [1, 256], strides = [1, 1]} : vector<1x768xf32> to vector<1x256xf32>
    %15 = vector.extract_strided_slice %12 {offsets = [0, 512], sizes = [1, 256], strides = [1, 1]} : vector<1x768xf32> to vector<1x256xf32>
    %16 = vector.extract_strided_slice %6 {offsets = [0, 768], sizes = [1, 256], strides = [1, 1]} : vector<1x1024xf32> to vector<1x256xf32>
    %17 = math.tanh %16 : vector<1x256xf32>
    %18 = arith.mulf %14, %5 : vector<1x256xf32>
    %19 = arith.mulf %13, %17 : vector<1x256xf32>
    %20 = arith.addf %18, %19 : vector<1x256xf32>
    %21 = math.tanh %20 : vector<1x256xf32>
    %22 = arith.mulf %15, %21 : vector<1x256xf32>
    %c1 = arith.constant 1 : index
    %c0_11 = arith.constant 0 : index
    %23 = vector.load %arg10[%c1, %c0_11] : memref<9x1024xf32, #tpu.memory_space<vmem>>, vector<1x1024xf32>
    %24 = arith.truncf %22 : vector<1x256xf32> to vector<1x256xbf16>
    %cst_12 = arith.constant dense<0.000000e+00> : vector<1x1024xf32>
    %25 = tpu.matmul %24, %4, %cst_12 {dimension_numbers = #tpu.dot_dimension_numbers<[1], [0], [0], [1], [0, 0, 1, 1], [], []>} : vector<1x256xbf16>, vector<256x1024xbf16>, vector<1x1024xf32> -> vector<1x1024xf32>
    %26 = arith.addf %23, %25 : vector<1x1024xf32>
    %27 = vector.extract_strided_slice %26 {offsets = [0, 0], sizes = [1, 768], strides = [1, 1]} : vector<1x1024xf32> to vector<1x768xf32>
    %28 = arith.negf %27 : vector<1x768xf32>
    %29 = math.exp %28 : vector<1x768xf32>
    %cst_13 = arith.constant 1.000000e+00 : f32
    %30 = vector.broadcast %cst_13 : f32 to vector<1x768xf32>
    %31 = arith.addf %30, %29 : vector<1x768xf32>
    %32 = arith.divf %30, %31 : vector<1x768xf32>
    %33 = vector.extract_strided_slice %32 {offsets = [0, 0], sizes = [1, 256], strides = [1, 1]} : vector<1x768xf32> to vector<1x256xf32>
    %34 = vector.extract_strided_slice %32 {offsets = [0, 256], sizes = [1, 256], strides = [1, 1]} : vector<1x768xf32> to vector<1x256xf32>
    %35 = vector.extract_strided_slice %32 {offsets = [0, 512], sizes = [1, 256], strides = [1, 1]} : vector<1x768xf32> to vector<1x256xf32>
    %36 = vector.extract_strided_slice %26 {offsets = [0, 768], sizes = [1, 256], strides = [1, 1]} : vector<1x1024xf32> to vector<1x256xf32>
    %37 = math.tanh %36 : vector<1x256xf32>
    %38 = arith.mulf %34, %20 : vector<1x256xf32>
    %39 = arith.mulf %33, %37 : vector<1x256xf32>
    %40 = arith.addf %38, %39 : vector<1x256xf32>
    %41 = math.tanh %40 : vector<1x256xf32>
    %42 = arith.mulf %35, %41 : vector<1x256xf32>
    %c2 = arith.constant 2 : index
    %c0_14 = arith.constant 0 : index
    %43 = vector.load %arg10[%c2, %c0_14] : memref<9x1024xf32, #tpu.memory_space<vmem>>, vector<1x1024xf32>
    %44 = arith.truncf %42 : vector<1x256xf32> to vector<1x256xbf16>
    %cst_15 = arith.constant dense<0.000000e+00> : vector<1x1024xf32>
    %45 = tpu.matmul %44, %4, %cst_15 {dimension_numbers = #tpu.dot_dimension_numbers<[1], [0], [0], [1], [0, 0, 1, 1], [], []>} : vector<1x256xbf16>, vector<256x1024xbf16>, vector<1x1024xf32> -> vector<1x1024xf32>
    %46 = arith.addf %43, %45 : vector<1x1024xf32>
    %47 = vector.extract_strided_slice %46 {offsets = [0, 0], sizes = [1, 768], strides = [1, 1]} : vector<1x1024xf32> to vector<1x768xf32>
    %48 = arith.negf %47 : vector<1x768xf32>
    %49 = math.exp %48 : vector<1x768xf32>
    %cst_16 = arith.constant 1.000000e+00 : f32
    %50 = vector.broadcast %cst_16 : f32 to vector<1x768xf32>
    %51 = arith.addf %50, %49 : vector<1x768xf32>
    %52 = arith.divf %50, %51 : vector<1x768xf32>
    %53 = vector.extract_strided_slice %52 {offsets = [0, 0], sizes = [1, 256], strides = [1, 1]} : vector<1x768xf32> to vector<1x256xf32>
    %54 = vector.extract_strided_slice %52 {offsets = [0, 256], sizes = [1, 256], strides = [1, 1]} : vector<1x768xf32> to vector<1x256xf32>
    %55 = vector.extract_strided_slice %52 {offsets = [0, 512], sizes = [1, 256], strides = [1, 1]} : vector<1x768xf32> to vector<1x256xf32>
    %56 = vector.extract_strided_slice %46 {offsets = [0, 768], sizes = [1, 256], strides = [1, 1]} : vector<1x1024xf32> to vector<1x256xf32>
    %57 = math.tanh %56 : vector<1x256xf32>
    %58 = arith.mulf %54, %40 : vector<1x256xf32>
    %59 = arith.mulf %53, %57 : vector<1x256xf32>
    %60 = arith.addf %58, %59 : vector<1x256xf32>
    %61 = math.tanh %60 : vector<1x256xf32>
    %62 = arith.mulf %55, %61 : vector<1x256xf32>
    %c3 = arith.constant 3 : index
    %c0_17 = arith.constant 0 : index
    %63 = vector.load %arg10[%c3, %c0_17] : memref<9x1024xf32, #tpu.memory_space<vmem>>, vector<1x1024xf32>
    %64 = arith.truncf %62 : vector<1x256xf32> to vector<1x256xbf16>
    %cst_18 = arith.constant dense<0.000000e+00> : vector<1x1024xf32>
    %65 = tpu.matmul %64, %4, %cst_18 {dimension_numbers = #tpu.dot_dimension_numbers<[1], [0], [0], [1], [0, 0, 1, 1], [], []>} : vector<1x256xbf16>, vector<256x1024xbf16>, vector<1x1024xf32> -> vector<1x1024xf32>
    %66 = arith.addf %63, %65 : vector<1x1024xf32>
    %67 = vector.extract_strided_slice %66 {offsets = [0, 0], sizes = [1, 768], strides = [1, 1]} : vector<1x1024xf32> to vector<1x768xf32>
    %68 = arith.negf %67 : vector<1x768xf32>
    %69 = math.exp %68 : vector<1x768xf32>
    %cst_19 = arith.constant 1.000000e+00 : f32
    %70 = vector.broadcast %cst_19 : f32 to vector<1x768xf32>
    %71 = arith.addf %70, %69 : vector<1x768xf32>
    %72 = arith.divf %70, %71 : vector<1x768xf32>
    %73 = vector.extract_strided_slice %72 {offsets = [0, 0], sizes = [1, 256], strides = [1, 1]} : vector<1x768xf32> to vector<1x256xf32>
    %74 = vector.extract_strided_slice %72 {offsets = [0, 256], sizes = [1, 256], strides = [1, 1]} : vector<1x768xf32> to vector<1x256xf32>
    %75 = vector.extract_strided_slice %72 {offsets = [0, 512], sizes = [1, 256], strides = [1, 1]} : vector<1x768xf32> to vector<1x256xf32>
    %76 = vector.extract_strided_slice %66 {offsets = [0, 768], sizes = [1, 256], strides = [1, 1]} : vector<1x1024xf32> to vector<1x256xf32>
    %77 = math.tanh %76 : vector<1x256xf32>
    %78 = arith.mulf %74, %60 : vector<1x256xf32>
    %79 = arith.mulf %73, %77 : vector<1x256xf32>
    %80 = arith.addf %78, %79 : vector<1x256xf32>
    %81 = math.tanh %80 : vector<1x256xf32>
    %82 = arith.mulf %75, %81 : vector<1x256xf32>
    %c4 = arith.constant 4 : index
    %c0_20 = arith.constant 0 : index
    %83 = vector.load %arg10[%c4, %c0_20] : memref<9x1024xf32, #tpu.memory_space<vmem>>, vector<1x1024xf32>
    %84 = arith.truncf %82 : vector<1x256xf32> to vector<1x256xbf16>
    %cst_21 = arith.constant dense<0.000000e+00> : vector<1x1024xf32>
    %85 = tpu.matmul %84, %4, %cst_21 {dimension_numbers = #tpu.dot_dimension_numbers<[1], [0], [0], [1], [0, 0, 1, 1], [], []>} : vector<1x256xbf16>, vector<256x1024xbf16>, vector<1x1024xf32> -> vector<1x1024xf32>
    %86 = arith.addf %83, %85 : vector<1x1024xf32>
    %87 = vector.extract_strided_slice %86 {offsets = [0, 0], sizes = [1, 768], strides = [1, 1]} : vector<1x1024xf32> to vector<1x768xf32>
    %88 = arith.negf %87 : vector<1x768xf32>
    %89 = math.exp %88 : vector<1x768xf32>
    %cst_22 = arith.constant 1.000000e+00 : f32
    %90 = vector.broadcast %cst_22 : f32 to vector<1x768xf32>
    %91 = arith.addf %90, %89 : vector<1x768xf32>
    %92 = arith.divf %90, %91 : vector<1x768xf32>
    %93 = vector.extract_strided_slice %92 {offsets = [0, 0], sizes = [1, 256], strides = [1, 1]} : vector<1x768xf32> to vector<1x256xf32>
    %94 = vector.extract_strided_slice %92 {offsets = [0, 256], sizes = [1, 256], strides = [1, 1]} : vector<1x768xf32> to vector<1x256xf32>
    %95 = vector.extract_strided_slice %92 {offsets = [0, 512], sizes = [1, 256], strides = [1, 1]} : vector<1x768xf32> to vector<1x256xf32>
    %96 = vector.extract_strided_slice %86 {offsets = [0, 768], sizes = [1, 256], strides = [1, 1]} : vector<1x1024xf32> to vector<1x256xf32>
    %97 = math.tanh %96 : vector<1x256xf32>
    %98 = arith.mulf %94, %80 : vector<1x256xf32>
    %99 = arith.mulf %93, %97 : vector<1x256xf32>
    %100 = arith.addf %98, %99 : vector<1x256xf32>
    %101 = math.tanh %100 : vector<1x256xf32>
    %102 = arith.mulf %95, %101 : vector<1x256xf32>
    %c5 = arith.constant 5 : index
    %c0_23 = arith.constant 0 : index
    %103 = vector.load %arg10[%c5, %c0_23] : memref<9x1024xf32, #tpu.memory_space<vmem>>, vector<1x1024xf32>
    %104 = arith.truncf %102 : vector<1x256xf32> to vector<1x256xbf16>
    %cst_24 = arith.constant dense<0.000000e+00> : vector<1x1024xf32>
    %105 = tpu.matmul %104, %4, %cst_24 {dimension_numbers = #tpu.dot_dimension_numbers<[1], [0], [0], [1], [0, 0, 1, 1], [], []>} : vector<1x256xbf16>, vector<256x1024xbf16>, vector<1x1024xf32> -> vector<1x1024xf32>
    %106 = arith.addf %103, %105 : vector<1x1024xf32>
    %107 = vector.extract_strided_slice %106 {offsets = [0, 0], sizes = [1, 768], strides = [1, 1]} : vector<1x1024xf32> to vector<1x768xf32>
    %108 = arith.negf %107 : vector<1x768xf32>
    %109 = math.exp %108 : vector<1x768xf32>
    %cst_25 = arith.constant 1.000000e+00 : f32
    %110 = vector.broadcast %cst_25 : f32 to vector<1x768xf32>
    %111 = arith.addf %110, %109 : vector<1x768xf32>
    %112 = arith.divf %110, %111 : vector<1x768xf32>
    %113 = vector.extract_strided_slice %112 {offsets = [0, 0], sizes = [1, 256], strides = [1, 1]} : vector<1x768xf32> to vector<1x256xf32>
    %114 = vector.extract_strided_slice %112 {offsets = [0, 256], sizes = [1, 256], strides = [1, 1]} : vector<1x768xf32> to vector<1x256xf32>
    %115 = vector.extract_strided_slice %112 {offsets = [0, 512], sizes = [1, 256], strides = [1, 1]} : vector<1x768xf32> to vector<1x256xf32>
    %116 = vector.extract_strided_slice %106 {offsets = [0, 768], sizes = [1, 256], strides = [1, 1]} : vector<1x1024xf32> to vector<1x256xf32>
    %117 = math.tanh %116 : vector<1x256xf32>
    %118 = arith.mulf %114, %100 : vector<1x256xf32>
    %119 = arith.mulf %113, %117 : vector<1x256xf32>
    %120 = arith.addf %118, %119 : vector<1x256xf32>
    %121 = math.tanh %120 : vector<1x256xf32>
    %122 = arith.mulf %115, %121 : vector<1x256xf32>
    %c6 = arith.constant 6 : index
    %c0_26 = arith.constant 0 : index
    %123 = vector.load %arg10[%c6, %c0_26] : memref<9x1024xf32, #tpu.memory_space<vmem>>, vector<1x1024xf32>
    %124 = arith.truncf %122 : vector<1x256xf32> to vector<1x256xbf16>
    %cst_27 = arith.constant dense<0.000000e+00> : vector<1x1024xf32>
    %125 = tpu.matmul %124, %4, %cst_27 {dimension_numbers = #tpu.dot_dimension_numbers<[1], [0], [0], [1], [0, 0, 1, 1], [], []>} : vector<1x256xbf16>, vector<256x1024xbf16>, vector<1x1024xf32> -> vector<1x1024xf32>
    %126 = arith.addf %123, %125 : vector<1x1024xf32>
    %127 = vector.extract_strided_slice %126 {offsets = [0, 0], sizes = [1, 768], strides = [1, 1]} : vector<1x1024xf32> to vector<1x768xf32>
    %128 = arith.negf %127 : vector<1x768xf32>
    %129 = math.exp %128 : vector<1x768xf32>
    %cst_28 = arith.constant 1.000000e+00 : f32
    %130 = vector.broadcast %cst_28 : f32 to vector<1x768xf32>
    %131 = arith.addf %130, %129 : vector<1x768xf32>
    %132 = arith.divf %130, %131 : vector<1x768xf32>
    %133 = vector.extract_strided_slice %132 {offsets = [0, 0], sizes = [1, 256], strides = [1, 1]} : vector<1x768xf32> to vector<1x256xf32>
    %134 = vector.extract_strided_slice %132 {offsets = [0, 256], sizes = [1, 256], strides = [1, 1]} : vector<1x768xf32> to vector<1x256xf32>
    %135 = vector.extract_strided_slice %132 {offsets = [0, 512], sizes = [1, 256], strides = [1, 1]} : vector<1x768xf32> to vector<1x256xf32>
    %136 = vector.extract_strided_slice %126 {offsets = [0, 768], sizes = [1, 256], strides = [1, 1]} : vector<1x1024xf32> to vector<1x256xf32>
    %137 = math.tanh %136 : vector<1x256xf32>
    %138 = arith.mulf %134, %120 : vector<1x256xf32>
    %139 = arith.mulf %133, %137 : vector<1x256xf32>
    %140 = arith.addf %138, %139 : vector<1x256xf32>
    %141 = math.tanh %140 : vector<1x256xf32>
    %142 = arith.mulf %135, %141 : vector<1x256xf32>
    %c7 = arith.constant 7 : index
    %c0_29 = arith.constant 0 : index
    %143 = vector.load %arg10[%c7, %c0_29] : memref<9x1024xf32, #tpu.memory_space<vmem>>, vector<1x1024xf32>
    %144 = arith.truncf %142 : vector<1x256xf32> to vector<1x256xbf16>
    %cst_30 = arith.constant dense<0.000000e+00> : vector<1x1024xf32>
    %145 = tpu.matmul %144, %4, %cst_30 {dimension_numbers = #tpu.dot_dimension_numbers<[1], [0], [0], [1], [0, 0, 1, 1], [], []>} : vector<1x256xbf16>, vector<256x1024xbf16>, vector<1x1024xf32> -> vector<1x1024xf32>
    %146 = arith.addf %143, %145 : vector<1x1024xf32>
    %147 = vector.extract_strided_slice %146 {offsets = [0, 0], sizes = [1, 768], strides = [1, 1]} : vector<1x1024xf32> to vector<1x768xf32>
    %148 = arith.negf %147 : vector<1x768xf32>
    %149 = math.exp %148 : vector<1x768xf32>
    %cst_31 = arith.constant 1.000000e+00 : f32
    %150 = vector.broadcast %cst_31 : f32 to vector<1x768xf32>
    %151 = arith.addf %150, %149 : vector<1x768xf32>
    %152 = arith.divf %150, %151 : vector<1x768xf32>
    %153 = vector.extract_strided_slice %152 {offsets = [0, 0], sizes = [1, 256], strides = [1, 1]} : vector<1x768xf32> to vector<1x256xf32>
    %154 = vector.extract_strided_slice %152 {offsets = [0, 256], sizes = [1, 256], strides = [1, 1]} : vector<1x768xf32> to vector<1x256xf32>
    %155 = vector.extract_strided_slice %152 {offsets = [0, 512], sizes = [1, 256], strides = [1, 1]} : vector<1x768xf32> to vector<1x256xf32>
    %156 = vector.extract_strided_slice %146 {offsets = [0, 768], sizes = [1, 256], strides = [1, 1]} : vector<1x1024xf32> to vector<1x256xf32>
    %157 = math.tanh %156 : vector<1x256xf32>
    %158 = arith.mulf %154, %140 : vector<1x256xf32>
    %159 = arith.mulf %153, %157 : vector<1x256xf32>
    %160 = arith.addf %158, %159 : vector<1x256xf32>
    %161 = math.tanh %160 : vector<1x256xf32>
    %162 = arith.mulf %155, %161 : vector<1x256xf32>
    %c8 = arith.constant 8 : index
    %c0_32 = arith.constant 0 : index
    %163 = vector.load %arg10[%c8, %c0_32] : memref<9x1024xf32, #tpu.memory_space<vmem>>, vector<1x1024xf32>
    %164 = arith.truncf %162 : vector<1x256xf32> to vector<1x256xbf16>
    %cst_33 = arith.constant dense<0.000000e+00> : vector<1x1024xf32>
    %165 = tpu.matmul %164, %4, %cst_33 {dimension_numbers = #tpu.dot_dimension_numbers<[1], [0], [0], [1], [0, 0, 1, 1], [], []>} : vector<1x256xbf16>, vector<256x1024xbf16>, vector<1x1024xf32> -> vector<1x1024xf32>
    %166 = arith.addf %163, %165 : vector<1x1024xf32>
    %167 = vector.extract_strided_slice %166 {offsets = [0, 0], sizes = [1, 768], strides = [1, 1]} : vector<1x1024xf32> to vector<1x768xf32>
    %168 = arith.negf %167 : vector<1x768xf32>
    %169 = math.exp %168 : vector<1x768xf32>
    %cst_34 = arith.constant 1.000000e+00 : f32
    %170 = vector.broadcast %cst_34 : f32 to vector<1x768xf32>
    %171 = arith.addf %170, %169 : vector<1x768xf32>
    %172 = arith.divf %170, %171 : vector<1x768xf32>
    %173 = vector.extract_strided_slice %172 {offsets = [0, 0], sizes = [1, 256], strides = [1, 1]} : vector<1x768xf32> to vector<1x256xf32>
    %174 = vector.extract_strided_slice %172 {offsets = [0, 256], sizes = [1, 256], strides = [1, 1]} : vector<1x768xf32> to vector<1x256xf32>
    %175 = vector.extract_strided_slice %172 {offsets = [0, 512], sizes = [1, 256], strides = [1, 1]} : vector<1x768xf32> to vector<1x256xf32>
    %176 = vector.extract_strided_slice %166 {offsets = [0, 768], sizes = [1, 256], strides = [1, 1]} : vector<1x1024xf32> to vector<1x256xf32>
    %177 = math.tanh %176 : vector<1x256xf32>
    %178 = arith.mulf %174, %160 : vector<1x256xf32>
    %179 = arith.mulf %173, %177 : vector<1x256xf32>
    %180 = arith.addf %178, %179 : vector<1x256xf32>
    %181 = math.tanh %180 : vector<1x256xf32>
    %182 = arith.mulf %175, %181 : vector<1x256xf32>
    %183 = vector.extract_strided_slice %182 {offsets = [0, 128], sizes = [1, 128], strides = [1, 1]} : vector<1x256xf32> to vector<1x128xf32>
    %184 = arith.truncf %183 : vector<1x128xf32> to vector<1x128xbf16>
    %c0_35 = arith.constant 0 : index
    %c0_36 = arith.constant 0 : index
    %185 = vector.load %arg3[%c0_35, %c0_36] : memref<128x128xbf16, #tpu.memory_space<vmem>>, vector<128x128xbf16>
    %cst_37 = arith.constant dense<0.000000e+00> : vector<1x128xf32>
    %186 = tpu.matmul %184, %185, %cst_37 {dimension_numbers = #tpu.dot_dimension_numbers<[1], [0], [0], [1], [0, 0, 1, 1], [], []>} : vector<1x128xbf16>, vector<128x128xbf16>, vector<1x128xf32> -> vector<1x128xf32>
    %c0_38 = arith.constant 0 : index
    %c0_39 = arith.constant 0 : index
    %187 = vector.load %arg4[%c0_38, %c0_39] : memref<1x128xf32, #tpu.memory_space<vmem>>, vector<1x128xf32>
    %188 = arith.addf %186, %187 : vector<1x128xf32>
    %cst_40 = arith.constant 0.000000e+00 : f32
    %189 = vector.broadcast %cst_40 : f32 to vector<1x128xf32>
    %190 = arith.maximumf %188, %189 : vector<1x128xf32>
    %191 = arith.truncf %190 : vector<1x128xf32> to vector<1x128xbf16>
    %c0_41 = arith.constant 0 : index
    %c0_42 = arith.constant 0 : index
    %192 = vector.load %arg5[%c0_41, %c0_42] : memref<128x128xbf16, #tpu.memory_space<vmem>>, vector<128x128xbf16>
    %cst_43 = arith.constant dense<0.000000e+00> : vector<1x128xf32>
    %193 = tpu.matmul %191, %192, %cst_43 {dimension_numbers = #tpu.dot_dimension_numbers<[1], [0], [0], [1], [0, 0, 1, 1], [], []>} : vector<1x128xbf16>, vector<128x128xbf16>, vector<1x128xf32> -> vector<1x128xf32>
    %c0_44 = arith.constant 0 : index
    %c0_45 = arith.constant 0 : index
    %194 = vector.load %arg6[%c0_44, %c0_45] : memref<1x128xf32, #tpu.memory_space<vmem>>, vector<1x128xf32>
    %195 = arith.addf %193, %194 : vector<1x128xf32>
    %cst_46 = arith.constant 0.000000e+00 : f32
    %196 = vector.broadcast %cst_46 : f32 to vector<1x128xf32>
    %197 = arith.maximumf %195, %196 : vector<1x128xf32>
    %198 = arith.truncf %197 : vector<1x128xf32> to vector<1x128xbf16>
    %c0_47 = arith.constant 0 : index
    %c0_48 = arith.constant 0 : index
    %199 = vector.load %arg7[%c0_47, %c0_48] : memref<128x128xbf16, #tpu.memory_space<vmem>>, vector<128x128xbf16>
    %cst_49 = arith.constant dense<0.000000e+00> : vector<1x128xf32>
    %200 = tpu.matmul %198, %199, %cst_49 {dimension_numbers = #tpu.dot_dimension_numbers<[1], [0], [0], [1], [0, 0, 1, 1], [], []>} : vector<1x128xbf16>, vector<128x128xbf16>, vector<1x128xf32> -> vector<1x128xf32>
    %c0_50 = arith.constant 0 : index
    %c0_51 = arith.constant 0 : index
    %201 = vector.load %arg8[%c0_50, %c0_51] : memref<1x128xf32, #tpu.memory_space<vmem>>, vector<1x128xf32>
    %202 = arith.addf %200, %201 : vector<1x128xf32>
    %c0_52 = arith.constant 0 : index
    %c0_53 = arith.constant 0 : index
    %203 = vector.load %arg9[%c0_52, %c0_53] : memref<1x128xf32, #tpu.memory_space<vmem>>, vector<1x128xf32>
    tpu.vector_store %arg9[%c0_52, %c0_53], %202 {strides = array<i32>} : memref<1x128xf32, #tpu.memory_space<vmem>>, vector<1x128xf32>,
    return
  }
}

</mosaic_0001>

<llo_original>
// kernel: sepsis_forward.1
$region0: #{sepsis_forward.1}
  #allocation0 [shape = 'u32[]', space=smem, size = 0x4, offset = 0x4, fixed_abs, tag = 'smem constant byte address 0x4 - core index']
  #allocation1 [shape = 'u32[72,128]{1,0:T(1,128)}', space=vmem, size = 0x9000, scoped, tag = 'internal scratch']
  #allocation2 [shape = 'f32[9,1024]{1,0:T(8,128)}', space=vmem, size = 0x10000, scoped, tag = 'scratch operand']
  %s0 = inlined_call_operand.vmem [shape: bf16[9,128], index: 0, kind: input, shape index: {}]
  %s1 = inlined_call_operand.hbm [shape: bf16[128,1024], index: 1, kind: input, shape index: {}]
  %s2 = inlined_call_operand.hbm [shape: bf16[256,1024], index: 2, kind: input, shape index: {}]
  %s3 = inlined_call_operand.hbm [shape: bf16[128,128], index: 3, kind: input, shape index: {}]
  %s4 = inlined_call_operand.vmem [shape: f32[1,128], index: 4, kind: input, shape index: {}]
  %s5 = inlined_call_operand.hbm [shape: bf16[128,128], index: 5, kind: input, shape index: {}]
  %s6 = inlined_call_operand.vmem [shape: f32[1,128], index: 6, kind: input, shape index: {}]
  %s7 = inlined_call_operand.hbm [shape: bf16[128,128], index: 7, kind: input, shape index: {}]
  %s8 = inlined_call_operand.vmem [shape: f32[1,128], index: 8, kind: input, shape index: {}]
  %s9 = inlined_call_operand.hbm [shape: f32[1,128], index: 9, kind: output, shape index: {}]
  %s10 = sld [smem:[#allocation0]]
  $region66: #{sepsis_forward.1} parent=0
    _
  %s12 = ssub.s32 1, %s10
  %s13 = scalar_select 0, %s12, %s10
  $region1: #{sepsis_forward.1} parent=0
    #allocation3 [shape = 'u8[262144]{0}', space=vmem, size = 0x40000, scoped, tag = 'input window, operand 1, single buffered']
    #allocation4 [shape = 's32[1]{0}', space=sflag, size = 0x4, scoped, tag = 'scoped memory for sepsis_forward.1']
    #allocation5 [shape = 's32[1]{0}', space=sflag, size = 0x4, scoped, tag = 'scoped memory for sepsis_forward.1']
    #allocation6 [shape = 'u8[524288]{0}', space=vmem, size = 0x80000, scoped, tag = 'input window, operand 2, single buffered']
    #allocation7 [shape = 's32[1]{0}', space=sflag, size = 0x4, scoped, tag = 'scoped memory for sepsis_forward.1']
    #allocation8 [shape = 'u8[32768]{0}', space=vmem, size = 0x8000, scoped, tag = 'input window, operand 3, single buffered']
    #allocation9 [shape = 'u8[32768]{0}', space=vmem, size = 0x8000, scoped, tag = 'input window, operand 5, single buffered']
    #allocation10 [shape = 's32[1]{0}', space=sflag, size = 0x4, scoped, tag = 'scoped memory for sepsis_forward.1']
    #allocation11 [shape = 'u8[32768]{0}', space=vmem, size = 0x8000, scoped, tag = 'input window, operand 7, single buffered']
    #allocation12 [shape = 'u8[512]{0}', space=vmem, size = 0x400, scoped, tag = 'output window, operand 0, single buffered']
    %14 = vsyncpa [#allocation4], 0
    %15 = vsyncpa [#allocation7], 0
    %16 = vsyncpa [#allocation10], 0
    %17 = vsyncpa [#allocation5], 0
    // Predicated region
    $region2: #{sepsis_forward.1} parent=1 // pred_check
      _
    $region3: #{sepsis_forward.1} parent=1 // pred_check_branch
      %19 = sbr.rel (0) target = $region5
    $region4: #{sepsis_forward.1} parent=1 // pred_region
      _
    $region5: #{sepsis_forward.1} parent=1 // pred_fallthru
      _
    // Predicated region
    $region6: #{sepsis_forward.1} parent=1 // pred_check
      _
    $region7: #{sepsis_forward.1} parent=1 // pred_check_branch
      %21 = sbr.rel (0) target = $region9
    $region8: #{sepsis_forward.1} parent=1 // pred_region
      %23 = vsyncadd [#allocation4], 0
      %s24 = sshll.u32 %s1, 4
      %s25 = int_to_ptr.hbm [resolvable:$true] %s24
      %s26 = sshll.u32 [#allocation3], 4
      %s27 = int_to_ptr.vmem [resolvable:$true] %s26
      %32 = dma.hbm_to_vmem [thread:$0]  %s25, 8192, %s27, [#allocation4], 512, 512, 32
    $region9: #{sepsis_forward.1} parent=1 // pred_fallthru
      _
    // Predicated region
    $region10: #{sepsis_forward.1} parent=1 // pred_check
      _
    $region11: #{sepsis_forward.1} parent=1 // pred_check_branch
      %34 = sbr.rel (0) target = $region13
    $region12: #{sepsis_forward.1} parent=1 // pred_region
      %36 = vsyncadd [#allocation7], 0
      %s37 = sshll.u32 %s2, 4
      %s38 = int_to_ptr.hbm [resolvable:$true] %s37
      %s39 = sshll.u32 [#allocation6], 4
      %s40 = int_to_ptr.vmem [resolvable:$true] %s39
      %45 = dma.hbm_to_vmem [thread:$0]  %s38, 16384, %s40, [#allocation7], 512, 512, 32
    $region13: #{sepsis_forward.1} parent=1 // pred_fallthru
      _
    // Predicated region
    $region14: #{sepsis_forward.1} parent=1 // pred_check
      _
    $region15: #{sepsis_forward.1} parent=1 // pred_check_branch
      %47 = sbr.rel (0) target = $region17
    $region16: #{sepsis_forward.1} parent=1 // pred_region
      %49 = vsyncadd [#allocation7], 0
      %s50 = sshll.u32 %s3, 4
      %s51 = int_to_ptr.hbm [resolvable:$true] %s50
      %s52 = sshll.u32 [#allocation8], 4
      %s53 = int_to_ptr.vmem [resolvable:$true] %s52
      %58 = dma.hbm_to_vmem [thread:$0]  %s51, 1024, %s53, [#allocation7], 64, 64, 4
    $region17: #{sepsis_forward.1} parent=1 // pred_fallthru
      _
    // Predicated region
    $region18: #{sepsis_forward.1} parent=1 // pred_check
      _
    $region19: #{sepsis_forward.1} parent=1 // pred_check_branch
      %60 = sbr.rel (0) target = $region21
    $region20: #{sepsis_forward.1} parent=1 // pred_region
      _
    $region21: #{sepsis_forward.1} parent=1 // pred_fallthru
      _
    // Predicated region
    $region22: #{sepsis_forward.1} parent=1 // pred_check
      _
    $region23: #{sepsis_forward.1} parent=1 // pred_check_branch
      %62 = sbr.rel (0) target = $region25
    $region24: #{sepsis_forward.1} parent=1 // pred_region
      %64 = vsyncadd [#allocation10], 0
      %s65 = sshll.u32 %s5, 4
      %s66 = int_to_ptr.hbm [resolvable:$true] %s65
      %s67 = sshll.u32 [#allocation9], 4
      %s68 = int_to_ptr.vmem [resolvable:$true] %s67
      %73 = dma.hbm_to_vmem [thread:$0]  %s66, 1024, %s68, [#allocation10], 64, 64, 4
    $region25: #{sepsis_forward.1} parent=1 // pred_fallthru
      _
    // Predicated region
    $region26: #{sepsis_forward.1} parent=1 // pred_check
      _
    $region27: #{sepsis_forward.1} parent=1 // pred_check_branch
      %75 = sbr.rel (0) target = $region29
    $region28: #{sepsis_forward.1} parent=1 // pred_region
      _
    $region29: #{sepsis_forward.1} parent=1 // pred_fallthru
      _
    // Predicated region
    $region30: #{sepsis_forward.1} parent=1 // pred_check
      _
    $region31: #{sepsis_forward.1} parent=1 // pred_check_branch
      %77 = sbr.rel (0) target = $region33
    $region32: #{sepsis_forward.1} parent=1 // pred_region
      %79 = vsyncadd [#allocation10], 0
      %s80 = sshll.u32 %s7, 4
      %s81 = int_to_ptr.hbm [resolvable:$true] %s80
      %s82 = sshll.u32 [#allocation11], 4
      %s83 = int_to_ptr.vmem [resolvable:$true] %s82
      %88 = dma.hbm_to_vmem [thread:$0]  %s81, 1024, %s83, [#allocation10], 64, 64, 4
    $region33: #{sepsis_forward.1} parent=1 // pred_fallthru
      _
    // Predicated region
    $region34: #{sepsis_forward.1} parent=1 // pred_check
      _
    $region35: #{sepsis_forward.1} parent=1 // pred_check_branch
      %90 = sbr.rel (0) target = $region37
    $region36: #{sepsis_forward.1} parent=1 // pred_region
      _
    $region37: #{sepsis_forward.1} parent=1 // pred_fallthru
      _
    // Predicated region
    $region38: #{sepsis_forward.1} parent=1 // pred_check
      _
    $region39: #{sepsis_forward.1} parent=1 // pred_check_branch
      %92 = sbr.rel (0) target = $region41
    $region40: #{sepsis_forward.1} parent=1 // pred_region
      %94 = dma.done [#allocation4], 8192
    $region41: #{sepsis_forward.1} parent=1 // pred_fallthru
      _
    // Predicated region
    $region42: #{sepsis_forward.1} parent=1 // pred_check
      _
    $region43: #{sepsis_forward.1} parent=1 // pred_check_branch
      %96 = sbr.rel (0) target = $region45
    $region44: #{sepsis_forward.1} parent=1 // pred_region
      %98 = dma.done [#allocation7], 16384
    $region45: #{sepsis_forward.1} parent=1 // pred_fallthru
      _
    // Predicated region
    $region46: #{sepsis_forward.1} parent=1 // pred_check
      _
    $region47: #{sepsis_forward.1} parent=1 // pred_check_branch
      %100 = sbr.rel (0) target = $region49
    $region48: #{sepsis_forward.1} parent=1 // pred_region
      %102 = dma.done [#allocation7], 1024
    $region49: #{sepsis_forward.1} parent=1 // pred_fallthru
      _
    // Predicated region
    $region50: #{sepsis_forward.1} parent=1 // pred_check
      _
    $region51: #{sepsis_forward.1} parent=1 // pred_check_branch
      %104 = sbr.rel (0) target = $region53
    $region52: #{sepsis_forward.1} parent=1 // pred_region
      %106 = dma.done [#allocation10], 1024
    $region53: #{sepsis_forward.1} parent=1 // pred_fallthru
      _
    // Predicated region
    $region54: #{sepsis_forward.1} parent=1 // pred_check
      _
    $region55: #{sepsis_forward.1} parent=1 // pred_check_branch
      %108 = sbr.rel (0) target = $region57
    $region56: #{sepsis_forward.1} parent=1 // pred_region
      %110 = dma.done [#allocation10], 1024
    $region57: #{sepsis_forward.1} parent=1 // pred_fallthru
      _
    %v111 = vld [vmem:[%s0] sm:$0xf]
    %v112 = vld [vmem:[%s0 + $0x4] sm:$0x1]
    %v113 = vld [vmem:[#allocation3] sm:$0xff]
    %v114 = vld [vmem:[#allocation3 + $0x8] sm:$0xff]
    %v115 = vld [vmem:[#allocation3 + $0x10] sm:$0xff]
    %v116 = vld [vmem:[#allocation3 + $0x18] sm:$0xff]
    %v117 = vld [vmem:[#allocation3 + $0x20] sm:$0xff]
    %v118 = vld [vmem:[#allocation3 + $0x28] sm:$0xff]
    %v119 = vld [vmem:[#allocation3 + $0x30] sm:$0xff]
    %v120 = vld [vmem:[#allocation3 + $0x38] sm:$0xff]
    %v121 = vld [vmem:[#allocation3 + $0x40] sm:$0xff]
    %v122 = vld [vmem:[#allocation3 + $0x48] sm:$0xff]
    %v123 = vld [vmem:[#allocation3 + $0x50] sm:$0xff]
    %v124 = vld [vmem:[#allocation3 + $0x58] sm:$0xff]
    %v125 = vld [vmem:[#allocation3 + $0x60] sm:$0xff]
    %v126 = vld [vmem:[#allocation3 + $0x68] sm:$0xff]
    %v127 = vld [vmem:[#allocation3 + $0x70] sm:$0xff]
    %v128 = vld [vmem:[#allocation3 + $0x78] sm:$0xff]
    %v129 = vld [vmem:[#allocation3 + $0x80] sm:$0xff]
    %v130 = vld [vmem:[#allocation3 + $0x88] sm:$0xff]
    %v131 = vld [vmem:[#allocation3 + $0x90] sm:$0xff]
    %v132 = vld [vmem:[#allocation3 + $0x98] sm:$0xff]
    %v133 = vld [vmem:[#allocation3 + $0xa0] sm:$0xff]
    %v134 = vld [vmem:[#allocation3 + $0xa8] sm:$0xff]
    %v135 = vld [vmem:[#allocation3 + $0xb0] sm:$0xff]
    %v136 = vld [vmem:[#allocation3 + $0xb8] sm:$0xff]
    %v137 = vld [vmem:[#allocation3 + $0xc0] sm:$0xff]
    %v138 = vld [vmem:[#allocation3 + $0xc8] sm:$0xff]
    %v139 = vld [vmem:[#allocation3 + $0xd0] sm:$0xff]
    %v140 = vld [vmem:[#allocation3 + $0xd8] sm:$0xff]
    %v141 = vld [vmem:[#allocation3 + $0xe0] sm:$0xff]
    %v142 = vld [vmem:[#allocation3 + $0xe8] sm:$0xff]
    %v143 = vld [vmem:[#allocation3 + $0xf0] sm:$0xff]
    %v144 = vld [vmem:[#allocation3 + $0xf8] sm:$0xff]
    %v145 = vld [vmem:[#allocation3 + $0x100] sm:$0xff]
    %v146 = vld [vmem:[#allocation3 + $0x108] sm:$0xff]
    %v147 = vld [vmem:[#allocation3 + $0x110] sm:$0xff]
    %v148 = vld [vmem:[#allocation3 + $0x118] sm:$0xff]
    %v149 = vld [vmem:[#allocation3 + $0x120] sm:$0xff]
    %v150 = vld [vmem:[#allocation3 + $0x128] sm:$0xff]
    %v151 = vld [vmem:[#allocation3 + $0x130] sm:$0xff]
    %v152 = vld [vmem:[#allocation3 + $0x138] sm:$0xff]
    %v153 = vld [vmem:[#allocation3 + $0x140] sm:$0xff]
    %v154 = vld [vmem:[#allocation3 + $0x148] sm:$0xff]
    %v155 = vld [vmem:[#allocation3 + $0x150] sm:$0xff]
    %v156 = vld [vmem:[#allocation3 + $0x158] sm:$0xff]
    %v157 = vld [vmem:[#allocation3 + $0x160] sm:$0xff]
    %v158 = vld [vmem:[#allocation3 + $0x168] sm:$0xff]
    %v159 = vld [vmem:[#allocation3 + $0x170] sm:$0xff]
    %v160 = vld [vmem:[#allocation3 + $0x178] sm:$0xff]
    %v161 = vld [vmem:[#allocation3 + $0x180] sm:$0xff]
    %v162 = vld [vmem:[#allocation3 + $0x188] sm:$0xff]
    %v163 = vld [vmem:[#allocation3 + $0x190] sm:$0xff]
    %v164 = vld [vmem:[#allocation3 + $0x198] sm:$0xff]
    %v165 = vld [vmem:[#allocation3 + $0x1a0] sm:$0xff]
    %v166 = vld [vmem:[#allocation3 + $0x1a8] sm:$0xff]
    %v167 = vld [vmem:[#allocation3 + $0x1b0] sm:$0xff]
    %v168 = vld [vmem:[#allocation3 + $0x1b8] sm:$0xff]
    %v169 = vld [vmem:[#allocation3 + $0x1c0] sm:$0xff]
    %v170 = vld [vmem:[#allocation3 + $0x1c8] sm:$0xff]
    %v171 = vld [vmem:[#allocation3 + $0x1d0] sm:$0xff]
    %v172 = vld [vmem:[#allocation3 + $0x1d8] sm:$0xff]
    %v173 = vld [vmem:[#allocation3 + $0x1e0] sm:$0xff]
    %v174 = vld [vmem:[#allocation3 + $0x1e8] sm:$0xff]
    %v175 = vld [vmem:[#allocation3 + $0x1f0] sm:$0xff]
    %v176 = vld [vmem:[#allocation3 + $0x1f8] sm:$0xff]
    %v179 = vunpack.c.l.b16 %v111
    %v180 = vunpack.c.l.b16 %v112
    %v181 = vpack.c.b16 %v180, %v179
    %v247 = vunpack.c.l.b16 %v113
    %v248 = vunpack.c.h.b16 %v113
    %v249 = vunpack.c.l.b16 %v114
    %v250 = vunpack.c.h.b16 %v114
    %v251 = vunpack.c.l.b16 %v115
    %v252 = vunpack.c.h.b16 %v115
    %v253 = vunpack.c.l.b16 %v116
    %v254 = vunpack.c.h.b16 %v116
    %v255 = vunpack.c.l.b16 %v117
    %v256 = vunpack.c.h.b16 %v117
    %v257 = vunpack.c.l.b16 %v118
    %v258 = vunpack.c.h.b16 %v118
    %v259 = vunpack.c.l.b16 %v119
    %v260 = vunpack.c.h.b16 %v119
    %v261 = vunpack.c.l.b16 %v120
    %v262 = vunpack.c.h.b16 %v120
    %v263 = vunpack.c.l.b16 %v121
    %v264 = vunpack.c.h.b16 %v121
    %v265 = vunpack.c.l.b16 %v122
    %v266 = vunpack.c.h.b16 %v122
    %v267 = vunpack.c.l.b16 %v123
    %v268 = vunpack.c.h.b16 %v123
    %v269 = vunpack.c.l.b16 %v124
    %v270 = vunpack.c.h.b16 %v124
    %v271 = vunpack.c.l.b16 %v125
    %v272 = vunpack.c.h.b16 %v125
    %v273 = vunpack.c.l.b16 %v126
    %v274 = vunpack.c.h.b16 %v126
    %v275 = vunpack.c.l.b16 %v127
    %v276 = vunpack.c.h.b16 %v127
    %v277 = vunpack.c.l.b16 %v128
    %v278 = vunpack.c.h.b16 %v128
    %v279 = vunpack.c.l.b16 %v129
    %v280 = vunpack.c.h.b16 %v129
    %v281 = vunpack.c.l.b16 %v130
    %v282 = vunpack.c.h.b16 %v130
    %v283 = vunpack.c.l.b16 %v131
    %v284 = vunpack.c.h.b16 %v131
    %v285 = vunpack.c.l.b16 %v132
    %v286 = vunpack.c.h.b16 %v132
    %v287 = vunpack.c.l.b16 %v133
    %v288 = vunpack.c.h.b16 %v133
    %v289 = vunpack.c.l.b16 %v134
    %v290 = vunpack.c.h.b16 %v134
    %v291 = vunpack.c.l.b16 %v135
    %v292 = vunpack.c.h.b16 %v135
    %v293 = vunpack.c.l.b16 %v136
    %v294 = vunpack.c.h.b16 %v136
    %v295 = vunpack.c.l.b16 %v137
    %v296 = vunpack.c.h.b16 %v137
    %v297 = vunpack.c.l.b16 %v138
    %v298 = vunpack.c.h.b16 %v138
    %v299 = vunpack.c.l.b16 %v139
    %v300 = vunpack.c.h.b16 %v139
    %v301 = vunpack.c.l.b16 %v140
    %v302 = vunpack.c.h.b16 %v140
    %v303 = vunpack.c.l.b16 %v141
    %v304 = vunpack.c.h.b16 %v141
    %v305 = vunpack.c.l.b16 %v142
    %v306 = vunpack.c.h.b16 %v142
    %v307 = vunpack.c.l.b16 %v143
    %v308 = vunpack.c.h.b16 %v143
    %v309 = vunpack.c.l.b16 %v144
    %v310 = vunpack.c.h.b16 %v144
    %v311 = vunpack.c.l.b16 %v145
    %v312 = vunpack.c.h.b16 %v145
    %v313 = vunpack.c.l.b16 %v146
    %v314 = vunpack.c.h.b16 %v146
    %v315 = vunpack.c.l.b16 %v147
    %v316 = vunpack.c.h.b16 %v147
    %v317 = vunpack.c.l.b16 %v148
    %v318 = vunpack.c.h.b16 %v148
    %v319 = vunpack.c.l.b16 %v149
    %v320 = vunpack.c.h.b16 %v149
    %v321 = vunpack.c.l.b16 %v150
    %v322 = vunpack.c.h.b16 %v150
    %v323 = vunpack.c.l.b16 %v151
    %v324 = vunpack.c.h.b16 %v151
    %v325 = vunpack.c.l.b16 %v152
    %v326 = vunpack.c.h.b16 %v152
    %v327 = vunpack.c.l.b16 %v153
    %v328 = vunpack.c.h.b16 %v153
    %v329 = vunpack.c.l.b16 %v154
    %v330 = vunpack.c.h.b16 %v154
    %v331 = vunpack.c.l.b16 %v155
    %v332 = vunpack.c.h.b16 %v155
    %v333 = vunpack.c.l.b16 %v156
    %v334 = vunpack.c.h.b16 %v156
    %v335 = vunpack.c.l.b16 %v157
    %v336 = vunpack.c.h.b16 %v157
    %v337 = vunpack.c.l.b16 %v158
    %v338 = vunpack.c.h.b16 %v158
    %v339 = vunpack.c.l.b16 %v159
    %v340 = vunpack.c.h.b16 %v159
    %v341 = vunpack.c.l.b16 %v160
    %v342 = vunpack.c.h.b16 %v160
    %v343 = vunpack.c.l.b16 %v161
    %v344 = vunpack.c.h.b16 %v161
    %v345 = vunpack.c.l.b16 %v162
    %v346 = vunpack.c.h.b16 %v162
    %v347 = vunpack.c.l.b16 %v163
    %v348 = vunpack.c.h.b16 %v163
    %v349 = vunpack.c.l.b16 %v164
    %v350 = vunpack.c.h.b16 %v164
    %v351 = vunpack.c.l.b16 %v165
    %v352 = vunpack.c.h.b16 %v165
    %v353 = vunpack.c.l.b16 %v166
    %v354 = vunpack.c.h.b16 %v166
    %v355 = vunpack.c.l.b16 %v167
    %v356 = vunpack.c.h.b16 %v167
    %v357 = vunpack.c.l.b16 %v168
    %v358 = vunpack.c.h.b16 %v168
    %v359 = vunpack.c.l.b16 %v169
    %v360 = vunpack.c.h.b16 %v169
    %v361 = vunpack.c.l.b16 %v170
    %v362 = vunpack.c.h.b16 %v170
    %v363 = vunpack.c.l.b16 %v171
    %v364 = vunpack.c.h.b16 %v171
    %v365 = vunpack.c.l.b16 %v172
    %v366 = vunpack.c.h.b16 %v172
    %v367 = vunpack.c.l.b16 %v173
    %v368 = vunpack.c.h.b16 %v173
    %v369 = vunpack.c.l.b16 %v174
    %v370 = vunpack.c.h.b16 %v174
    %v371 = vunpack.c.l.b16 %v175
    %v372 = vunpack.c.h.b16 %v175
    %v373 = vunpack.c.l.b16 %v176
    %v374 = vunpack.c.h.b16 %v176
    %v375 = vpack.c.b16 %v255, %v247
    %v376 = vpack.c.b16 %v256, %v248
    %v377 = vpack.c.b16 %v257, %v249
    %v378 = vpack.c.b16 %v258, %v250
    %v379 = vpack.c.b16 %v259, %v251
    %v380 = vpack.c.b16 %v260, %v252
    %v381 = vpack.c.b16 %v261, %v253
    %v382 = vpack.c.b16 %v262, %v254
    %v383 = vpack.c.b16 %v271, %v263
    %v384 = vpack.c.b16 %v272, %v264
    %v385 = vpack.c.b16 %v273, %v265
    %v386 = vpack.c.b16 %v274, %v266
    %v387 = vpack.c.b16 %v275, %v267
    %v388 = vpack.c.b16 %v276, %v268
    %v389 = vpack.c.b16 %v277, %v269
    %v390 = vpack.c.b16 %v278, %v270
    %v391 = vpack.c.b16 %v287, %v279
    %v392 = vpack.c.b16 %v288, %v280
    %v393 = vpack.c.b16 %v289, %v281
    %v394 = vpack.c.b16 %v290, %v282
    %v395 = vpack.c.b16 %v291, %v283
    %v396 = vpack.c.b16 %v292, %v284
    %v397 = vpack.c.b16 %v293, %v285
    %v398 = vpack.c.b16 %v294, %v286
    %v399 = vpack.c.b16 %v303, %v295
    %v400 = vpack.c.b16 %v304, %v296
    %v401 = vpack.c.b16 %v305, %v297
    %v402 = vpack.c.b16 %v306, %v298
    %v403 = vpack.c.b16 %v307, %v299
    %v404 = vpack.c.b16 %v308, %v300
    %v405 = vpack.c.b16 %v309, %v301
    %v406 = vpack.c.b16 %v310, %v302
    %v407 = vpack.c.b16 %v319, %v311
    %v408 = vpack.c.b16 %v320, %v312
    %v409 = vpack.c.b16 %v321, %v313
    %v410 = vpack.c.b16 %v322, %v314
    %v411 = vpack.c.b16 %v323, %v315
    %v412 = vpack.c.b16 %v324, %v316
    %v413 = vpack.c.b16 %v325, %v317
    %v414 = vpack.c.b16 %v326, %v318
    %v415 = vpack.c.b16 %v335, %v327
    %v416 = vpack.c.b16 %v336, %v328
    %v417 = vpack.c.b16 %v337, %v329
    %v418 = vpack.c.b16 %v338, %v330
    %v419 = vpack.c.b16 %v339, %v331
    %v420 = vpack.c.b16 %v340, %v332
    %v421 = vpack.c.b16 %v341, %v333
    %v422 = vpack.c.b16 %v342, %v334
    %v423 = vpack.c.b16 %v351, %v343
    %v424 = vpack.c.b16 %v352, %v344
    %v425 = vpack.c.b16 %v353, %v345
    %v426 = vpack.c.b16 %v354, %v346
    %v427 = vpack.c.b16 %v355, %v347
    %v428 = vpack.c.b16 %v356, %v348
    %v429 = vpack.c.b16 %v357, %v349
    %v430 = vpack.c.b16 %v358, %v350
    %v431 = vpack.c.b16 %v367, %v359
    %v432 = vpack.c.b16 %v368, %v360
    %v433 = vpack.c.b16 %v369, %v361
    %v434 = vpack.c.b16 %v370, %v362
    %v435 = vpack.c.b16 %v371, %v363
    %v436 = vpack.c.b16 %v372, %v364
    %v437 = vpack.c.b16 %v373, %v365
    %v438 = vpack.c.b16 %v374, %v366
    %503 = vmatpush.bf16.msra.mxu0 %v431
    %504 = vmatpush.bf16.msra.mxu0 %v423
    %505 = vmatpush.bf16.msra.mxu0 %v415
    %506 = vmatpush.bf16.msra.mxu0 %v407
    %507 = vmatpush.bf16.msra.mxu0 %v399
    %508 = vmatpush.bf16.msra.mxu0 %v391
    %509 = vmatpush.bf16.msra.mxu0 %v383
    %510 = vmatpush.bf16.msra.mxu0 %v375
    %511 = vmatmul.bf16.gmra.mxu0 %v181
    %v512 = vpop.f32.mrf.mxu0
    %v513 = vadd.f32 0.0, %v512
    %v514 = vpop.f32.mrf.mxu0
    %v515 = vadd.f32 0.0, %v514
    %516 = vdwg.mxu0
    %517 = vmatpush.bf16.msra.mxu0 %v432
    %518 = vmatpush.bf16.msra.mxu0 %v424
    %519 = vmatpush.bf16.msra.mxu0 %v416
    %520 = vmatpush.bf16.msra.mxu0 %v408
    %521 = vmatpush.bf16.msra.mxu0 %v400
    %522 = vmatpush.bf16.msra.mxu0 %v392
    %523 = vmatpush.bf16.msra.mxu0 %v384
    %524 = vmatpush.bf16.msra.mxu0 %v376
    %525 = vmatmul.bf16.gmra.mxu0 %v181
    %v526 = vpop.f32.mrf.mxu0
    %v527 = vadd.f32 0.0, %v526
    %v528 = vpop.f32.mrf.mxu0
    %v529 = vadd.f32 0.0, %v528
    %530 = vdwg.mxu0
    %531 = vmatpush.bf16.msra.mxu0 %v433
    %532 = vmatpush.bf16.msra.mxu0 %v425
    %533 = vmatpush.bf16.msra.mxu0 %v417
    %534 = vmatpush.bf16.msra.mxu0 %v409
    %535 = vmatpush.bf16.msra.mxu0 %v401
    %536 = vmatpush.bf16.msra.mxu0 %v393
    %537 = vmatpush.bf16.msra.mxu0 %v385
    %538 = vmatpush.bf16.msra.mxu0 %v377
    %539 = vmatmul.bf16.gmra.mxu0 %v181
    %v540 = vpop.f32.mrf.mxu0
    %v541 = vadd.f32 0.0, %v540
    %v542 = vpop.f32.mrf.mxu0
    %v543 = vadd.f32 0.0, %v542
    %544 = vdwg.mxu0
    %545 = vmatpush.bf16.msra.mxu0 %v434
    %546 = vmatpush.bf16.msra.mxu0 %v426
    %547 = vmatpush.bf16.msra.mxu0 %v418
    %548 = vmatpush.bf16.msra.mxu0 %v410
    %549 = vmatpush.bf16.msra.mxu0 %v402
    %550 = vmatpush.bf16.msra.mxu0 %v394
    %551 = vmatpush.bf16.msra.mxu0 %v386
    %552 = vmatpush.bf16.msra.mxu0 %v378
    %553 = vmatmul.bf16.gmra.mxu0 %v181
    %v554 = vpop.f32.mrf.mxu0
    %v555 = vadd.f32 0.0, %v554
    %v556 = vpop.f32.mrf.mxu0
    %v557 = vadd.f32 0.0, %v556
    %558 = vdwg.mxu0
    %559 = vmatpush.bf16.msra.mxu0 %v435
    %560 = vmatpush.bf16.msra.mxu0 %v427
    %561 = vmatpush.bf16.msra.mxu0 %v419
    %562 = vmatpush.bf16.msra.mxu0 %v411
    %563 = vmatpush.bf16.msra.mxu0 %v403
    %564 = vmatpush.bf16.msra.mxu0 %v395
    %565 = vmatpush.bf16.msra.mxu0 %v387
    %566 = vmatpush.bf16.msra.mxu0 %v379
    %567 = vmatmul.bf16.gmra.mxu0 %v181
    %v568 = vpop.f32.mrf.mxu0
    %v569 = vadd.f32 0.0, %v568
    %v570 = vpop.f32.mrf.mxu0
    %v571 = vadd.f32 0.0, %v570
    %572 = vdwg.mxu0
    %573 = vmatpush.bf16.msra.mxu0 %v436
    %574 = vmatpush.bf16.msra.mxu0 %v428
    %575 = vmatpush.bf16.msra.mxu0 %v420
    %576 = vmatpush.bf16.msra.mxu0 %v412
    %577 = vmatpush.bf16.msra.mxu0 %v404
    %578 = vmatpush.bf16.msra.mxu0 %v396
    %579 = vmatpush.bf16.msra.mxu0 %v388
    %580 = vmatpush.bf16.msra.mxu0 %v380
    %581 = vmatmul.bf16.gmra.mxu0 %v181
    %v582 = vpop.f32.mrf.mxu0
    %v583 = vadd.f32 0.0, %v582
    %v584 = vpop.f32.mrf.mxu0
    %v585 = vadd.f32 0.0, %v584
    %586 = vdwg.mxu0
    %587 = vmatpush.bf16.msra.mxu0 %v437
    %588 = vmatpush.bf16.msra.mxu0 %v429
    %589 = vmatpush.bf16.msra.mxu0 %v421
    %590 = vmatpush.bf16.msra.mxu0 %v413
    %591 = vmatpush.bf16.msra.mxu0 %v405
    %592 = vmatpush.bf16.msra.mxu0 %v397
    %593 = vmatpush.bf16.msra.mxu0 %v389
    %594 = vmatpush.bf16.msra.mxu0 %v381
    %595 = vmatmul.bf16.gmra.mxu0 %v181
    %v596 = vpop.f32.mrf.mxu0
    %v597 = vadd.f32 0.0, %v596
    %v598 = vpop.f32.mrf.mxu0
    %v599 = vadd.f32 0.0, %v598
    %600 = vdwg.mxu0
    %601 = vmatpush.bf16.msra.mxu0 %v438
    %602 = vmatpush.bf16.msra.mxu0 %v430
    %603 = vmatpush.bf16.msra.mxu0 %v422
    %604 = vmatpush.bf16.msra.mxu0 %v414
    %605 = vmatpush.bf16.msra.mxu0 %v406
    %606 = vmatpush.bf16.msra.mxu0 %v398
    %607 = vmatpush.bf16.msra.mxu0 %v390
    %608 = vmatpush.bf16.msra.mxu0 %v382
    %609 = vmatmul.bf16.gmra.mxu0 %v181
    %v610 = vpop.f32.mrf.mxu0
    %v611 = vadd.f32 0.0, %v610
    %v612 = vpop.f32.mrf.mxu0
    %v613 = vadd.f32 0.0, %v612
    %614 = vdwg.mxu0
    %615 = vst [vmem:[#allocation2] sm:$0xff] %v513
    %616 = vst [vmem:[#allocation2 + $0x8] sm:$0xff] %v527
    %617 = vst [vmem:[#allocation2 + $0x10] sm:$0xff] %v541
    %618 = vst [vmem:[#allocation2 + $0x18] sm:$0xff] %v555
    %619 = vst [vmem:[#allocation2 + $0x20] sm:$0xff] %v569
    %620 = vst [vmem:[#allocation2 + $0x28] sm:$0xff] %v583
    %621 = vst [vmem:[#allocation2 + $0x30] sm:$0xff] %v597
    %622 = vst [vmem:[#allocation2 + $0x38] sm:$0xff] %v611
    %623 = vst [vmem:[#allocation2 + $0x40] sm:$0x1] %v515
    %624 = vst [vmem:[#allocation2 + $0x48] sm:$0x1] %v529
    %625 = vst [vmem:[#allocation2 + $0x50] sm:$0x1] %v543
    %626 = vst [vmem:[#allocation2 + $0x58] sm:$0x1] %v557
    %627 = vst [vmem:[#allocation2 + $0x60] sm:$0x1] %v571
    %628 = vst [vmem:[#allocation2 + $0x68] sm:$0x1] %v585
    %629 = vst [vmem:[#allocation2 + $0x70] sm:$0x1] %v599
    %630 = vst [vmem:[#allocation2 + $0x78] sm:$0x1] %v613
    %v631 = vld [vmem:[#allocation6] sm:$0xff]
    %v632 = vld [vmem:[#allocation6 + $0x8] sm:$0xff]
    %v633 = vld [vmem:[#allocation6 + $0x10] sm:$0xff]
    %v634 = vld [vmem:[#allocation6 + $0x18] sm:$0xff]
    %v635 = vld [vmem:[#allocation6 + $0x20] sm:$0xff]
    %v636 = vld [vmem:[#allocation6 + $0x28] sm:$0xff]
    %v637 = vld [vmem:[#allocation6 + $0x30] sm:$0xff]
    %v638 = vld [vmem:[#allocation6 + $0x38] sm:$0xff]
    %v639 = vld [vmem:[#allocation6 + $0x40] sm:$0xff]
    %v640 = vld [vmem:[#allocation6 + $0x48] sm:$0xff]
    %v641 = vld [vmem:[#allocation6 + $0x50] sm:$0xff]
    %v642 = vld [vmem:[#allocation6 + $0x58] sm:$0xff]
    %v643 = vld [vmem:[#allocation6 + $0x60] sm:$0xff]
    %v644 = vld [vmem:[#allocation6 + $0x68] sm:$0xff]
    %v645 = vld [vmem:[#allocation6 + $0x70] sm:$0xff]
    %v646 = vld [vmem:[#allocation6 + $0x78] sm:$0xff]
    %v647 = vld [vmem:[#allocation6 + $0x80] sm:$0xff]
    %v648 = vld [vmem:[#allocation6 + $0x88] sm:$0xff]
    %v649 = vld [vmem:[#allocation6 + $0x90] sm:$0xff]
    %v650 = vld [vmem:[#allocation6 + $0x98] sm:$0xff]
    %v651 = vld [vmem:[#allocation6 + $0xa0] sm:$0xff]
    %v652 = vld [vmem:[#allocation6 + $0xa8] sm:$0xff]
    %v653 = vld [vmem:[#allocation6 + $0xb0] sm:$0xff]
    %v654 = vld [vmem:[#allocation6 + $0xb8] sm:$0xff]
    %v655 = vld [vmem:[#allocation6 + $0xc0] sm:$0xff]
    %v656 = vld [vmem:[#allocation6 + $0xc8] sm:$0xff]
    %v657 = vld [vmem:[#allocation6 + $0xd0] sm:$0xff]
    %v658 = vld [vmem:[#allocation6 + $0xd8] sm:$0xff]
    %v659 = vld [vmem:[#allocation6 + $0xe0] sm:$0xff]
    %v660 = vld [vmem:[#allocation6 + $0xe8] sm:$0xff]
    %v661 = vld [vmem:[#allocation6 + $0xf0] sm:$0xff]
    %v662 = vld [vmem:[#allocation6 + $0xf8] sm:$0xff]
    %v663 = vld [vmem:[#allocation6 + $0x100] sm:$0xff]
    %v664 = vld [vmem:[#allocation6 + $0x108] sm:$0xff]
    %v665 = vld [vmem:[#allocation6 + $0x110] sm:$0xff]
    %v666 = vld [vmem:[#allocation6 + $0x118] sm:$0xff]
    %v667 = vld [vmem:[#allocation6 + $0x120] sm:$0xff]
    %v668 = vld [vmem:[#allocation6 + $0x128] sm:$0xff]
    %v669 = vld [vmem:[#allocation6 + $0x130] sm:$0xff]
    %v670 = vld [vmem:[#allocation6 + $0x138] sm:$0xff]
    %v671 = vld [vmem:[#allocation6 + $0x140] sm:$0xff]
    %v672 = vld [vmem:[#allocation6 + $0x148] sm:$0xff]
    %v673 = vld [vmem:[#allocation6 + $0x150] sm:$0xff]
    %v674 = vld [vmem:[#allocation6 + $0x158] sm:$0xff]
    %v675 = vld [vmem:[#allocation6 + $0x160] sm:$0xff]
    %v676 = vld [vmem:[#allocation6 + $0x168] sm:$0xff]
    %v677 = vld [vmem:[#allocation6 + $0x170] sm:$0xff]
    %v678 = vld [vmem:[#allocation6 + $0x178] sm:$0xff]
    %v679 = vld [vmem:[#allocation6 + $0x180] sm:$0xff]
    %v680 = vld [vmem:[#allocation6 + $0x188] sm:$0xff]
    %v681 = vld [vmem:[#allocation6 + $0x190] sm:$0xff]
    %v682 = vld [vmem:[#allocation6 + $0x198] sm:$0xff]
    %v683 = vld [vmem:[#allocation6 + $0x1a0] sm:$0xff]
    %v684 = vld [vmem:[#allocation6 + $0x1a8] sm:$0xff]
    %v685 = vld [vmem:[#allocation6 + $0x1b0] sm:$0xff]
    %v686 = vld [vmem:[#allocation6 + $0x1b8] sm:$0xff]
    %v687 = vld [vmem:[#allocation6 + $0x1c0] sm:$0xff]
    %v688 = vld [vmem:[#allocation6 + $0x1c8] sm:$0xff]
    %v689 = vld [vmem:[#allocation6 + $0x1d0] sm:$0xff]
    %v690 = vld [vmem:[#allocation6 + $0x1d8] sm:$0xff]
    %v691 = vld [vmem:[#allocation6 + $0x1e0] sm:$0xff]
    %v692 = vld [vmem:[#allocation6 + $0x1e8] sm:$0xff]
    %v693 = vld [vmem:[#allocation6 + $0x1f0] sm:$0xff]
    %v694 = vld [vmem:[#allocation6 + $0x1f8] sm:$0xff]
    %v695 = vld [vmem:[#allocation6 + $0x200] sm:$0xff]
    %v696 = vld [vmem:[#allocation6 + $0x208] sm:$0xff]
    %v697 = vld [vmem:[#allocation6 + $0x210] sm:$0xff]
    %v698 = vld [vmem:[#allocation6 + $0x218] sm:$0xff]
    %v699 = vld [vmem:[#allocation6 + $0x220] sm:$0xff]
    %v700 = vld [vmem:[#allocation6 + $0x228] sm:$0xff]
    %v701 = vld [vmem:[#allocation6 + $0x230] sm:$0xff]
    %v702 = vld [vmem:[#allocation6 + $0x238] sm:$0xff]
    %v703 = vld [vmem:[#allocation6 + $0x240] sm:$0xff]
    %v704 = vld [vmem:[#allocation6 + $0x248] sm:$0xff]
    %v705 = vld [vmem:[#allocation6 + $0x250] sm:$0xff]
    %v706 = vld [vmem:[#allocation6 + $0x258] sm:$0xff]
    %v707 = vld [vmem:[#allocation6 + $0x260] sm:$0xff]
    %v708 = vld [vmem:[#allocation6 + $0x268] sm:$0xff]
    %v709 = vld [vmem:[#allocation6 + $0x270] sm:$0xff]
    %v710 = vld [vmem:[#allocation6 + $0x278] sm:$0xff]
    %v711 = vld [vmem:[#allocation6 + $0x280] sm:$0xff]
    %v712 = vld [vmem:[#allocation6 + $0x288] sm:$0xff]
    %v713 = vld [vmem:[#allocation6 + $0x290] sm:$0xff]
    %v714 = vld [vmem:[#allocation6 + $0x298] sm:$0xff]
    %v715 = vld [vmem:[#allocation6 + $0x2a0] sm:$0xff]
    %v716 = vld [vmem:[#allocation6 + $0x2a8] sm:$0xff]
    %v717 = vld [vmem:[#allocation6 + $0x2b0] sm:$0xff]
    %v718 = vld [vmem:[#allocation6 + $0x2b8] sm:$0xff]
    %v719 = vld [vmem:[#allocation6 + $0x2c0] sm:$0xff]
    %v720 = vld [vmem:[#allocation6 + $0x2c8] sm:$0xff]
    %v721 = vld [vmem:[#allocation6 + $0x2d0] sm:$0xff]
    %v722 = vld [vmem:[#allocation6 + $0x2d8] sm:$0xff]
    %v723 = vld [vmem:[#allocation6 + $0x2e0] sm:$0xff]
    %v724 = vld [vmem:[#allocation6 + $0x2e8] sm:$0xff]
    %v725 = vld [vmem:[#allocation6 + $0x2f0] sm:$0xff]
    %v726 = vld [vmem:[#allocation6 + $0x2f8] sm:$0xff]
    %v727 = vld [vmem:[#allocation6 + $0x300] sm:$0xff]
    %v728 = vld [vmem:[#allocation6 + $0x308] sm:$0xff]
    %v729 = vld [vmem:[#allocation6 + $0x310] sm:$0xff]
    %v730 = vld [vmem:[#allocation6 + $0x318] sm:$0xff]
    %v731 = vld [vmem:[#allocation6 + $0x320] sm:$0xff]
    %v732 = vld [vmem:[#allocation6 + $0x328] sm:$0xff]
    %v733 = vld [vmem:[#allocation6 + $0x330] sm:$0xff]
    %v734 = vld [vmem:[#allocation6 + $0x338] sm:$0xff]
    %v735 = vld [vmem:[#allocation6 + $0x340] sm:$0xff]
    %v736 = vld [vmem:[#allocation6 + $0x348] sm:$0xff]
    %v737 = vld [vmem:[#allocation6 + $0x350] sm:$0xff]
    %v738 = vld [vmem:[#allocation6 + $0x358] sm:$0xff]
    %v739 = vld [vmem:[#allocation6 + $0x360] sm:$0xff]
    %v740 = vld [vmem:[#allocation6 + $0x368] sm:$0xff]
    %v741 = vld [vmem:[#allocation6 + $0x370] sm:$0xff]
    %v742 = vld [vmem:[#allocation6 + $0x378] sm:$0xff]
    %v743 = vld [vmem:[#allocation6 + $0x380] sm:$0xff]
    %v744 = vld [vmem:[#allocation6 + $0x388] sm:$0xff]
    %v745 = vld [vmem:[#allocation6 + $0x390] sm:$0xff]
    %v746 = vld [vmem:[#allocation6 + $0x398] sm:$0xff]
    %v747 = vld [vmem:[#allocation6 + $0x3a0] sm:$0xff]
    %v748 = vld [vmem:[#allocation6 + $0x3a8] sm:$0xff]
    %v749 = vld [vmem:[#allocation6 + $0x3b0] sm:$0xff]
    %v750 = vld [vmem:[#allocation6 + $0x3b8] sm:$0xff]
    %v751 = vld [vmem:[#allocation6 + $0x3c0] sm:$0xff]
    %v752 = vld [vmem:[#allocation6 + $0x3c8] sm:$0xff]
    %v753 = vld [vmem:[#allocation6 + $0x3d0] sm:$0xff]
    %v754 = vld [vmem:[#allocation6 + $0x3d8] sm:$0xff]
    %v755 = vld [vmem:[#allocation6 + $0x3e0] sm:$0xff]
    %v756 = vld [vmem:[#allocation6 + $0x3e8] sm:$0xff]
    %v757 = vld [vmem:[#allocation6 + $0x3f0] sm:$0xff]
    %v758 = vld [vmem:[#allocation6 + $0x3f8] sm:$0xff]
    %v759 = vld [vmem:[#allocation2] ss:$8 sm:$0xf]
    %v760 = vld [vmem:[#allocation2] ss:$8 sm:$0xf0]
    %v761 = vor.u32 %v759, %v760
    %v762 = vxor.u32 %v761, 2147483648
    %v763 = vmul.f32 %v762, 1.442695
    %v764 = vpow.pop %v763
    %v765 = vadd.f32 %v764, 1.0
    %v766 = vrcp.pop %v765
    %v767 = vmul.f32 %v765, %v766
    %v768 = vsub.f32 1.0, %v767
    %v769 = vmul.f32 %v766, %v768
    %v770 = vadd.f32 %v766, %v769
    %vm771 = vweird.f32 %v765
    %vm772 = vweird.f32 %v766
    %vm773 = vmor %vm771, %vm772
    %v774 = vsel %vm773, %v766, %v770
    %v775 = vand.u32 2147483647, %v765
    %vm776 = vcmp.eq.f32.partialorder %v775, 8.507059e+37
    %v777 = vand.u32 %v765, 2147483648
    %v778 = vor.u32 1.1754944e-38, %v777
    %v779 = vsel %vm776, %v778, %v774
    %v780 = vmul.f32 1.0, %v779
    %v782 = vrot.slane %v761, 6
    %v784 = vtanh.pop %v782
    %v786 = vrot.slane %v780, 2
    %v788 = vmul.f32 %v786, 0.0
    %v789 = vmul.f32 %v780, %v784
    %v790 = vadd.f32 %v788, %v789
    %v791 = vtanh.pop %v790
    %v792 = vrot.slane %v780, 4
    %v794 = vmul.f32 %v792, %v791
    %s795 = scalar_lea.vmem [#allocation2], 1
    %v796 = vld [vmem:[%s795] ss:$8 sm:$0xf]
    %v797 = vld [vmem:[%s795] ss:$8 sm:$0xf0]
    %v798 = vor.u32 %v796, %v797
    %v800 = vperm.slane %v794, 0
    %v801 = vperm.slane %v794, 1
    %v804 = vpack.c.bf16 %v800, %v800
    %v805 = vpack.c.bf16 %v801, %v801
    %v934 = vunpack.c.l.b16 %v631
    %v935 = vunpack.c.h.b16 %v631
    %v936 = vunpack.c.l.b16 %v632
    %v937 = vunpack.c.h.b16 %v632
    %v938 = vunpack.c.l.b16 %v633
    %v939 = vunpack.c.h.b16 %v633
    %v940 = vunpack.c.l.b16 %v634
    %v941 = vunpack.c.h.b16 %v634
    %v942 = vunpack.c.l.b16 %v635
    %v943 = vunpack.c.h.b16 %v635
    %v944 = vunpack.c.l.b16 %v636
    %v945 = vunpack.c.h.b16 %v636
    %v946 = vunpack.c.l.b16 %v637
    %v947 = vunpack.c.h.b16 %v637
    %v948 = vunpack.c.l.b16 %v638
    %v949 = vunpack.c.h.b16 %v638
    %v950 = vunpack.c.l.b16 %v639
    %v951 = vunpack.c.h.b16 %v639
    %v952 = vunpack.c.l.b16 %v640
    %v953 = vunpack.c.h.b16 %v640
    %v954 = vunpack.c.l.b16 %v641
    %v955 = vunpack.c.h.b16 %v641
    %v956 = vunpack.c.l.b16 %v642
    %v957 = vunpack.c.h.b16 %v642
    %v958 = vunpack.c.l.b16 %v643
    %v959 = vunpack.c.h.b16 %v643
    %v960 = vunpack.c.l.b16 %v644
    %v961 = vunpack.c.h.b16 %v644
    %v962 = vunpack.c.l.b16 %v645
    %v963 = vunpack.c.h.b16 %v645
    %v964 = vunpack.c.l.b16 %v646
    %v965 = vunpack.c.h.b16 %v646
    %v966 = vunpack.c.l.b16 %v647
    %v967 = vunpack.c.h.b16 %v647
    %v968 = vunpack.c.l.b16 %v648
    %v969 = vunpack.c.h.b16 %v648
    %v970 = vunpack.c.l.b16 %v649
    %v971 = vunpack.c.h.b16 %v649
    %v972 = vunpack.c.l.b16 %v650
    %v973 = vunpack.c.h.b16 %v650
    %v974 = vunpack.c.l.b16 %v651
    %v975 = vunpack.c.h.b16 %v651
    %v976 = vunpack.c.l.b16 %v652
    %v977 = vunpack.c.h.b16 %v652
    %v978 = vunpack.c.l.b16 %v653
    %v979 = vunpack.c.h.b16 %v653
    %v980 = vunpack.c.l.b16 %v654
    %v981 = vunpack.c.h.b16 %v654
    %v982 = vunpack.c.l.b16 %v655
    %v983 = vunpack.c.h.b16 %v655
    %v984 = vunpack.c.l.b16 %v656
    %v985 = vunpack.c.h.b16 %v656
    %v986 = vunpack.c.l.b16 %v657
    %v987 = vunpack.c.h.b16 %v657
    %v988 = vunpack.c.l.b16 %v658
    %v989 = vunpack.c.h.b16 %v658
    %v990 = vunpack.c.l.b16 %v659
    %v991 = vunpack.c.h.b16 %v659
    %v992 = vunpack.c.l.b16 %v660
    %v993 = vunpack.c.h.b16 %v660
    %v994 = vunpack.c.l.b16 %v661
    %v995 = vunpack.c.h.b16 %v661
    %v996 = vunpack.c.l.b16 %v662
    %v997 = vunpack.c.h.b16 %v662
    %v998 = vunpack.c.l.b16 %v663
    %v999 = vunpack.c.h.b16 %v663
    %v1000 = vunpack.c.l.b16 %v664
    %v1001 = vunpack.c.h.b16 %v664
    %v1002 = vunpack.c.l.b16 %v665
    %v1003 = vunpack.c.h.b16 %v665
    %v1004 = vunpack.c.l.b16 %v666
    %v1005 = vunpack.c.h.b16 %v666
    %v1006 = vunpack.c.l.b16 %v667
    %v1007 = vunpack.c.h.b16 %v667
    %v1008 = vunpack.c.l.b16 %v668
    %v1009 = vunpack.c.h.b16 %v668
    %v1010 = vunpack.c.l.b16 %v669
    %v1011 = vunpack.c.h.b16 %v669
    %v1012 = vunpack.c.l.b16 %v670
    %v1013 = vunpack.c.h.b16 %v670
    %v1014 = vunpack.c.l.b16 %v671
    %v1015 = vunpack.c.h.b16 %v671
    %v1016 = vunpack.c.l.b16 %v672
    %v1017 = vunpack.c.h.b16 %v672
    %v1018 = vunpack.c.l.b16 %v673
    %v1019 = vunpack.c.h.b16 %v673
    %v1020 = vunpack.c.l.b16 %v674
    %v1021 = vunpack.c.h.b16 %v674
    %v1022 = vunpack.c.l.b16 %v675
    %v1023 = vunpack.c.h.b16 %v675
    %v1024 = vunpack.c.l.b16 %v676
    %v1025 = vunpack.c.h.b16 %v676
    %v1026 = vunpack.c.l.b16 %v677
    %v1027 = vunpack.c.h.b16 %v677
    %v1028 = vunpack.c.l.b16 %v678
    %v1029 = vunpack.c.h.b16 %v678
    %v1030 = vunpack.c.l.b16 %v679
    %v1031 = vunpack.c.h.b16 %v679
    %v1032 = vunpack.c.l.b16 %v680
    %v1033 = vunpack.c.h.b16 %v680
    %v1034 = vunpack.c.l.b16 %v681
    %v1035 = vunpack.c.h.b16 %v681
    %v1036 = vunpack.c.l.b16 %v682
    %v1037 = vunpack.c.h.b16 %v682
    %v1038 = vunpack.c.l.b16 %v683
    %v1039 = vunpack.c.h.b16 %v683
    %v1040 = vunpack.c.l.b16 %v684
    %v1041 = vunpack.c.h.b16 %v684
    %v1042 = vunpack.c.l.b16 %v685
    %v1043 = vunpack.c.h.b16 %v685
    %v1044 = vunpack.c.l.b16 %v686
    %v1045 = vunpack.c.h.b16 %v686
    %v1046 = vunpack.c.l.b16 %v687
    %v1047 = vunpack.c.h.b16 %v687
    %v1048 = vunpack.c.l.b16 %v688
    %v1049 = vunpack.c.h.b16 %v688
    %v1050 = vunpack.c.l.b16 %v689
    %v1051 = vunpack.c.h.b16 %v689
    %v1052 = vunpack.c.l.b16 %v690
    %v1053 = vunpack.c.h.b16 %v690
    %v1054 = vunpack.c.l.b16 %v691
    %v1055 = vunpack.c.h.b16 %v691
    %v1056 = vunpack.c.l.b16 %v692
    %v1057 = vunpack.c.h.b16 %v692
    %v1058 = vunpack.c.l.b16 %v693
    %v1059 = vunpack.c.h.b16 %v693
    %v1060 = vunpack.c.l.b16 %v694
    %v1061 = vunpack.c.h.b16 %v694
    %v1062 = vunpack.c.l.b16 %v695
    %v1063 = vunpack.c.h.b16 %v695
    %v1064 = vunpack.c.l.b16 %v696
    %v1065 = vunpack.c.h.b16 %v696
    %v1066 = vunpack.c.l.b16 %v697
    %v1067 = vunpack.c.h.b16 %v697
    %v1068 = vunpack.c.l.b16 %v698
    %v1069 = vunpack.c.h.b16 %v698
    %v1070 = vunpack.c.l.b16 %v699
    %v1071 = vunpack.c.h.b16 %v699
    %v1072 = vunpack.c.l.b16 %v700
    %v1073 = vunpack.c.h.b16 %v700
    %v1074 = vunpack.c.l.b16 %v701
    %v1075 = vunpack.c.h.b16 %v701
    %v1076 = vunpack.c.l.b16 %v702
    %v1077 = vunpack.c.h.b16 %v702
    %v1078 = vunpack.c.l.b16 %v703
    %v1079 = vunpack.c.h.b16 %v703
    %v1080 = vunpack.c.l.b16 %v704
    %v1081 = vunpack.c.h.b16 %v704
    %v1082 = vunpack.c.l.b16 %v705
    %v1083 = vunpack.c.h.b16 %v705
    %v1084 = vunpack.c.l.b16 %v706
    %v1085 = vunpack.c.h.b16 %v706
    %v1086 = vunpack.c.l.b16 %v707
    %v1087 = vunpack.c.h.b16 %v707
    %v1088 = vunpack.c.l.b16 %v708
    %v1089 = vunpack.c.h.b16 %v708
    %v1090 = vunpack.c.l.b16 %v709
    %v1091 = vunpack.c.h.b16 %v709
    %v1092 = vunpack.c.l.b16 %v710
    %v1093 = vunpack.c.h.b16 %v710
    %v1094 = vunpack.c.l.b16 %v711
    %v1095 = vunpack.c.h.b16 %v711
    %v1096 = vunpack.c.l.b16 %v712
    %v1097 = vunpack.c.h.b16 %v712
    %v1098 = vunpack.c.l.b16 %v713
    %v1099 = vunpack.c.h.b16 %v713
    %v1100 = vunpack.c.l.b16 %v714
    %v1101 = vunpack.c.h.b16 %v714
    %v1102 = vunpack.c.l.b16 %v715
    %v1103 = vunpack.c.h.b16 %v715
    %v1104 = vunpack.c.l.b16 %v716
    %v1105 = vunpack.c.h.b16 %v716
    %v1106 = vunpack.c.l.b16 %v717
    %v1107 = vunpack.c.h.b16 %v717
    %v1108 = vunpack.c.l.b16 %v718
    %v1109 = vunpack.c.h.b16 %v718
    %v1110 = vunpack.c.l.b16 %v719
    %v1111 = vunpack.c.h.b16 %v719
    %v1112 = vunpack.c.l.b16 %v720
    %v1113 = vunpack.c.h.b16 %v720
    %v1114 = vunpack.c.l.b16 %v721
    %v1115 = vunpack.c.h.b16 %v721
    %v1116 = vunpack.c.l.b16 %v722
    %v1117 = vunpack.c.h.b16 %v722
    %v1118 = vunpack.c.l.b16 %v723
    %v1119 = vunpack.c.h.b16 %v723
    %v1120 = vunpack.c.l.b16 %v724
    %v1121 = vunpack.c.h.b16 %v724
    %v1122 = vunpack.c.l.b16 %v725
    %v1123 = vunpack.c.h.b16 %v725
    %v1124 = vunpack.c.l.b16 %v726
    %v1125 = vunpack.c.h.b16 %v726
    %v1126 = vunpack.c.l.b16 %v727
    %v1127 = vunpack.c.h.b16 %v727
    %v1128 = vunpack.c.l.b16 %v728
    %v1129 = vunpack.c.h.b16 %v728
    %v1130 = vunpack.c.l.b16 %v729
    %v1131 = vunpack.c.h.b16 %v729
    %v1132 = vunpack.c.l.b16 %v730
    %v1133 = vunpack.c.h.b16 %v730
    %v1134 = vunpack.c.l.b16 %v731
    %v1135 = vunpack.c.h.b16 %v731
    %v1136 = vunpack.c.l.b16 %v732
    %v1137 = vunpack.c.h.b16 %v732
    %v1138 = vunpack.c.l.b16 %v733
    %v1139 = vunpack.c.h.b16 %v733
    %v1140 = vunpack.c.l.b16 %v734
    %v1141 = vunpack.c.h.b16 %v734
    %v1142 = vunpack.c.l.b16 %v735
    %v1143 = vunpack.c.h.b16 %v735
    %v1144 = vunpack.c.l.b16 %v736
    %v1145 = vunpack.c.h.b16 %v736
    %v1146 = vunpack.c.l.b16 %v737
    %v1147 = vunpack.c.h.b16 %v737
    %v1148 = vunpack.c.l.b16 %v738
    %v1149 = vunpack.c.h.b16 %v738
    %v1150 = vunpack.c.l.b16 %v739
    %v1151 = vunpack.c.h.b16 %v739
    %v1152 = vunpack.c.l.b16 %v740
    %v1153 = vunpack.c.h.b16 %v740
    %v1154 = vunpack.c.l.b16 %v741
    %v1155 = vunpack.c.h.b16 %v741
    %v1156 = vunpack.c.l.b16 %v742
    %v1157 = vunpack.c.h.b16 %v742
    %v1158 = vunpack.c.l.b16 %v743
    %v1159 = vunpack.c.h.b16 %v743
    %v1160 = vunpack.c.l.b16 %v744
    %v1161 = vunpack.c.h.b16 %v744
    %v1162 = vunpack.c.l.b16 %v745
    %v1163 = vunpack.c.h.b16 %v745
    %v1164 = vunpack.c.l.b16 %v746
    %v1165 = vunpack.c.h.b16 %v746
    %v1166 = vunpack.c.l.b16 %v747
    %v1167 = vunpack.c.h.b16 %v747
    %v1168 = vunpack.c.l.b16 %v748
    %v1169 = vunpack.c.h.b16 %v748
    %v1170 = vunpack.c.l.b16 %v749
    %v1171 = vunpack.c.h.b16 %v749
    %v1172 = vunpack.c.l.b16 %v750
    %v1173 = vunpack.c.h.b16 %v750
    %v1174 = vunpack.c.l.b16 %v751
    %v1175 = vunpack.c.h.b16 %v751
    %v1176 = vunpack.c.l.b16 %v752
    %v1177 = vunpack.c.h.b16 %v752
    %v1178 = vunpack.c.l.b16 %v753
    %v1179 = vunpack.c.h.b16 %v753
    %v1180 = vunpack.c.l.b16 %v754
    %v1181 = vunpack.c.h.b16 %v754
    %v1182 = vunpack.c.l.b16 %v755
    %v1183 = vunpack.c.h.b16 %v755
    %v1184 = vunpack.c.l.b16 %v756
    %v1185 = vunpack.c.h.b16 %v756
    %v1186 = vunpack.c.l.b16 %v757
    %v1187 = vunpack.c.h.b16 %v757
    %v1188 = vunpack.c.l.b16 %v758
    %v1189 = vunpack.c.h.b16 %v758
    %v1190 = vpack.c.b16 %v942, %v934
    %v1191 = vpack.c.b16 %v943, %v935
    %v1192 = vpack.c.b16 %v944, %v936
    %v1193 = vpack.c.b16 %v945, %v937
    %v1194 = vpack.c.b16 %v946, %v938
    %v1195 = vpack.c.b16 %v947, %v939
    %v1196 = vpack.c.b16 %v948, %v940
    %v1197 = vpack.c.b16 %v949, %v941
    %v1198 = vpack.c.b16 %v958, %v950
    %v1199 = vpack.c.b16 %v959, %v951
    %v1200 = vpack.c.b16 %v960, %v952
    %v1201 = vpack.c.b16 %v961, %v953
    %v1202 = vpack.c.b16 %v962, %v954
    %v1203 = vpack.c.b16 %v963, %v955
    %v1204 = vpack.c.b16 %v964, %v956
    %v1205 = vpack.c.b16 %v965, %v957
    %v1206 = vpack.c.b16 %v974, %v966
    %v1207 = vpack.c.b16 %v975, %v967
    %v1208 = vpack.c.b16 %v976, %v968
    %v1209 = vpack.c.b16 %v977, %v969
    %v1210 = vpack.c.b16 %v978, %v970
    %v1211 = vpack.c.b16 %v979, %v971
    %v1212 = vpack.c.b16 %v980, %v972
    %v1213 = vpack.c.b16 %v981, %v973
    %v1214 = vpack.c.b16 %v990, %v982
    %v1215 = vpack.c.b16 %v991, %v983
    %v1216 = vpack.c.b16 %v992, %v984
    %v1217 = vpack.c.b16 %v993, %v985
    %v1218 = vpack.c.b16 %v994, %v986
    %v1219 = vpack.c.b16 %v995, %v987
    %v1220 = vpack.c.b16 %v996, %v988
    %v1221 = vpack.c.b16 %v997, %v989
    %v1222 = vpack.c.b16 %v1006, %v998
    %v1223 = vpack.c.b16 %v1007, %v999
    %v1224 = vpack.c.b16 %v1008, %v1000
    %v1225 = vpack.c.b16 %v1009, %v1001
    %v1226 = vpack.c.b16 %v1010, %v1002
    %v1227 = vpack.c.b16 %v1011, %v1003
    %v1228 = vpack.c.b16 %v1012, %v1004
    %v1229 = vpack.c.b16 %v1013, %v1005
    %v1230 = vpack.c.b16 %v1022, %v1014
    %v1231 = vpack.c.b16 %v1023, %v1015
    %v1232 = vpack.c.b16 %v1024, %v1016
    %v1233 = vpack.c.b16 %v1025, %v1017
    %v1234 = vpack.c.b16 %v1026, %v1018
    %v1235 = vpack.c.b16 %v1027, %v1019
    %v1236 = vpack.c.b16 %v1028, %v1020
    %v1237 = vpack.c.b16 %v1029, %v1021
    %v1238 = vpack.c.b16 %v1038, %v1030
    %v1239 = vpack.c.b16 %v1039, %v1031
    %v1240 = vpack.c.b16 %v1040, %v1032
    %v1241 = vpack.c.b16 %v1041, %v1033
    %v1242 = vpack.c.b16 %v1042, %v1034
    %v1243 = vpack.c.b16 %v1043, %v1035
    %v1244 = vpack.c.b16 %v1044, %v1036
    %v1245 = vpack.c.b16 %v1045, %v1037
    %v1246 = vpack.c.b16 %v1054, %v1046
    %v1247 = vpack.c.b16 %v1055, %v1047
    %v1248 = vpack.c.b16 %v1056, %v1048
    %v1249 = vpack.c.b16 %v1057, %v1049
    %v1250 = vpack.c.b16 %v1058, %v1050
    %v1251 = vpack.c.b16 %v1059, %v1051
    %v1252 = vpack.c.b16 %v1060, %v1052
    %v1253 = vpack.c.b16 %v1061, %v1053
    %v1254 = vpack.c.b16 %v1070, %v1062
    %v1255 = vpack.c.b16 %v1071, %v1063
    %v1256 = vpack.c.b16 %v1072, %v1064
    %v1257 = vpack.c.b16 %v1073, %v1065
    %v1258 = vpack.c.b16 %v1074, %v1066
    %v1259 = vpack.c.b16 %v1075, %v1067
    %v1260 = vpack.c.b16 %v1076, %v1068
    %v1261 = vpack.c.b16 %v1077, %v1069
    %v1262 = vpack.c.b16 %v1086, %v1078
    %v1263 = vpack.c.b16 %v1087, %v1079
    %v1264 = vpack.c.b16 %v1088, %v1080
    %v1265 = vpack.c.b16 %v1089, %v1081
    %v1266 = vpack.c.b16 %v1090, %v1082
    %v1267 = vpack.c.b16 %v1091, %v1083
    %v1268 = vpack.c.b16 %v1092, %v1084
    %v1269 = vpack.c.b16 %v1093, %v1085
    %v1270 = vpack.c.b16 %v1102, %v1094
    %v1271 = vpack.c.b16 %v1103, %v1095
    %v1272 = vpack.c.b16 %v1104, %v1096
    %v1273 = vpack.c.b16 %v1105, %v1097
    %v1274 = vpack.c.b16 %v1106, %v1098
    %v1275 = vpack.c.b16 %v1107, %v1099
    %v1276 = vpack.c.b16 %v1108, %v1100
    %v1277 = vpack.c.b16 %v1109, %v1101
    %v1278 = vpack.c.b16 %v1118, %v1110
    %v1279 = vpack.c.b16 %v1119, %v1111
    %v1280 = vpack.c.b16 %v1120, %v1112
    %v1281 = vpack.c.b16 %v1121, %v1113
    %v1282 = vpack.c.b16 %v1122, %v1114
    %v1283 = vpack.c.b16 %v1123, %v1115
    %v1284 = vpack.c.b16 %v1124, %v1116
    %v1285 = vpack.c.b16 %v1125, %v1117
    %v1286 = vpack.c.b16 %v1134, %v1126
    %v1287 = vpack.c.b16 %v1135, %v1127
    %v1288 = vpack.c.b16 %v1136, %v1128
    %v1289 = vpack.c.b16 %v1137, %v1129
    %v1290 = vpack.c.b16 %v1138, %v1130
    %v1291 = vpack.c.b16 %v1139, %v1131
    %v1292 = vpack.c.b16 %v1140, %v1132
    %v1293 = vpack.c.b16 %v1141, %v1133
    %v1294 = vpack.c.b16 %v1150, %v1142
    %v1295 = vpack.c.b16 %v1151, %v1143
    %v1296 = vpack.c.b16 %v1152, %v1144
    %v1297 = vpack.c.b16 %v1153, %v1145
    %v1298 = vpack.c.b16 %v1154, %v1146
    %v1299 = vpack.c.b16 %v1155, %v1147
    %v1300 = vpack.c.b16 %v1156, %v1148
    %v1301 = vpack.c.b16 %v1157, %v1149
    %v1302 = vpack.c.b16 %v1166, %v1158
    %v1303 = vpack.c.b16 %v1167, %v1159
    %v1304 = vpack.c.b16 %v1168, %v1160
    %v1305 = vpack.c.b16 %v1169, %v1161
    %v1306 = vpack.c.b16 %v1170, %v1162
    %v1307 = vpack.c.b16 %v1171, %v1163
    %v1308 = vpack.c.b16 %v1172, %v1164
    %v1309 = vpack.c.b16 %v1173, %v1165
    %v1310 = vpack.c.b16 %v1182, %v1174
    %v1311 = vpack.c.b16 %v1183, %v1175
    %v1312 = vpack.c.b16 %v1184, %v1176
    %v1313 = vpack.c.b16 %v1185, %v1177
    %v1314 = vpack.c.b16 %v1186, %v1178
    %v1315 = vpack.c.b16 %v1187, %v1179
    %v1316 = vpack.c.b16 %v1188, %v1180
    %v1317 = vpack.c.b16 %v1189, %v1181
    %1446 = vmatpush.bf16.msra.mxu0 %v1246
    %1447 = vmatpush.bf16.msra.mxu0 %v1238
    %1448 = vmatpush.bf16.msra.mxu0 %v1230
    %1449 = vmatpush.bf16.msra.mxu0 %v1222
    %1450 = vmatpush.bf16.msra.mxu0 %v1214
    %1451 = vmatpush.bf16.msra.mxu0 %v1206
    %1452 = vmatpush.bf16.msra.mxu0 %v1198
    %1453 = vmatpush.bf16.msra.mxu0 %v1190
    %1454 = vmatmul.bf16.gmra.mxu0 %v804
    %v1455 = vpop.f32.mrf.mxu0
    %v1456 = vadd.f32 0.0, %v1455
    %v1457 = vpop.f32.mrf.mxu0
    %1458 = vdwg.mxu0
    %1459 = vmatpush.bf16.msra.mxu0 %v1310
    %1460 = vmatpush.bf16.msra.mxu0 %v1302
    %1461 = vmatpush.bf16.msra.mxu0 %v1294
    %1462 = vmatpush.bf16.msra.mxu0 %v1286
    %1463 = vmatpush.bf16.msra.mxu0 %v1278
    %1464 = vmatpush.bf16.msra.mxu0 %v1270
    %1465 = vmatpush.bf16.msra.mxu0 %v1262
    %1466 = vmatpush.bf16.msra.mxu0 %v1254
    %1467 = vmatmul.bf16.gmra.mxu0 %v805
    %v1468 = vpop.f32.mrf.mxu0
    %v1469 = vadd.f32 %v1456, %v1468
    %v1470 = vpop.f32.mrf.mxu0
    %1471 = vdwg.mxu0
    %1472 = vmatpush.bf16.msra.mxu0 %v1247
    %1473 = vmatpush.bf16.msra.mxu0 %v1239
    %1474 = vmatpush.bf16.msra.mxu0 %v1231
    %1475 = vmatpush.bf16.msra.mxu0 %v1223
    %1476 = vmatpush.bf16.msra.mxu0 %v1215
    %1477 = vmatpush.bf16.msra.mxu0 %v1207
    %1478 = vmatpush.bf16.msra.mxu0 %v1199
    %1479 = vmatpush.bf16.msra.mxu0 %v1191
    %1480 = vmatmul.bf16.gmra.mxu0 %v804
    %v1481 = vpop.f32.mrf.mxu0
    %v1482 = vadd.f32 0.0, %v1481
    %v1483 = vpop.f32.mrf.mxu0
    %1484 = vdwg.mxu0
    %1485 = vmatpush.bf16.msra.mxu0 %v1311
    %1486 = vmatpush.bf16.msra.mxu0 %v1303
    %1487 = vmatpush.bf16.msra.mxu0 %v1295
    %1488 = vmatpush.bf16.msra.mxu0 %v1287
    %1489 = vmatpush.bf16.msra.mxu0 %v1279
    %1490 = vmatpush.bf16.msra.mxu0 %v1271
    %1491 = vmatpush.bf16.msra.mxu0 %v1263
    %1492 = vmatpush.bf16.msra.mxu0 %v1255
    %1493 = vmatmul.bf16.gmra.mxu0 %v805
    %v1494 = vpop.f32.mrf.mxu0
    %v1495 = vadd.f32 %v1482, %v1494
    %v1496 = vpop.f32.mrf.mxu0
    %1497 = vdwg.mxu0
    %1498 = vmatpush.bf16.msra.mxu0 %v1248
    %1499 = vmatpush.bf16.msra.mxu0 %v1240
    %1500 = vmatpush.bf16.msra.mxu0 %v1232
    %1501 = vmatpush.bf16.msra.mxu0 %v1224
    %1502 = vmatpush.bf16.msra.mxu0 %v1216
    %1503 = vmatpush.bf16.msra.mxu0 %v1208
    %1504 = vmatpush.bf16.msra.mxu0 %v1200
    %1505 = vmatpush.bf16.msra.mxu0 %v1192
    %1506 = vmatmul.bf16.gmra.mxu0 %v804
    %v1507 = vpop.f32.mrf.mxu0
    %v1508 = vadd.f32 0.0, %v1507
    %v1509 = vpop.f32.mrf.mxu0
    %1510 = vdwg.mxu0
    %1511 = vmatpush.bf16.msra.mxu0 %v1312
    %1512 = vmatpush.bf16.msra.mxu0 %v1304
    %1513 = vmatpush.bf16.msra.mxu0 %v1296
    %1514 = vmatpush.bf16.msra.mxu0 %v1288
    %1515 = vmatpush.bf16.msra.mxu0 %v1280
    %1516 = vmatpush.bf16.msra.mxu0 %v1272
    %1517 = vmatpush.bf16.msra.mxu0 %v1264
    %1518 = vmatpush.bf16.msra.mxu0 %v1256
    %1519 = vmatmul.bf16.gmra.mxu0 %v805
    %v1520 = vpop.f32.mrf.mxu0
    %v1521 = vadd.f32 %v1508, %v1520
    %v1522 = vpop.f32.mrf.mxu0
    %1523 = vdwg.mxu0
    %1524 = vmatpush.bf16.msra.mxu0 %v1249
    %1525 = vmatpush.bf16.msra.mxu0 %v1241
    %1526 = vmatpush.bf16.msra.mxu0 %v1233
    %1527 = vmatpush.bf16.msra.mxu0 %v1225
    %1528 = vmatpush.bf16.msra.mxu0 %v1217
    %1529 = vmatpush.bf16.msra.mxu0 %v1209
    %1530 = vmatpush.bf16.msra.mxu0 %v1201
    %1531 = vmatpush.bf16.msra.mxu0 %v1193
    %1532 = vmatmul.bf16.gmra.mxu0 %v804
    %v1533 = vpop.f32.mrf.mxu0
    %v1534 = vadd.f32 0.0, %v1533
    %v1535 = vpop.f32.mrf.mxu0
    %1536 = vdwg.mxu0
    %1537 = vmatpush.bf16.msra.mxu0 %v1313
    %1538 = vmatpush.bf16.msra.mxu0 %v1305
    %1539 = vmatpush.bf16.msra.mxu0 %v1297
    %1540 = vmatpush.bf16.msra.mxu0 %v1289
    %1541 = vmatpush.bf16.msra.mxu0 %v1281
    %1542 = vmatpush.bf16.msra.mxu0 %v1273
    %1543 = vmatpush.bf16.msra.mxu0 %v1265
    %1544 = vmatpush.bf16.msra.mxu0 %v1257
    %1545 = vmatmul.bf16.gmra.mxu0 %v805
    %v1546 = vpop.f32.mrf.mxu0
    %v1547 = vadd.f32 %v1534, %v1546
    %v1548 = vpop.f32.mrf.mxu0
    %1549 = vdwg.mxu0
    %1550 = vmatpush.bf16.msra.mxu0 %v1250
    %1551 = vmatpush.bf16.msra.mxu0 %v1242
    %1552 = vmatpush.bf16.msra.mxu0 %v1234
    %1553 = vmatpush.bf16.msra.mxu0 %v1226
    %1554 = vmatpush.bf16.msra.mxu0 %v1218
    %1555 = vmatpush.bf16.msra.mxu0 %v1210
    %1556 = vmatpush.bf16.msra.mxu0 %v1202
    %1557 = vmatpush.bf16.msra.mxu0 %v1194
    %1558 = vmatmul.bf16.gmra.mxu0 %v804
    %v1559 = vpop.f32.mrf.mxu0
    %v1560 = vadd.f32 0.0, %v1559
    %v1561 = vpop.f32.mrf.mxu0
    %1562 = vdwg.mxu0
    %1563 = vmatpush.bf16.msra.mxu0 %v1314
    %1564 = vmatpush.bf16.msra.mxu0 %v1306
    %1565 = vmatpush.bf16.msra.mxu0 %v1298
    %1566 = vmatpush.bf16.msra.mxu0 %v1290
    %1567 = vmatpush.bf16.msra.mxu0 %v1282
    %1568 = vmatpush.bf16.msra.mxu0 %v1274
    %1569 = vmatpush.bf16.msra.mxu0 %v1266
    %1570 = vmatpush.bf16.msra.mxu0 %v1258
    %1571 = vmatmul.bf16.gmra.mxu0 %v805
    %v1572 = vpop.f32.mrf.mxu0
    %v1573 = vadd.f32 %v1560, %v1572
    %v1574 = vpop.f32.mrf.mxu0
    %1575 = vdwg.mxu0
    %1576 = vmatpush.bf16.msra.mxu0 %v1251
    %1577 = vmatpush.bf16.msra.mxu0 %v1243
    %1578 = vmatpush.bf16.msra.mxu0 %v1235
    %1579 = vmatpush.bf16.msra.mxu0 %v1227
    %1580 = vmatpush.bf16.msra.mxu0 %v1219
    %1581 = vmatpush.bf16.msra.mxu0 %v1211
    %1582 = vmatpush.bf16.msra.mxu0 %v1203
    %1583 = vmatpush.bf16.msra.mxu0 %v1195
    %1584 = vmatmul.bf16.gmra.mxu0 %v804
    %v1585 = vpop.f32.mrf.mxu0
    %v1586 = vadd.f32 0.0, %v1585
    %v1587 = vpop.f32.mrf.mxu0
    %1588 = vdwg.mxu0
    %1589 = vmatpush.bf16.msra.mxu0 %v1315
    %1590 = vmatpush.bf16.msra.mxu0 %v1307
    %1591 = vmatpush.bf16.msra.mxu0 %v1299
    %1592 = vmatpush.bf16.msra.mxu0 %v1291
    %1593 = vmatpush.bf16.msra.mxu0 %v1283
    %1594 = vmatpush.bf16.msra.mxu0 %v1275
    %1595 = vmatpush.bf16.msra.mxu0 %v1267
    %1596 = vmatpush.bf16.msra.mxu0 %v1259
    %1597 = vmatmul.bf16.gmra.mxu0 %v805
    %v1598 = vpop.f32.mrf.mxu0
    %v1599 = vadd.f32 %v1586, %v1598
    %v1600 = vpop.f32.mrf.mxu0
    %1601 = vdwg.mxu0
    %1602 = vmatpush.bf16.msra.mxu0 %v1252
    %1603 = vmatpush.bf16.msra.mxu0 %v1244
    %1604 = vmatpush.bf16.msra.mxu0 %v1236
    %1605 = vmatpush.bf16.msra.mxu0 %v1228
    %1606 = vmatpush.bf16.msra.mxu0 %v1220
    %1607 = vmatpush.bf16.msra.mxu0 %v1212
    %1608 = vmatpush.bf16.msra.mxu0 %v1204
    %1609 = vmatpush.bf16.msra.mxu0 %v1196
    %1610 = vmatmul.bf16.gmra.mxu0 %v804
    %v1611 = vpop.f32.mrf.mxu0
    %v1612 = vadd.f32 0.0, %v1611
    %v1613 = vpop.f32.mrf.mxu0
    %1614 = vdwg.mxu0
    %1615 = vmatpush.bf16.msra.mxu0 %v1316
    %1616 = vmatpush.bf16.msra.mxu0 %v1308
    %1617 = vmatpush.bf16.msra.mxu0 %v1300
    %1618 = vmatpush.bf16.msra.mxu0 %v1292
    %1619 = vmatpush.bf16.msra.mxu0 %v1284
    %1620 = vmatpush.bf16.msra.mxu0 %v1276
    %1621 = vmatpush.bf16.msra.mxu0 %v1268
    %1622 = vmatpush.bf16.msra.mxu0 %v1260
    %1623 = vmatmul.bf16.gmra.mxu0 %v805
    %v1624 = vpop.f32.mrf.mxu0
    %v1625 = vadd.f32 %v1612, %v1624
    %v1626 = vpop.f32.mrf.mxu0
    %1627 = vdwg.mxu0
    %1628 = vmatpush.bf16.msra.mxu0 %v1253
    %1629 = vmatpush.bf16.msra.mxu0 %v1245
    %1630 = vmatpush.bf16.msra.mxu0 %v1237
    %1631 = vmatpush.bf16.msra.mxu0 %v1229
    %1632 = vmatpush.bf16.msra.mxu0 %v1221
    %1633 = vmatpush.bf16.msra.mxu0 %v1213
    %1634 = vmatpush.bf16.msra.mxu0 %v1205
    %1635 = vmatpush.bf16.msra.mxu0 %v1197
    %1636 = vmatmul.bf16.gmra.mxu0 %v804
    %v1637 = vpop.f32.mrf.mxu0
    %v1638 = vadd.f32 0.0, %v1637
    %v1639 = vpop.f32.mrf.mxu0
    %1640 = vdwg.mxu0
    %1641 = vmatpush.bf16.msra.mxu0 %v1317
    %1642 = vmatpush.bf16.msra.mxu0 %v1309
    %1643 = vmatpush.bf16.msra.mxu0 %v1301
    %1644 = vmatpush.bf16.msra.mxu0 %v1293
    %1645 = vmatpush.bf16.msra.mxu0 %v1285
    %1646 = vmatpush.bf16.msra.mxu0 %v1277
    %1647 = vmatpush.bf16.msra.mxu0 %v1269
    %1648 = vmatpush.bf16.msra.mxu0 %v1261
    %1649 = vmatmul.bf16.gmra.mxu0 %v805
    %v1650 = vpop.f32.mrf.mxu0
    %v1651 = vadd.f32 %v1638, %v1650
    %v1652 = vpop.f32.mrf.mxu0
    %1653 = vdwg.mxu0
    %v1662 = vrot.slane %v1495, 7
    %v1663 = vrot.slane %v1521, 6
    %v1664 = vrot.slane %v1547, 5
    %v1665 = vrot.slane %v1573, 4
    %v1666 = vrot.slane %v1599, 3
    %v1667 = vrot.slane %v1625, 2
    %v1668 = vrot.slane %v1651, 1
    %vm1669 = vcmask 1040384
    %v1670 = vsel %vm1669, %v1469, %v1662
    %vm1671 = vcmask 1042434
    %v1672 = vsel %vm1671, %v1663, %v1664
    %vm1673 = vcmask 1041408
    %v1674 = vsel %vm1673, %v1670, %v1672
    %vm1675 = vcmask 1044484
    %v1676 = vsel %vm1675, %v1665, %v1666
    %vm1677 = vcmask 1046534
    %v1678 = vsel %vm1677, %v1667, %v1668
    %vm1679 = vcmask 1045508
    %v1680 = vsel %vm1679, %v1676, %v1678
    %vm1681 = vcmask 1043456
    %v1682 = vsel %vm1681, %v1674, %v1680
    %v1684 = vadd.f32 %v798, %v1682
    %v1685 = vxor.u32 %v1684, 2147483648
    %v1686 = vmul.f32 %v1685, 1.442695
    %v1687 = vpow.pop %v1686
    %v1688 = vadd.f32 %v1687, 1.0
    %v1689 = vrcp.pop %v1688
    %v1690 = vmul.f32 %v1688, %v1689
    %v1691 = vsub.f32 1.0, %v1690
    %v1692 = vmul.f32 %v1689, %v1691
    %v1693 = vadd.f32 %v1689, %v1692
    %vm1694 = vweird.f32 %v1688
    %vm1695 = vweird.f32 %v1689
    %vm1696 = vmor %vm1694, %vm1695
    %v1697 = vsel %vm1696, %v1689, %v1693
    %v1698 = vand.u32 2147483647, %v1688
    %vm1699 = vcmp.eq.f32.partialorder %v1698, 8.507059e+37
    %v1700 = vand.u32 %v1688, 2147483648
    %v1701 = vor.u32 1.1754944e-38, %v1700
    %v1702 = vsel %vm1699, %v1701, %v1697
    %v1703 = vmul.f32 1.0, %v1702
    %v1705 = vrot.slane %v1684, 6
    %v1707 = vtanh.pop %v1705
    %v1709 = vrot.slane %v1703, 2
    %v1711 = vmul.f32 %v1709, %v790
    %v1712 = vmul.f32 %v1703, %v1707
    %v1713 = vadd.f32 %v1711, %v1712
    %v1714 = vtanh.pop %v1713
    %v1715 = vrot.slane %v1703, 4
    %v1717 = vmul.f32 %v1715, %v1714
    %s1718 = scalar_lea.vmem [#allocation2], 2
    %v1719 = vld [vmem:[%s1718] ss:$8 sm:$0xf]
    %v1720 = vld [vmem:[%s1718] ss:$8 sm:$0xf0]
    %v1721 = vor.u32 %v1719, %v1720
    %v1723 = vperm.slane %v1717, 0
    %v1724 = vperm.slane %v1717, 1
    %v1727 = vpack.c.bf16 %v1723, %v1723
    %v1728 = vpack.c.bf16 %v1724, %v1724
    %1729 = vmatpush.bf16.msra.mxu0 %v1246
    %1730 = vmatpush.bf16.msra.mxu0 %v1238
    %1731 = vmatpush.bf16.msra.mxu0 %v1230
    %1732 = vmatpush.bf16.msra.mxu0 %v1222
    %1733 = vmatpush.bf16.msra.mxu0 %v1214
    %1734 = vmatpush.bf16.msra.mxu0 %v1206
    %1735 = vmatpush.bf16.msra.mxu0 %v1198
    %1736 = vmatpush.bf16.msra.mxu0 %v1190
    %1737 = vmatmul.bf16.gmra.mxu0 %v1727
    %v1738 = vpop.f32.mrf.mxu0
    %v1739 = vadd.f32 0.0, %v1738
    %v1740 = vpop.f32.mrf.mxu0
    %1741 = vdwg.mxu0
    %1742 = vmatpush.bf16.msra.mxu0 %v1310
    %1743 = vmatpush.bf16.msra.mxu0 %v1302
    %1744 = vmatpush.bf16.msra.mxu0 %v1294
    %1745 = vmatpush.bf16.msra.mxu0 %v1286
    %1746 = vmatpush.bf16.msra.mxu0 %v1278
    %1747 = vmatpush.bf16.msra.mxu0 %v1270
    %1748 = vmatpush.bf16.msra.mxu0 %v1262
    %1749 = vmatpush.bf16.msra.mxu0 %v1254
    %1750 = vmatmul.bf16.gmra.mxu0 %v1728
    %v1751 = vpop.f32.mrf.mxu0
    %v1752 = vadd.f32 %v1739, %v1751
    %v1753 = vpop.f32.mrf.mxu0
    %1754 = vdwg.mxu0
    %1755 = vmatpush.bf16.msra.mxu0 %v1247
    %1756 = vmatpush.bf16.msra.mxu0 %v1239
    %1757 = vmatpush.bf16.msra.mxu0 %v1231
    %1758 = vmatpush.bf16.msra.mxu0 %v1223
    %1759 = vmatpush.bf16.msra.mxu0 %v1215
    %1760 = vmatpush.bf16.msra.mxu0 %v1207
    %1761 = vmatpush.bf16.msra.mxu0 %v1199
    %1762 = vmatpush.bf16.msra.mxu0 %v1191
    %1763 = vmatmul.bf16.gmra.mxu0 %v1727
    %v1764 = vpop.f32.mrf.mxu0
    %v1765 = vadd.f32 0.0, %v1764
    %v1766 = vpop.f32.mrf.mxu0
    %1767 = vdwg.mxu0
    %1768 = vmatpush.bf16.msra.mxu0 %v1311
    %1769 = vmatpush.bf16.msra.mxu0 %v1303
    %1770 = vmatpush.bf16.msra.mxu0 %v1295
    %1771 = vmatpush.bf16.msra.mxu0 %v1287
    %1772 = vmatpush.bf16.msra.mxu0 %v1279
    %1773 = vmatpush.bf16.msra.mxu0 %v1271
    %1774 = vmatpush.bf16.msra.mxu0 %v1263
    %1775 = vmatpush.bf16.msra.mxu0 %v1255
    %1776 = vmatmul.bf16.gmra.mxu0 %v1728
    %v1777 = vpop.f32.mrf.mxu0
    %v1778 = vadd.f32 %v1765, %v1777
    %v1779 = vpop.f32.mrf.mxu0
    %1780 = vdwg.mxu0
    %1781 = vmatpush.bf16.msra.mxu0 %v1248
    %1782 = vmatpush.bf16.msra.mxu0 %v1240
    %1783 = vmatpush.bf16.msra.mxu0 %v1232
    %1784 = vmatpush.bf16.msra.mxu0 %v1224
    %1785 = vmatpush.bf16.msra.mxu0 %v1216
    %1786 = vmatpush.bf16.msra.mxu0 %v1208
    %1787 = vmatpush.bf16.msra.mxu0 %v1200
    %1788 = vmatpush.bf16.msra.mxu0 %v1192
    %1789 = vmatmul.bf16.gmra.mxu0 %v1727
    %v1790 = vpop.f32.mrf.mxu0
    %v1791 = vadd.f32 0.0, %v1790
    %v1792 = vpop.f32.mrf.mxu0
    %1793 = vdwg.mxu0
    %1794 = vmatpush.bf16.msra.mxu0 %v1312
    %1795 = vmatpush.bf16.msra.mxu0 %v1304
    %1796 = vmatpush.bf16.msra.mxu0 %v1296
    %1797 = vmatpush.bf16.msra.mxu0 %v1288
    %1798 = vmatpush.bf16.msra.mxu0 %v1280
    %1799 = vmatpush.bf16.msra.mxu0 %v1272
    %1800 = vmatpush.bf16.msra.mxu0 %v1264
    %1801 = vmatpush.bf16.msra.mxu0 %v1256
    %1802 = vmatmul.bf16.gmra.mxu0 %v1728
    %v1803 = vpop.f32.mrf.mxu0
    %v1804 = vadd.f32 %v1791, %v1803
    %v1805 = vpop.f32.mrf.mxu0
    %1806 = vdwg.mxu0
    %1807 = vmatpush.bf16.msra.mxu0 %v1249
    %1808 = vmatpush.bf16.msra.mxu0 %v1241
    %1809 = vmatpush.bf16.msra.mxu0 %v1233
    %1810 = vmatpush.bf16.msra.mxu0 %v1225
    %1811 = vmatpush.bf16.msra.mxu0 %v1217
    %1812 = vmatpush.bf16.msra.mxu0 %v1209
    %1813 = vmatpush.bf16.msra.mxu0 %v1201
    %1814 = vmatpush.bf16.msra.mxu0 %v1193
    %1815 = vmatmul.bf16.gmra.mxu0 %v1727
    %v1816 = vpop.f32.mrf.mxu0
    %v1817 = vadd.f32 0.0, %v1816
    %v1818 = vpop.f32.mrf.mxu0
    %1819 = vdwg.mxu0
    %1820 = vmatpush.bf16.msra.mxu0 %v1313
    %1821 = vmatpush.bf16.msra.mxu0 %v1305
    %1822 = vmatpush.bf16.msra.mxu0 %v1297
    %1823 = vmatpush.bf16.msra.mxu0 %v1289
    %1824 = vmatpush.bf16.msra.mxu0 %v1281
    %1825 = vmatpush.bf16.msra.mxu0 %v1273
    %1826 = vmatpush.bf16.msra.mxu0 %v1265
    %1827 = vmatpush.bf16.msra.mxu0 %v1257
    %1828 = vmatmul.bf16.gmra.mxu0 %v1728
    %v1829 = vpop.f32.mrf.mxu0
    %v1830 = vadd.f32 %v1817, %v1829
    %v1831 = vpop.f32.mrf.mxu0
    %1832 = vdwg.mxu0
    %1833 = vmatpush.bf16.msra.mxu0 %v1250
    %1834 = vmatpush.bf16.msra.mxu0 %v1242
    %1835 = vmatpush.bf16.msra.mxu0 %v1234
    %1836 = vmatpush.bf16.msra.mxu0 %v1226
    %1837 = vmatpush.bf16.msra.mxu0 %v1218
    %1838 = vmatpush.bf16.msra.mxu0 %v1210
    %1839 = vmatpush.bf16.msra.mxu0 %v1202
    %1840 = vmatpush.bf16.msra.mxu0 %v1194
    %1841 = vmatmul.bf16.gmra.mxu0 %v1727
    %v1842 = vpop.f32.mrf.mxu0
    %v1843 = vadd.f32 0.0, %v1842
    %v1844 = vpop.f32.mrf.mxu0
    %1845 = vdwg.mxu0
    %1846 = vmatpush.bf16.msra.mxu0 %v1314
    %1847 = vmatpush.bf16.msra.mxu0 %v1306
    %1848 = vmatpush.bf16.msra.mxu0 %v1298
    %1849 = vmatpush.bf16.msra.mxu0 %v1290
    %1850 = vmatpush.bf16.msra.mxu0 %v1282
    %1851 = vmatpush.bf16.msra.mxu0 %v1274
    %1852 = vmatpush.bf16.msra.mxu0 %v1266
    %1853 = vmatpush.bf16.msra.mxu0 %v1258
    %1854 = vmatmul.bf16.gmra.mxu0 %v1728
    %v1855 = vpop.f32.mrf.mxu0
    %v1856 = vadd.f32 %v1843, %v1855
    %v1857 = vpop.f32.mrf.mxu0
    %1858 = vdwg.mxu0
    %1859 = vmatpush.bf16.msra.mxu0 %v1251
    %1860 = vmatpush.bf16.msra.mxu0 %v1243
    %1861 = vmatpush.bf16.msra.mxu0 %v1235
    %1862 = vmatpush.bf16.msra.mxu0 %v1227
    %1863 = vmatpush.bf16.msra.mxu0 %v1219
    %1864 = vmatpush.bf16.msra.mxu0 %v1211
    %1865 = vmatpush.bf16.msra.mxu0 %v1203
    %1866 = vmatpush.bf16.msra.mxu0 %v1195
    %1867 = vmatmul.bf16.gmra.mxu0 %v1727
    %v1868 = vpop.f32.mrf.mxu0
    %v1869 = vadd.f32 0.0, %v1868
    %v1870 = vpop.f32.mrf.mxu0
    %1871 = vdwg.mxu0
    %1872 = vmatpush.bf16.msra.mxu0 %v1315
    %1873 = vmatpush.bf16.msra.mxu0 %v1307
    %1874 = vmatpush.bf16.msra.mxu0 %v1299
    %1875 = vmatpush.bf16.msra.mxu0 %v1291
    %1876 = vmatpush.bf16.msra.mxu0 %v1283
    %1877 = vmatpush.bf16.msra.mxu0 %v1275
    %1878 = vmatpush.bf16.msra.mxu0 %v1267
    %1879 = vmatpush.bf16.msra.mxu0 %v1259
    %1880 = vmatmul.bf16.gmra.mxu0 %v1728
    %v1881 = vpop.f32.mrf.mxu0
    %v1882 = vadd.f32 %v1869, %v1881
    %v1883 = vpop.f32.mrf.mxu0
    %1884 = vdwg.mxu0
    %1885 = vmatpush.bf16.msra.mxu0 %v1252
    %1886 = vmatpush.bf16.msra.mxu0 %v1244
    %1887 = vmatpush.bf16.msra.mxu0 %v1236
    %1888 = vmatpush.bf16.msra.mxu0 %v1228
    %1889 = vmatpush.bf16.msra.mxu0 %v1220
    %1890 = vmatpush.bf16.msra.mxu0 %v1212
    %1891 = vmatpush.bf16.msra.mxu0 %v1204
    %1892 = vmatpush.bf16.msra.mxu0 %v1196
    %1893 = vmatmul.bf16.gmra.mxu0 %v1727
    %v1894 = vpop.f32.mrf.mxu0
    %v1895 = vadd.f32 0.0, %v1894
    %v1896 = vpop.f32.mrf.mxu0
    %1897 = vdwg.mxu0
    %1898 = vmatpush.bf16.msra.mxu0 %v1316
    %1899 = vmatpush.bf16.msra.mxu0 %v1308
    %1900 = vmatpush.bf16.msra.mxu0 %v1300
    %1901 = vmatpush.bf16.msra.mxu0 %v1292
    %1902 = vmatpush.bf16.msra.mxu0 %v1284
    %1903 = vmatpush.bf16.msra.mxu0 %v1276
    %1904 = vmatpush.bf16.msra.mxu0 %v1268
    %1905 = vmatpush.bf16.msra.mxu0 %v1260
    %1906 = vmatmul.bf16.gmra.mxu0 %v1728
    %v1907 = vpop.f32.mrf.mxu0
    %v1908 = vadd.f32 %v1895, %v1907
    %v1909 = vpop.f32.mrf.mxu0
    %1910 = vdwg.mxu0
    %1911 = vmatpush.bf16.msra.mxu0 %v1253
    %1912 = vmatpush.bf16.msra.mxu0 %v1245
    %1913 = vmatpush.bf16.msra.mxu0 %v1237
    %1914 = vmatpush.bf16.msra.mxu0 %v1229
    %1915 = vmatpush.bf16.msra.mxu0 %v1221
    %1916 = vmatpush.bf16.msra.mxu0 %v1213
    %1917 = vmatpush.bf16.msra.mxu0 %v1205
    %1918 = vmatpush.bf16.msra.mxu0 %v1197
    %1919 = vmatmul.bf16.gmra.mxu0 %v1727
    %v1920 = vpop.f32.mrf.mxu0
    %v1921 = vadd.f32 0.0, %v1920
    %v1922 = vpop.f32.mrf.mxu0
    %1923 = vdwg.mxu0
    %1924 = vmatpush.bf16.msra.mxu0 %v1317
    %1925 = vmatpush.bf16.msra.mxu0 %v1309
    %1926 = vmatpush.bf16.msra.mxu0 %v1301
    %1927 = vmatpush.bf16.msra.mxu0 %v1293
    %1928 = vmatpush.bf16.msra.mxu0 %v1285
    %1929 = vmatpush.bf16.msra.mxu0 %v1277
    %1930 = vmatpush.bf16.msra.mxu0 %v1269
    %1931 = vmatpush.bf16.msra.mxu0 %v1261
    %1932 = vmatmul.bf16.gmra.mxu0 %v1728
    %v1933 = vpop.f32.mrf.mxu0
    %v1934 = vadd.f32 %v1921, %v1933
    %v1935 = vpop.f32.mrf.mxu0
    %1936 = vdwg.mxu0
    %v1945 = vrot.slane %v1778, 7
    %v1946 = vrot.slane %v1804, 6
    %v1947 = vrot.slane %v1830, 5
    %v1948 = vrot.slane %v1856, 4
    %v1949 = vrot.slane %v1882, 3
    %v1950 = vrot.slane %v1908, 2
    %v1951 = vrot.slane %v1934, 1
    %v1952 = vsel %vm1669, %v1752, %v1945
    %v1953 = vsel %vm1671, %v1946, %v1947
    %v1954 = vsel %vm1673, %v1952, %v1953
    %v1955 = vsel %vm1675, %v1948, %v1949
    %v1956 = vsel %vm1677, %v1950, %v1951
    %v1957 = vsel %vm1679, %v1955, %v1956
    %v1958 = vsel %vm1681, %v1954, %v1957
    %v1960 = vadd.f32 %v1721, %v1958
    %v1961 = vxor.u32 %v1960, 2147483648
    %v1962 = vmul.f32 %v1961, 1.442695
    %v1963 = vpow.pop %v1962
    %v1964 = vadd.f32 %v1963, 1.0
    %v1965 = vrcp.pop %v1964
    %v1966 = vmul.f32 %v1964, %v1965
    %v1967 = vsub.f32 1.0, %v1966
    %v1968 = vmul.f32 %v1965, %v1967
    %v1969 = vadd.f32 %v1965, %v1968
    %vm1970 = vweird.f32 %v1964
    %vm1971 = vweird.f32 %v1965
    %vm1972 = vmor %vm1970, %vm1971
    %v1973 = vsel %vm1972, %v1965, %v1969
    %v1974 = vand.u32 2147483647, %v1964
    %vm1975 = vcmp.eq.f32.partialorder %v1974, 8.507059e+37
    %v1976 = vand.u32 %v1964, 2147483648
    %v1977 = vor.u32 1.1754944e-38, %v1976
    %v1978 = vsel %vm1975, %v1977, %v1973
    %v1979 = vmul.f32 1.0, %v1978
    %v1981 = vrot.slane %v1960, 6
    %v1983 = vtanh.pop %v1981
    %v1985 = vrot.slane %v1979, 2
    %v1987 = vmul.f32 %v1985, %v1713
    %v1988 = vmul.f32 %v1979, %v1983
    %v1989 = vadd.f32 %v1987, %v1988
    %v1990 = vtanh.pop %v1989
    %v1991 = vrot.slane %v1979, 4
    %v1993 = vmul.f32 %v1991, %v1990
    %s1994 = scalar_lea.vmem [#allocation2], 3
    %v1995 = vld [vmem:[%s1994] ss:$8 sm:$0xf]
    %v1996 = vld [vmem:[%s1994] ss:$8 sm:$0xf0]
    %v1997 = vor.u32 %v1995, %v1996
    %v1999 = vperm.slane %v1993, 0
    %v2000 = vperm.slane %v1993, 1
    %v2003 = vpack.c.bf16 %v1999, %v1999
    %v2004 = vpack.c.bf16 %v2000, %v2000
    %2005 = vmatpush.bf16.msra.mxu0 %v1246
    %2006 = vmatpush.bf16.msra.mxu0 %v1238
    %2007 = vmatpush.bf16.msra.mxu0 %v1230
    %2008 = vmatpush.bf16.msra.mxu0 %v1222
    %2009 = vmatpush.bf16.msra.mxu0 %v1214
    %2010 = vmatpush.bf16.msra.mxu0 %v1206
    %2011 = vmatpush.bf16.msra.mxu0 %v1198
    %2012 = vmatpush.bf16.msra.mxu0 %v1190
    %2013 = vmatmul.bf16.gmra.mxu0 %v2003
    %v2014 = vpop.f32.mrf.mxu0
    %v2015 = vadd.f32 0.0, %v2014
    %v2016 = vpop.f32.mrf.mxu0
    %2017 = vdwg.mxu0
    %2018 = vmatpush.bf16.msra.mxu0 %v1310
    %2019 = vmatpush.bf16.msra.mxu0 %v1302
    %2020 = vmatpush.bf16.msra.mxu0 %v1294
    %2021 = vmatpush.bf16.msra.mxu0 %v1286
    %2022 = vmatpush.bf16.msra.mxu0 %v1278
    %2023 = vmatpush.bf16.msra.mxu0 %v1270
    %2024 = vmatpush.bf16.msra.mxu0 %v1262
    %2025 = vmatpush.bf16.msra.mxu0 %v1254
    %2026 = vmatmul.bf16.gmra.mxu0 %v2004
    %v2027 = vpop.f32.mrf.mxu0
    %v2028 = vadd.f32 %v2015, %v2027
    %v2029 = vpop.f32.mrf.mxu0
    %2030 = vdwg.mxu0
    %2031 = vmatpush.bf16.msra.mxu0 %v1247
    %2032 = vmatpush.bf16.msra.mxu0 %v1239
    %2033 = vmatpush.bf16.msra.mxu0 %v1231
    %2034 = vmatpush.bf16.msra.mxu0 %v1223
    %2035 = vmatpush.bf16.msra.mxu0 %v1215
    %2036 = vmatpush.bf16.msra.mxu0 %v1207
    %2037 = vmatpush.bf16.msra.mxu0 %v1199
    %2038 = vmatpush.bf16.msra.mxu0 %v1191
    %2039 = vmatmul.bf16.gmra.mxu0 %v2003
    %v2040 = vpop.f32.mrf.mxu0
    %v2041 = vadd.f32 0.0, %v2040
    %v2042 = vpop.f32.mrf.mxu0
    %2043 = vdwg.mxu0
    %2044 = vmatpush.bf16.msra.mxu0 %v1311
    %2045 = vmatpush.bf16.msra.mxu0 %v1303
    %2046 = vmatpush.bf16.msra.mxu0 %v1295
    %2047 = vmatpush.bf16.msra.mxu0 %v1287
    %2048 = vmatpush.bf16.msra.mxu0 %v1279
    %2049 = vmatpush.bf16.msra.mxu0 %v1271
    %2050 = vmatpush.bf16.msra.mxu0 %v1263
    %2051 = vmatpush.bf16.msra.mxu0 %v1255
    %2052 = vmatmul.bf16.gmra.mxu0 %v2004
    %v2053 = vpop.f32.mrf.mxu0
    %v2054 = vadd.f32 %v2041, %v2053
    %v2055 = vpop.f32.mrf.mxu0
    %2056 = vdwg.mxu0
    %2057 = vmatpush.bf16.msra.mxu0 %v1248
    %2058 = vmatpush.bf16.msra.mxu0 %v1240
    %2059 = vmatpush.bf16.msra.mxu0 %v1232
    %2060 = vmatpush.bf16.msra.mxu0 %v1224
    %2061 = vmatpush.bf16.msra.mxu0 %v1216
    %2062 = vmatpush.bf16.msra.mxu0 %v1208
    %2063 = vmatpush.bf16.msra.mxu0 %v1200
    %2064 = vmatpush.bf16.msra.mxu0 %v1192
    %2065 = vmatmul.bf16.gmra.mxu0 %v2003
    %v2066 = vpop.f32.mrf.mxu0
    %v2067 = vadd.f32 0.0, %v2066
    %v2068 = vpop.f32.mrf.mxu0
    %2069 = vdwg.mxu0
    %2070 = vmatpush.bf16.msra.mxu0 %v1312
    %2071 = vmatpush.bf16.msra.mxu0 %v1304
    %2072 = vmatpush.bf16.msra.mxu0 %v1296
    %2073 = vmatpush.bf16.msra.mxu0 %v1288
    %2074 = vmatpush.bf16.msra.mxu0 %v1280
    %2075 = vmatpush.bf16.msra.mxu0 %v1272
    %2076 = vmatpush.bf16.msra.mxu0 %v1264
    %2077 = vmatpush.bf16.msra.mxu0 %v1256
    %2078 = vmatmul.bf16.gmra.mxu0 %v2004
    %v2079 = vpop.f32.mrf.mxu0
    %v2080 = vadd.f32 %v2067, %v2079
    %v2081 = vpop.f32.mrf.mxu0
    %2082 = vdwg.mxu0
    %2083 = vmatpush.bf16.msra.mxu0 %v1249
    %2084 = vmatpush.bf16.msra.mxu0 %v1241
    %2085 = vmatpush.bf16.msra.mxu0 %v1233
    %2086 = vmatpush.bf16.msra.mxu0 %v1225
    %2087 = vmatpush.bf16.msra.mxu0 %v1217
    %2088 = vmatpush.bf16.msra.mxu0 %v1209
    %2089 = vmatpush.bf16.msra.mxu0 %v1201
    %2090 = vmatpush.bf16.msra.mxu0 %v1193
    %2091 = vmatmul.bf16.gmra.mxu0 %v2003
    %v2092 = vpop.f32.mrf.mxu0
    %v2093 = vadd.f32 0.0, %v2092
    %v2094 = vpop.f32.mrf.mxu0
    %2095 = vdwg.mxu0
    %2096 = vmatpush.bf16.msra.mxu0 %v1313
    %2097 = vmatpush.bf16.msra.mxu0 %v1305
    %2098 = vmatpush.bf16.msra.mxu0 %v1297
    %2099 = vmatpush.bf16.msra.mxu0 %v1289
    %2100 = vmatpush.bf16.msra.mxu0 %v1281
    %2101 = vmatpush.bf16.msra.mxu0 %v1273
    %2102 = vmatpush.bf16.msra.mxu0 %v1265
    %2103 = vmatpush.bf16.msra.mxu0 %v1257
    %2104 = vmatmul.bf16.gmra.mxu0 %v2004
    %v2105 = vpop.f32.mrf.mxu0
    %v2106 = vadd.f32 %v2093, %v2105
    %v2107 = vpop.f32.mrf.mxu0
    %2108 = vdwg.mxu0
    %2109 = vmatpush.bf16.msra.mxu0 %v1250
    %2110 = vmatpush.bf16.msra.mxu0 %v1242
    %2111 = vmatpush.bf16.msra.mxu0 %v1234
    %2112 = vmatpush.bf16.msra.mxu0 %v1226
    %2113 = vmatpush.bf16.msra.mxu0 %v1218
    %2114 = vmatpush.bf16.msra.mxu0 %v1210
    %2115 = vmatpush.bf16.msra.mxu0 %v1202
    %2116 = vmatpush.bf16.msra.mxu0 %v1194
    %2117 = vmatmul.bf16.gmra.mxu0 %v2003
    %v2118 = vpop.f32.mrf.mxu0
    %v2119 = vadd.f32 0.0, %v2118
    %v2120 = vpop.f32.mrf.mxu0
    %2121 = vdwg.mxu0
    %2122 = vmatpush.bf16.msra.mxu0 %v1314
    %2123 = vmatpush.bf16.msra.mxu0 %v1306
    %2124 = vmatpush.bf16.msra.mxu0 %v1298
    %2125 = vmatpush.bf16.msra.mxu0 %v1290
    %2126 = vmatpush.bf16.msra.mxu0 %v1282
    %2127 = vmatpush.bf16.msra.mxu0 %v1274
    %2128 = vmatpush.bf16.msra.mxu0 %v1266
    %2129 = vmatpush.bf16.msra.mxu0 %v1258
    %2130 = vmatmul.bf16.gmra.mxu0 %v2004
    %v2131 = vpop.f32.mrf.mxu0
    %v2132 = vadd.f32 %v2119, %v2131
    %v2133 = vpop.f32.mrf.mxu0
    %2134 = vdwg.mxu0
    %2135 = vmatpush.bf16.msra.mxu0 %v1251
    %2136 = vmatpush.bf16.msra.mxu0 %v1243
    %2137 = vmatpush.bf16.msra.mxu0 %v1235
    %2138 = vmatpush.bf16.msra.mxu0 %v1227
    %2139 = vmatpush.bf16.msra.mxu0 %v1219
    %2140 = vmatpush.bf16.msra.mxu0 %v1211
    %2141 = vmatpush.bf16.msra.mxu0 %v1203
    %2142 = vmatpush.bf16.msra.mxu0 %v1195
    %2143 = vmatmul.bf16.gmra.mxu0 %v2003
    %v2144 = vpop.f32.mrf.mxu0
    %v2145 = vadd.f32 0.0, %v2144
    %v2146 = vpop.f32.mrf.mxu0
    %2147 = vdwg.mxu0
    %2148 = vmatpush.bf16.msra.mxu0 %v1315
    %2149 = vmatpush.bf16.msra.mxu0 %v1307
    %2150 = vmatpush.bf16.msra.mxu0 %v1299
    %2151 = vmatpush.bf16.msra.mxu0 %v1291
    %2152 = vmatpush.bf16.msra.mxu0 %v1283
    %2153 = vmatpush.bf16.msra.mxu0 %v1275
    %2154 = vmatpush.bf16.msra.mxu0 %v1267
    %2155 = vmatpush.bf16.msra.mxu0 %v1259
    %2156 = vmatmul.bf16.gmra.mxu0 %v2004
    %v2157 = vpop.f32.mrf.mxu0
    %v2158 = vadd.f32 %v2145, %v2157
    %v2159 = vpop.f32.mrf.mxu0
    %2160 = vdwg.mxu0
    %2161 = vmatpush.bf16.msra.mxu0 %v1252
    %2162 = vmatpush.bf16.msra.mxu0 %v1244
    %2163 = vmatpush.bf16.msra.mxu0 %v1236
    %2164 = vmatpush.bf16.msra.mxu0 %v1228
    %2165 = vmatpush.bf16.msra.mxu0 %v1220
    %2166 = vmatpush.bf16.msra.mxu0 %v1212
    %2167 = vmatpush.bf16.msra.mxu0 %v1204
    %2168 = vmatpush.bf16.msra.mxu0 %v1196
    %2169 = vmatmul.bf16.gmra.mxu0 %v2003
    %v2170 = vpop.f32.mrf.mxu0
    %v2171 = vadd.f32 0.0, %v2170
    %v2172 = vpop.f32.mrf.mxu0
    %2173 = vdwg.mxu0
    %2174 = vmatpush.bf16.msra.mxu0 %v1316
    %2175 = vmatpush.bf16.msra.mxu0 %v1308
    %2176 = vmatpush.bf16.msra.mxu0 %v1300
    %2177 = vmatpush.bf16.msra.mxu0 %v1292
    %2178 = vmatpush.bf16.msra.mxu0 %v1284
    %2179 = vmatpush.bf16.msra.mxu0 %v1276
    %2180 = vmatpush.bf16.msra.mxu0 %v1268
    %2181 = vmatpush.bf16.msra.mxu0 %v1260
    %2182 = vmatmul.bf16.gmra.mxu0 %v2004
    %v2183 = vpop.f32.mrf.mxu0
    %v2184 = vadd.f32 %v2171, %v2183
    %v2185 = vpop.f32.mrf.mxu0
    %2186 = vdwg.mxu0
    %2187 = vmatpush.bf16.msra.mxu0 %v1253
    %2188 = vmatpush.bf16.msra.mxu0 %v1245
    %2189 = vmatpush.bf16.msra.mxu0 %v1237
    %2190 = vmatpush.bf16.msra.mxu0 %v1229
    %2191 = vmatpush.bf16.msra.mxu0 %v1221
    %2192 = vmatpush.bf16.msra.mxu0 %v1213
    %2193 = vmatpush.bf16.msra.mxu0 %v1205
    %2194 = vmatpush.bf16.msra.mxu0 %v1197
    %2195 = vmatmul.bf16.gmra.mxu0 %v2003
    %v2196 = vpop.f32.mrf.mxu0
    %v2197 = vadd.f32 0.0, %v2196
    %v2198 = vpop.f32.mrf.mxu0
    %2199 = vdwg.mxu0
    %2200 = vmatpush.bf16.msra.mxu0 %v1317
    %2201 = vmatpush.bf16.msra.mxu0 %v1309
    %2202 = vmatpush.bf16.msra.mxu0 %v1301
    %2203 = vmatpush.bf16.msra.mxu0 %v1293
    %2204 = vmatpush.bf16.msra.mxu0 %v1285
    %2205 = vmatpush.bf16.msra.mxu0 %v1277
    %2206 = vmatpush.bf16.msra.mxu0 %v1269
    %2207 = vmatpush.bf16.msra.mxu0 %v1261
    %2208 = vmatmul.bf16.gmra.mxu0 %v2004
    %v2209 = vpop.f32.mrf.mxu0
    %v2210 = vadd.f32 %v2197, %v2209
    %v2211 = vpop.f32.mrf.mxu0
    %2212 = vdwg.mxu0
    %v2221 = vrot.slane %v2054, 7
    %v2222 = vrot.slane %v2080, 6
    %v2223 = vrot.slane %v2106, 5
    %v2224 = vrot.slane %v2132, 4
    %v2225 = vrot.slane %v2158, 3
    %v2226 = vrot.slane %v2184, 2
    %v2227 = vrot.slane %v2210, 1
    %v2228 = vsel %vm1669, %v2028, %v2221
    %v2229 = vsel %vm1671, %v2222, %v2223
    %v2230 = vsel %vm1673, %v2228, %v2229
    %v2231 = vsel %vm1675, %v2224, %v2225
    %v2232 = vsel %vm1677, %v2226, %v2227
    %v2233 = vsel %vm1679, %v2231, %v2232
    %v2234 = vsel %vm1681, %v2230, %v2233
    %v2236 = vadd.f32 %v1997, %v2234
    %v2237 = vxor.u32 %v2236, 2147483648
    %v2238 = vmul.f32 %v2237, 1.442695
    %v2239 = vpow.pop %v2238
    %v2240 = vadd.f32 %v2239, 1.0
    %v2241 = vrcp.pop %v2240
    %v2242 = vmul.f32 %v2240, %v2241
    %v2243 = vsub.f32 1.0, %v2242
    %v2244 = vmul.f32 %v2241, %v2243
    %v2245 = vadd.f32 %v2241, %v2244
    %vm2246 = vweird.f32 %v2240
    %vm2247 = vweird.f32 %v2241
    %vm2248 = vmor %vm2246, %vm2247
    %v2249 = vsel %vm2248, %v2241, %v2245
    %v2250 = vand.u32 2147483647, %v2240
    %vm2251 = vcmp.eq.f32.partialorder %v2250, 8.507059e+37
    %v2252 = vand.u32 %v2240, 2147483648
    %v2253 = vor.u32 1.1754944e-38, %v2252
    %v2254 = vsel %vm2251, %v2253, %v2249
    %v2255 = vmul.f32 1.0, %v2254
    %v2257 = vrot.slane %v2236, 6
    %v2259 = vtanh.pop %v2257
    %v2261 = vrot.slane %v2255, 2
    %v2263 = vmul.f32 %v2261, %v1989
    %v2264 = vmul.f32 %v2255, %v2259
    %v2265 = vadd.f32 %v2263, %v2264
    %v2266 = vtanh.pop %v2265
    %v2267 = vrot.slane %v2255, 4
    %v2269 = vmul.f32 %v2267, %v2266
    %s2270 = scalar_lea.vmem [#allocation2], 4
    %v2271 = vld [vmem:[%s2270] ss:$8 sm:$0xf]
    %v2272 = vld [vmem:[%s2270] ss:$8 sm:$0xf0]
    %v2273 = vor.u32 %v2271, %v2272
    %v2275 = vperm.slane %v2269, 0
    %v2276 = vperm.slane %v2269, 1
    %v2279 = vpack.c.bf16 %v2275, %v2275
    %v2280 = vpack.c.bf16 %v2276, %v2276
    %2281 = vmatpush.bf16.msra.mxu0 %v1246
    %2282 = vmatpush.bf16.msra.mxu0 %v1238
    %2283 = vmatpush.bf16.msra.mxu0 %v1230
    %2284 = vmatpush.bf16.msra.mxu0 %v1222
    %2285 = vmatpush.bf16.msra.mxu0 %v1214
    %2286 = vmatpush.bf16.msra.mxu0 %v1206
    %2287 = vmatpush.bf16.msra.mxu0 %v1198
    %2288 = vmatpush.bf16.msra.mxu0 %v1190
    %2289 = vmatmul.bf16.gmra.mxu0 %v2279
    %v2290 = vpop.f32.mrf.mxu0
    %v2291 = vadd.f32 0.0, %v2290
    %v2292 = vpop.f32.mrf.mxu0
    %2293 = vdwg.mxu0
    %2294 = vmatpush.bf16.msra.mxu0 %v1310
    %2295 = vmatpush.bf16.msra.mxu0 %v1302
    %2296 = vmatpush.bf16.msra.mxu0 %v1294
    %2297 = vmatpush.bf16.msra.mxu0 %v1286
    %2298 = vmatpush.bf16.msra.mxu0 %v1278
    %2299 = vmatpush.bf16.msra.mxu0 %v1270
    %2300 = vmatpush.bf16.msra.mxu0 %v1262
    %2301 = vmatpush.bf16.msra.mxu0 %v1254
    %2302 = vmatmul.bf16.gmra.mxu0 %v2280
    %v2303 = vpop.f32.mrf.mxu0
    %v2304 = vadd.f32 %v2291, %v2303
    %v2305 = vpop.f32.mrf.mxu0
    %2306 = vdwg.mxu0
    %2307 = vmatpush.bf16.msra.mxu0 %v1247
    %2308 = vmatpush.bf16.msra.mxu0 %v1239
    %2309 = vmatpush.bf16.msra.mxu0 %v1231
    %2310 = vmatpush.bf16.msra.mxu0 %v1223
    %2311 = vmatpush.bf16.msra.mxu0 %v1215
    %2312 = vmatpush.bf16.msra.mxu0 %v1207
    %2313 = vmatpush.bf16.msra.mxu0 %v1199
    %2314 = vmatpush.bf16.msra.mxu0 %v1191
    %2315 = vmatmul.bf16.gmra.mxu0 %v2279
    %v2316 = vpop.f32.mrf.mxu0
    %v2317 = vadd.f32 0.0, %v2316
    %v2318 = vpop.f32.mrf.mxu0
    %2319 = vdwg.mxu0
    %2320 = vmatpush.bf16.msra.mxu0 %v1311
    %2321 = vmatpush.bf16.msra.mxu0 %v1303
    %2322 = vmatpush.bf16.msra.mxu0 %v1295
    %2323 = vmatpush.bf16.msra.mxu0 %v1287
    %2324 = vmatpush.bf16.msra.mxu0 %v1279
    %2325 = vmatpush.bf16.msra.mxu0 %v1271
    %2326 = vmatpush.bf16.msra.mxu0 %v1263
    %2327 = vmatpush.bf16.msra.mxu0 %v1255
    %2328 = vmatmul.bf16.gmra.mxu0 %v2280
    %v2329 = vpop.f32.mrf.mxu0
    %v2330 = vadd.f32 %v2317, %v2329
    %v2331 = vpop.f32.mrf.mxu0
    %2332 = vdwg.mxu0
    %2333 = vmatpush.bf16.msra.mxu0 %v1248
    %2334 = vmatpush.bf16.msra.mxu0 %v1240
    %2335 = vmatpush.bf16.msra.mxu0 %v1232
    %2336 = vmatpush.bf16.msra.mxu0 %v1224
    %2337 = vmatpush.bf16.msra.mxu0 %v1216
    %2338 = vmatpush.bf16.msra.mxu0 %v1208
    %2339 = vmatpush.bf16.msra.mxu0 %v1200
    %2340 = vmatpush.bf16.msra.mxu0 %v1192
    %2341 = vmatmul.bf16.gmra.mxu0 %v2279
    %v2342 = vpop.f32.mrf.mxu0
    %v2343 = vadd.f32 0.0, %v2342
    %v2344 = vpop.f32.mrf.mxu0
    %2345 = vdwg.mxu0
    %2346 = vmatpush.bf16.msra.mxu0 %v1312
    %2347 = vmatpush.bf16.msra.mxu0 %v1304
    %2348 = vmatpush.bf16.msra.mxu0 %v1296
    %2349 = vmatpush.bf16.msra.mxu0 %v1288
    %2350 = vmatpush.bf16.msra.mxu0 %v1280
    %2351 = vmatpush.bf16.msra.mxu0 %v1272
    %2352 = vmatpush.bf16.msra.mxu0 %v1264
    %2353 = vmatpush.bf16.msra.mxu0 %v1256
    %2354 = vmatmul.bf16.gmra.mxu0 %v2280
    %v2355 = vpop.f32.mrf.mxu0
    %v2356 = vadd.f32 %v2343, %v2355
    %v2357 = vpop.f32.mrf.mxu0
    %2358 = vdwg.mxu0
    %2359 = vmatpush.bf16.msra.mxu0 %v1249
    %2360 = vmatpush.bf16.msra.mxu0 %v1241
    %2361 = vmatpush.bf16.msra.mxu0 %v1233
    %2362 = vmatpush.bf16.msra.mxu0 %v1225
    %2363 = vmatpush.bf16.msra.mxu0 %v1217
    %2364 = vmatpush.bf16.msra.mxu0 %v1209
    %2365 = vmatpush.bf16.msra.mxu0 %v1201
    %2366 = vmatpush.bf16.msra.mxu0 %v1193
    %2367 = vmatmul.bf16.gmra.mxu0 %v2279
    %v2368 = vpop.f32.mrf.mxu0
    %v2369 = vadd.f32 0.0, %v2368
    %v2370 = vpop.f32.mrf.mxu0
    %2371 = vdwg.mxu0
    %2372 = vmatpush.bf16.msra.mxu0 %v1313
    %2373 = vmatpush.bf16.msra.mxu0 %v1305
    %2374 = vmatpush.bf16.msra.mxu0 %v1297
    %2375 = vmatpush.bf16.msra.mxu0 %v1289
    %2376 = vmatpush.bf16.msra.mxu0 %v1281
    %2377 = vmatpush.bf16.msra.mxu0 %v1273
    %2378 = vmatpush.bf16.msra.mxu0 %v1265
    %2379 = vmatpush.bf16.msra.mxu0 %v1257
    %2380 = vmatmul.bf16.gmra.mxu0 %v2280
    %v2381 = vpop.f32.mrf.mxu0
    %v2382 = vadd.f32 %v2369, %v2381
    %v2383 = vpop.f32.mrf.mxu0
    %2384 = vdwg.mxu0
    %2385 = vmatpush.bf16.msra.mxu0 %v1250
    %2386 = vmatpush.bf16.msra.mxu0 %v1242
    %2387 = vmatpush.bf16.msra.mxu0 %v1234
    %2388 = vmatpush.bf16.msra.mxu0 %v1226
    %2389 = vmatpush.bf16.msra.mxu0 %v1218
    %2390 = vmatpush.bf16.msra.mxu0 %v1210
    %2391 = vmatpush.bf16.msra.mxu0 %v1202
    %2392 = vmatpush.bf16.msra.mxu0 %v1194
    %2393 = vmatmul.bf16.gmra.mxu0 %v2279
    %v2394 = vpop.f32.mrf.mxu0
    %v2395 = vadd.f32 0.0, %v2394
    %v2396 = vpop.f32.mrf.mxu0
    %2397 = vdwg.mxu0
    %2398 = vmatpush.bf16.msra.mxu0 %v1314
    %2399 = vmatpush.bf16.msra.mxu0 %v1306
    %2400 = vmatpush.bf16.msra.mxu0 %v1298
    %2401 = vmatpush.bf16.msra.mxu0 %v1290
    %2402 = vmatpush.bf16.msra.mxu0 %v1282
    %2403 = vmatpush.bf16.msra.mxu0 %v1274
    %2404 = vmatpush.bf16.msra.mxu0 %v1266
    %2405 = vmatpush.bf16.msra.mxu0 %v1258
    %2406 = vmatmul.bf16.gmra.mxu0 %v2280
    %v2407 = vpop.f32.mrf.mxu0
    %v2408 = vadd.f32 %v2395, %v2407
    %v2409 = vpop.f32.mrf.mxu0
    %2410 = vdwg.mxu0
    %2411 = vmatpush.bf16.msra.mxu0 %v1251
    %2412 = vmatpush.bf16.msra.mxu0 %v1243
    %2413 = vmatpush.bf16.msra.mxu0 %v1235
    %2414 = vmatpush.bf16.msra.mxu0 %v1227
    %2415 = vmatpush.bf16.msra.mxu0 %v1219
    %2416 = vmatpush.bf16.msra.mxu0 %v1211
    %2417 = vmatpush.bf16.msra.mxu0 %v1203
    %2418 = vmatpush.bf16.msra.mxu0 %v1195
    %2419 = vmatmul.bf16.gmra.mxu0 %v2279
    %v2420 = vpop.f32.mrf.mxu0
    %v2421 = vadd.f32 0.0, %v2420
    %v2422 = vpop.f32.mrf.mxu0
    %2423 = vdwg.mxu0
    %2424 = vmatpush.bf16.msra.mxu0 %v1315
    %2425 = vmatpush.bf16.msra.mxu0 %v1307
    %2426 = vmatpush.bf16.msra.mxu0 %v1299
    %2427 = vmatpush.bf16.msra.mxu0 %v1291
    %2428 = vmatpush.bf16.msra.mxu0 %v1283
    %2429 = vmatpush.bf16.msra.mxu0 %v1275
    %2430 = vmatpush.bf16.msra.mxu0 %v1267
    %2431 = vmatpush.bf16.msra.mxu0 %v1259
    %2432 = vmatmul.bf16.gmra.mxu0 %v2280
    %v2433 = vpop.f32.mrf.mxu0
    %v2434 = vadd.f32 %v2421, %v2433
    %v2435 = vpop.f32.mrf.mxu0
    %2436 = vdwg.mxu0
    %2437 = vmatpush.bf16.msra.mxu0 %v1252
    %2438 = vmatpush.bf16.msra.mxu0 %v1244
    %2439 = vmatpush.bf16.msra.mxu0 %v1236
    %2440 = vmatpush.bf16.msra.mxu0 %v1228
    %2441 = vmatpush.bf16.msra.mxu0 %v1220
    %2442 = vmatpush.bf16.msra.mxu0 %v1212
    %2443 = vmatpush.bf16.msra.mxu0 %v1204
    %2444 = vmatpush.bf16.msra.mxu0 %v1196
    %2445 = vmatmul.bf16.gmra.mxu0 %v2279
    %v2446 = vpop.f32.mrf.mxu0
    %v2447 = vadd.f32 0.0, %v2446
    %v2448 = vpop.f32.mrf.mxu0
    %2449 = vdwg.mxu0
    %2450 = vmatpush.bf16.msra.mxu0 %v1316
    %2451 = vmatpush.bf16.msra.mxu0 %v1308
    %2452 = vmatpush.bf16.msra.mxu0 %v1300
    %2453 = vmatpush.bf16.msra.mxu0 %v1292
    %2454 = vmatpush.bf16.msra.mxu0 %v1284
    %2455 = vmatpush.bf16.msra.mxu0 %v1276
    %2456 = vmatpush.bf16.msra.mxu0 %v1268
    %2457 = vmatpush.bf16.msra.mxu0 %v1260
    %2458 = vmatmul.bf16.gmra.mxu0 %v2280
    %v2459 = vpop.f32.mrf.mxu0
    %v2460 = vadd.f32 %v2447, %v2459
    %v2461 = vpop.f32.mrf.mxu0
    %2462 = vdwg.mxu0
    %2463 = vmatpush.bf16.msra.mxu0 %v1253
    %2464 = vmatpush.bf16.msra.mxu0 %v1245
    %2465 = vmatpush.bf16.msra.mxu0 %v1237
    %2466 = vmatpush.bf16.msra.mxu0 %v1229
    %2467 = vmatpush.bf16.msra.mxu0 %v1221
    %2468 = vmatpush.bf16.msra.mxu0 %v1213
    %2469 = vmatpush.bf16.msra.mxu0 %v1205
    %2470 = vmatpush.bf16.msra.mxu0 %v1197
    %2471 = vmatmul.bf16.gmra.mxu0 %v2279
    %v2472 = vpop.f32.mrf.mxu0
    %v2473 = vadd.f32 0.0, %v2472
    %v2474 = vpop.f32.mrf.mxu0
    %2475 = vdwg.mxu0
    %2476 = vmatpush.bf16.msra.mxu0 %v1317
    %2477 = vmatpush.bf16.msra.mxu0 %v1309
    %2478 = vmatpush.bf16.msra.mxu0 %v1301
    %2479 = vmatpush.bf16.msra.mxu0 %v1293
    %2480 = vmatpush.bf16.msra.mxu0 %v1285
    %2481 = vmatpush.bf16.msra.mxu0 %v1277
    %2482 = vmatpush.bf16.msra.mxu0 %v1269
    %2483 = vmatpush.bf16.msra.mxu0 %v1261
    %2484 = vmatmul.bf16.gmra.mxu0 %v2280
    %v2485 = vpop.f32.mrf.mxu0
    %v2486 = vadd.f32 %v2473, %v2485
    %v2487 = vpop.f32.mrf.mxu0
    %2488 = vdwg.mxu0
    %v2497 = vrot.slane %v2330, 7
    %v2498 = vrot.slane %v2356, 6
    %v2499 = vrot.slane %v2382, 5
    %v2500 = vrot.slane %v2408, 4
    %v2501 = vrot.slane %v2434, 3
    %v2502 = vrot.slane %v2460, 2
    %v2503 = vrot.slane %v2486, 1
    %v2504 = vsel %vm1669, %v2304, %v2497
    %v2505 = vsel %vm1671, %v2498, %v2499
    %v2506 = vsel %vm1673, %v2504, %v2505
    %v2507 = vsel %vm1675, %v2500, %v2501
    %v2508 = vsel %vm1677, %v2502, %v2503
    %v2509 = vsel %vm1679, %v2507, %v2508
    %v2510 = vsel %vm1681, %v2506, %v2509
    %v2512 = vadd.f32 %v2273, %v2510
    %v2513 = vxor.u32 %v2512, 2147483648
    %v2514 = vmul.f32 %v2513, 1.442695
    %v2515 = vpow.pop %v2514
    %v2516 = vadd.f32 %v2515, 1.0
    %v2517 = vrcp.pop %v2516
    %v2518 = vmul.f32 %v2516, %v2517
    %v2519 = vsub.f32 1.0, %v2518
    %v2520 = vmul.f32 %v2517, %v2519
    %v2521 = vadd.f32 %v2517, %v2520
    %vm2522 = vweird.f32 %v2516
    %vm2523 = vweird.f32 %v2517
    %vm2524 = vmor %vm2522, %vm2523
    %v2525 = vsel %vm2524, %v2517, %v2521
    %v2526 = vand.u32 2147483647, %v2516
    %vm2527 = vcmp.eq.f32.partialorder %v2526, 8.507059e+37
    %v2528 = vand.u32 %v2516, 2147483648
    %v2529 = vor.u32 1.1754944e-38, %v2528
    %v2530 = vsel %vm2527, %v2529, %v2525
    %v2531 = vmul.f32 1.0, %v2530
    %v2533 = vrot.slane %v2512, 6
    %v2535 = vtanh.pop %v2533
    %v2537 = vrot.slane %v2531, 2
    %v2539 = vmul.f32 %v2537, %v2265
    %v2540 = vmul.f32 %v2531, %v2535
    %v2541 = vadd.f32 %v2539, %v2540
    %v2542 = vtanh.pop %v2541
    %v2543 = vrot.slane %v2531, 4
    %v2545 = vmul.f32 %v2543, %v2542
    %s2546 = scalar_lea.vmem [#allocation2], 5
    %v2547 = vld [vmem:[%s2546] ss:$8 sm:$0xf]
    %v2548 = vld [vmem:[%s2546] ss:$8 sm:$0xf0]
    %v2549 = vor.u32 %v2547, %v2548
    %v2551 = vperm.slane %v2545, 0
    %v2552 = vperm.slane %v2545, 1
    %v2555 = vpack.c.bf16 %v2551, %v2551
    %v2556 = vpack.c.bf16 %v2552, %v2552
    %2557 = vmatpush.bf16.msra.mxu0 %v1246
    %2558 = vmatpush.bf16.msra.mxu0 %v1238
    %2559 = vmatpush.bf16.msra.mxu0 %v1230
    %2560 = vmatpush.bf16.msra.mxu0 %v1222
    %2561 = vmatpush.bf16.msra.mxu0 %v1214
    %2562 = vmatpush.bf16.msra.mxu0 %v1206
    %2563 = vmatpush.bf16.msra.mxu0 %v1198
    %2564 = vmatpush.bf16.msra.mxu0 %v1190
    %2565 = vmatmul.bf16.gmra.mxu0 %v2555
    %v2566 = vpop.f32.mrf.mxu0
    %v2567 = vadd.f32 0.0, %v2566
    %v2568 = vpop.f32.mrf.mxu0
    %2569 = vdwg.mxu0
    %2570 = vmatpush.bf16.msra.mxu0 %v1310
    %2571 = vmatpush.bf16.msra.mxu0 %v1302
    %2572 = vmatpush.bf16.msra.mxu0 %v1294
    %2573 = vmatpush.bf16.msra.mxu0 %v1286
    %2574 = vmatpush.bf16.msra.mxu0 %v1278
    %2575 = vmatpush.bf16.msra.mxu0 %v1270
    %2576 = vmatpush.bf16.msra.mxu0 %v1262
    %2577 = vmatpush.bf16.msra.mxu0 %v1254
    %2578 = vmatmul.bf16.gmra.mxu0 %v2556
    %v2579 = vpop.f32.mrf.mxu0
    %v2580 = vadd.f32 %v2567, %v2579
    %v2581 = vpop.f32.mrf.mxu0
    %2582 = vdwg.mxu0
    %2583 = vmatpush.bf16.msra.mxu0 %v1247
    %2584 = vmatpush.bf16.msra.mxu0 %v1239
    %2585 = vmatpush.bf16.msra.mxu0 %v1231
    %2586 = vmatpush.bf16.msra.mxu0 %v1223
    %2587 = vmatpush.bf16.msra.mxu0 %v1215
    %2588 = vmatpush.bf16.msra.mxu0 %v1207
    %2589 = vmatpush.bf16.msra.mxu0 %v1199
    %2590 = vmatpush.bf16.msra.mxu0 %v1191
    %2591 = vmatmul.bf16.gmra.mxu0 %v2555
    %v2592 = vpop.f32.mrf.mxu0
    %v2593 = vadd.f32 0.0, %v2592
    %v2594 = vpop.f32.mrf.mxu0
    %2595 = vdwg.mxu0
    %2596 = vmatpush.bf16.msra.mxu0 %v1311
    %2597 = vmatpush.bf16.msra.mxu0 %v1303
    %2598 = vmatpush.bf16.msra.mxu0 %v1295
    %2599 = vmatpush.bf16.msra.mxu0 %v1287
    %2600 = vmatpush.bf16.msra.mxu0 %v1279
    %2601 = vmatpush.bf16.msra.mxu0 %v1271
    %2602 = vmatpush.bf16.msra.mxu0 %v1263
    %2603 = vmatpush.bf16.msra.mxu0 %v1255
    %2604 = vmatmul.bf16.gmra.mxu0 %v2556
    %v2605 = vpop.f32.mrf.mxu0
    %v2606 = vadd.f32 %v2593, %v2605
    %v2607 = vpop.f32.mrf.mxu0
    %2608 = vdwg.mxu0
    %2609 = vmatpush.bf16.msra.mxu0 %v1248
    %2610 = vmatpush.bf16.msra.mxu0 %v1240
    %2611 = vmatpush.bf16.msra.mxu0 %v1232
    %2612 = vmatpush.bf16.msra.mxu0 %v1224
    %2613 = vmatpush.bf16.msra.mxu0 %v1216
    %2614 = vmatpush.bf16.msra.mxu0 %v1208
    %2615 = vmatpush.bf16.msra.mxu0 %v1200
    %2616 = vmatpush.bf16.msra.mxu0 %v1192
    %2617 = vmatmul.bf16.gmra.mxu0 %v2555
    %v2618 = vpop.f32.mrf.mxu0
    %v2619 = vadd.f32 0.0, %v2618
    %v2620 = vpop.f32.mrf.mxu0
    %2621 = vdwg.mxu0
    %2622 = vmatpush.bf16.msra.mxu0 %v1312
    %2623 = vmatpush.bf16.msra.mxu0 %v1304
    %2624 = vmatpush.bf16.msra.mxu0 %v1296
    %2625 = vmatpush.bf16.msra.mxu0 %v1288
    %2626 = vmatpush.bf16.msra.mxu0 %v1280
    %2627 = vmatpush.bf16.msra.mxu0 %v1272
    %2628 = vmatpush.bf16.msra.mxu0 %v1264
    %2629 = vmatpush.bf16.msra.mxu0 %v1256
    %2630 = vmatmul.bf16.gmra.mxu0 %v2556
    %v2631 = vpop.f32.mrf.mxu0
    %v2632 = vadd.f32 %v2619, %v2631
    %v2633 = vpop.f32.mrf.mxu0
    %2634 = vdwg.mxu0
    %2635 = vmatpush.bf16.msra.mxu0 %v1249
    %2636 = vmatpush.bf16.msra.mxu0 %v1241
    %2637 = vmatpush.bf16.msra.mxu0 %v1233
    %2638 = vmatpush.bf16.msra.mxu0 %v1225
    %2639 = vmatpush.bf16.msra.mxu0 %v1217
    %2640 = vmatpush.bf16.msra.mxu0 %v1209
    %2641 = vmatpush.bf16.msra.mxu0 %v1201
    %2642 = vmatpush.bf16.msra.mxu0 %v1193
    %2643 = vmatmul.bf16.gmra.mxu0 %v2555
    %v2644 = vpop.f32.mrf.mxu0
    %v2645 = vadd.f32 0.0, %v2644
    %v2646 = vpop.f32.mrf.mxu0
    %2647 = vdwg.mxu0
    %2648 = vmatpush.bf16.msra.mxu0 %v1313
    %2649 = vmatpush.bf16.msra.mxu0 %v1305
    %2650 = vmatpush.bf16.msra.mxu0 %v1297
    %2651 = vmatpush.bf16.msra.mxu0 %v1289
    %2652 = vmatpush.bf16.msra.mxu0 %v1281
    %2653 = vmatpush.bf16.msra.mxu0 %v1273
    %2654 = vmatpush.bf16.msra.mxu0 %v1265
    %2655 = vmatpush.bf16.msra.mxu0 %v1257
    %2656 = vmatmul.bf16.gmra.mxu0 %v2556
    %v2657 = vpop.f32.mrf.mxu0
    %v2658 = vadd.f32 %v2645, %v2657
    %v2659 = vpop.f32.mrf.mxu0
    %2660 = vdwg.mxu0
    %2661 = vmatpush.bf16.msra.mxu0 %v1250
    %2662 = vmatpush.bf16.msra.mxu0 %v1242
    %2663 = vmatpush.bf16.msra.mxu0 %v1234
    %2664 = vmatpush.bf16.msra.mxu0 %v1226
    %2665 = vmatpush.bf16.msra.mxu0 %v1218
    %2666 = vmatpush.bf16.msra.mxu0 %v1210
    %2667 = vmatpush.bf16.msra.mxu0 %v1202
    %2668 = vmatpush.bf16.msra.mxu0 %v1194
    %2669 = vmatmul.bf16.gmra.mxu0 %v2555
    %v2670 = vpop.f32.mrf.mxu0
    %v2671 = vadd.f32 0.0, %v2670
    %v2672 = vpop.f32.mrf.mxu0
    %2673 = vdwg.mxu0
    %2674 = vmatpush.bf16.msra.mxu0 %v1314
    %2675 = vmatpush.bf16.msra.mxu0 %v1306
    %2676 = vmatpush.bf16.msra.mxu0 %v1298
    %2677 = vmatpush.bf16.msra.mxu0 %v1290
    %2678 = vmatpush.bf16.msra.mxu0 %v1282
    %2679 = vmatpush.bf16.msra.mxu0 %v1274
    %2680 = vmatpush.bf16.msra.mxu0 %v1266
    %2681 = vmatpush.bf16.msra.mxu0 %v1258
    %2682 = vmatmul.bf16.gmra.mxu0 %v2556
    %v2683 = vpop.f32.mrf.mxu0
    %v2684 = vadd.f32 %v2671, %v2683
    %v2685 = vpop.f32.mrf.mxu0
    %2686 = vdwg.mxu0
    %2687 = vmatpush.bf16.msra.mxu0 %v1251
    %2688 = vmatpush.bf16.msra.mxu0 %v1243
    %2689 = vmatpush.bf16.msra.mxu0 %v1235
    %2690 = vmatpush.bf16.msra.mxu0 %v1227
    %2691 = vmatpush.bf16.msra.mxu0 %v1219
    %2692 = vmatpush.bf16.msra.mxu0 %v1211
    %2693 = vmatpush.bf16.msra.mxu0 %v1203
    %2694 = vmatpush.bf16.msra.mxu0 %v1195
    %2695 = vmatmul.bf16.gmra.mxu0 %v2555
    %v2696 = vpop.f32.mrf.mxu0
    %v2697 = vadd.f32 0.0, %v2696
    %v2698 = vpop.f32.mrf.mxu0
    %2699 = vdwg.mxu0
    %2700 = vmatpush.bf16.msra.mxu0 %v1315
    %2701 = vmatpush.bf16.msra.mxu0 %v1307
    %2702 = vmatpush.bf16.msra.mxu0 %v1299
    %2703 = vmatpush.bf16.msra.mxu0 %v1291
    %2704 = vmatpush.bf16.msra.mxu0 %v1283
    %2705 = vmatpush.bf16.msra.mxu0 %v1275
    %2706 = vmatpush.bf16.msra.mxu0 %v1267
    %2707 = vmatpush.bf16.msra.mxu0 %v1259
    %2708 = vmatmul.bf16.gmra.mxu0 %v2556
    %v2709 = vpop.f32.mrf.mxu0
    %v2710 = vadd.f32 %v2697, %v2709
    %v2711 = vpop.f32.mrf.mxu0
    %2712 = vdwg.mxu0
    %2713 = vmatpush.bf16.msra.mxu0 %v1252
    %2714 = vmatpush.bf16.msra.mxu0 %v1244
    %2715 = vmatpush.bf16.msra.mxu0 %v1236
    %2716 = vmatpush.bf16.msra.mxu0 %v1228
    %2717 = vmatpush.bf16.msra.mxu0 %v1220
    %2718 = vmatpush.bf16.msra.mxu0 %v1212
    %2719 = vmatpush.bf16.msra.mxu0 %v1204
    %2720 = vmatpush.bf16.msra.mxu0 %v1196
    %2721 = vmatmul.bf16.gmra.mxu0 %v2555
    %v2722 = vpop.f32.mrf.mxu0
    %v2723 = vadd.f32 0.0, %v2722
    %v2724 = vpop.f32.mrf.mxu0
    %2725 = vdwg.mxu0
    %2726 = vmatpush.bf16.msra.mxu0 %v1316
    %2727 = vmatpush.bf16.msra.mxu0 %v1308
    %2728 = vmatpush.bf16.msra.mxu0 %v1300
    %2729 = vmatpush.bf16.msra.mxu0 %v1292
    %2730 = vmatpush.bf16.msra.mxu0 %v1284
    %2731 = vmatpush.bf16.msra.mxu0 %v1276
    %2732 = vmatpush.bf16.msra.mxu0 %v1268
    %2733 = vmatpush.bf16.msra.mxu0 %v1260
    %2734 = vmatmul.bf16.gmra.mxu0 %v2556
    %v2735 = vpop.f32.mrf.mxu0
    %v2736 = vadd.f32 %v2723, %v2735
    %v2737 = vpop.f32.mrf.mxu0
    %2738 = vdwg.mxu0
    %2739 = vmatpush.bf16.msra.mxu0 %v1253
    %2740 = vmatpush.bf16.msra.mxu0 %v1245
    %2741 = vmatpush.bf16.msra.mxu0 %v1237
    %2742 = vmatpush.bf16.msra.mxu0 %v1229
    %2743 = vmatpush.bf16.msra.mxu0 %v1221
    %2744 = vmatpush.bf16.msra.mxu0 %v1213
    %2745 = vmatpush.bf16.msra.mxu0 %v1205
    %2746 = vmatpush.bf16.msra.mxu0 %v1197
    %2747 = vmatmul.bf16.gmra.mxu0 %v2555
    %v2748 = vpop.f32.mrf.mxu0
    %v2749 = vadd.f32 0.0, %v2748
    %v2750 = vpop.f32.mrf.mxu0
    %2751 = vdwg.mxu0
    %2752 = vmatpush.bf16.msra.mxu0 %v1317
    %2753 = vmatpush.bf16.msra.mxu0 %v1309
    %2754 = vmatpush.bf16.msra.mxu0 %v1301
    %2755 = vmatpush.bf16.msra.mxu0 %v1293
    %2756 = vmatpush.bf16.msra.mxu0 %v1285
    %2757 = vmatpush.bf16.msra.mxu0 %v1277
    %2758 = vmatpush.bf16.msra.mxu0 %v1269
    %2759 = vmatpush.bf16.msra.mxu0 %v1261
    %2760 = vmatmul.bf16.gmra.mxu0 %v2556
    %v2761 = vpop.f32.mrf.mxu0
    %v2762 = vadd.f32 %v2749, %v2761
    %v2763 = vpop.f32.mrf.mxu0
    %2764 = vdwg.mxu0
    %v2773 = vrot.slane %v2606, 7
    %v2774 = vrot.slane %v2632, 6
    %v2775 = vrot.slane %v2658, 5
    %v2776 = vrot.slane %v2684, 4
    %v2777 = vrot.slane %v2710, 3
    %v2778 = vrot.slane %v2736, 2
    %v2779 = vrot.slane %v2762, 1
    %v2780 = vsel %vm1669, %v2580, %v2773
    %v2781 = vsel %vm1671, %v2774, %v2775
    %v2782 = vsel %vm1673, %v2780, %v2781
    %v2783 = vsel %vm1675, %v2776, %v2777
    %v2784 = vsel %vm1677, %v2778, %v2779
    %v2785 = vsel %vm1679, %v2783, %v2784
    %v2786 = vsel %vm1681, %v2782, %v2785
    %v2788 = vadd.f32 %v2549, %v2786
    %v2789 = vxor.u32 %v2788, 2147483648
    %v2790 = vmul.f32 %v2789, 1.442695
    %v2791 = vpow.pop %v2790
    %v2792 = vadd.f32 %v2791, 1.0
    %v2793 = vrcp.pop %v2792
    %v2794 = vmul.f32 %v2792, %v2793
    %v2795 = vsub.f32 1.0, %v2794
    %v2796 = vmul.f32 %v2793, %v2795
    %v2797 = vadd.f32 %v2793, %v2796
    %vm2798 = vweird.f32 %v2792
    %vm2799 = vweird.f32 %v2793
    %vm2800 = vmor %vm2798, %vm2799
    %v2801 = vsel %vm2800, %v2793, %v2797
    %v2802 = vand.u32 2147483647, %v2792
    %vm2803 = vcmp.eq.f32.partialorder %v2802, 8.507059e+37
    %v2804 = vand.u32 %v2792, 2147483648
    %v2805 = vor.u32 1.1754944e-38, %v2804
    %v2806 = vsel %vm2803, %v2805, %v2801
    %v2807 = vmul.f32 1.0, %v2806
    %v2809 = vrot.slane %v2788, 6
    %v2811 = vtanh.pop %v2809
    %v2813 = vrot.slane %v2807, 2
    %v2815 = vmul.f32 %v2813, %v2541
    %v2816 = vmul.f32 %v2807, %v2811
    %v2817 = vadd.f32 %v2815, %v2816
    %v2818 = vtanh.pop %v2817
    %v2819 = vrot.slane %v2807, 4
    %v2821 = vmul.f32 %v2819, %v2818
    %s2822 = scalar_lea.vmem [#allocation2], 6
    %v2823 = vld [vmem:[%s2822] ss:$8 sm:$0xf]
    %v2824 = vld [vmem:[%s2822] ss:$8 sm:$0xf0]
    %v2825 = vor.u32 %v2823, %v2824
    %v2827 = vperm.slane %v2821, 0
    %v2828 = vperm.slane %v2821, 1
    %v2831 = vpack.c.bf16 %v2827, %v2827
    %v2832 = vpack.c.bf16 %v2828, %v2828
    %2833 = vmatpush.bf16.msra.mxu0 %v1246
    %2834 = vmatpush.bf16.msra.mxu0 %v1238
    %2835 = vmatpush.bf16.msra.mxu0 %v1230
    %2836 = vmatpush.bf16.msra.mxu0 %v1222
    %2837 = vmatpush.bf16.msra.mxu0 %v1214
    %2838 = vmatpush.bf16.msra.mxu0 %v1206
    %2839 = vmatpush.bf16.msra.mxu0 %v1198
    %2840 = vmatpush.bf16.msra.mxu0 %v1190
    %2841 = vmatmul.bf16.gmra.mxu0 %v2831
    %v2842 = vpop.f32.mrf.mxu0
    %v2843 = vadd.f32 0.0, %v2842
    %v2844 = vpop.f32.mrf.mxu0
    %2845 = vdwg.mxu0
    %2846 = vmatpush.bf16.msra.mxu0 %v1310
    %2847 = vmatpush.bf16.msra.mxu0 %v1302
    %2848 = vmatpush.bf16.msra.mxu0 %v1294
    %2849 = vmatpush.bf16.msra.mxu0 %v1286
    %2850 = vmatpush.bf16.msra.mxu0 %v1278
    %2851 = vmatpush.bf16.msra.mxu0 %v1270
    %2852 = vmatpush.bf16.msra.mxu0 %v1262
    %2853 = vmatpush.bf16.msra.mxu0 %v1254
    %2854 = vmatmul.bf16.gmra.mxu0 %v2832
    %v2855 = vpop.f32.mrf.mxu0
    %v2856 = vadd.f32 %v2843, %v2855
    %v2857 = vpop.f32.mrf.mxu0
    %2858 = vdwg.mxu0
    %2859 = vmatpush.bf16.msra.mxu0 %v1247
    %2860 = vmatpush.bf16.msra.mxu0 %v1239
    %2861 = vmatpush.bf16.msra.mxu0 %v1231
    %2862 = vmatpush.bf16.msra.mxu0 %v1223
    %2863 = vmatpush.bf16.msra.mxu0 %v1215
    %2864 = vmatpush.bf16.msra.mxu0 %v1207
    %2865 = vmatpush.bf16.msra.mxu0 %v1199
    %2866 = vmatpush.bf16.msra.mxu0 %v1191
    %2867 = vmatmul.bf16.gmra.mxu0 %v2831
    %v2868 = vpop.f32.mrf.mxu0
    %v2869 = vadd.f32 0.0, %v2868
    %v2870 = vpop.f32.mrf.mxu0
    %2871 = vdwg.mxu0
    %2872 = vmatpush.bf16.msra.mxu0 %v1311
    %2873 = vmatpush.bf16.msra.mxu0 %v1303
    %2874 = vmatpush.bf16.msra.mxu0 %v1295
    %2875 = vmatpush.bf16.msra.mxu0 %v1287
    %2876 = vmatpush.bf16.msra.mxu0 %v1279
    %2877 = vmatpush.bf16.msra.mxu0 %v1271
    %2878 = vmatpush.bf16.msra.mxu0 %v1263
    %2879 = vmatpush.bf16.msra.mxu0 %v1255
    %2880 = vmatmul.bf16.gmra.mxu0 %v2832
    %v2881 = vpop.f32.mrf.mxu0
    %v2882 = vadd.f32 %v2869, %v2881
    %v2883 = vpop.f32.mrf.mxu0
    %2884 = vdwg.mxu0
    %2885 = vmatpush.bf16.msra.mxu0 %v1248
    %2886 = vmatpush.bf16.msra.mxu0 %v1240
    %2887 = vmatpush.bf16.msra.mxu0 %v1232
    %2888 = vmatpush.bf16.msra.mxu0 %v1224
    %2889 = vmatpush.bf16.msra.mxu0 %v1216
    %2890 = vmatpush.bf16.msra.mxu0 %v1208
    %2891 = vmatpush.bf16.msra.mxu0 %v1200
    %2892 = vmatpush.bf16.msra.mxu0 %v1192
    %2893 = vmatmul.bf16.gmra.mxu0 %v2831
    %v2894 = vpop.f32.mrf.mxu0
    %v2895 = vadd.f32 0.0, %v2894
    %v2896 = vpop.f32.mrf.mxu0
    %2897 = vdwg.mxu0
    %2898 = vmatpush.bf16.msra.mxu0 %v1312
    %2899 = vmatpush.bf16.msra.mxu0 %v1304
    %2900 = vmatpush.bf16.msra.mxu0 %v1296
    %2901 = vmatpush.bf16.msra.mxu0 %v1288
    %2902 = vmatpush.bf16.msra.mxu0 %v1280
    %2903 = vmatpush.bf16.msra.mxu0 %v1272
    %2904 = vmatpush.bf16.msra.mxu0 %v1264
    %2905 = vmatpush.bf16.msra.mxu0 %v1256
    %2906 = vmatmul.bf16.gmra.mxu0 %v2832
    %v2907 = vpop.f32.mrf.mxu0
    %v2908 = vadd.f32 %v2895, %v2907
    %v2909 = vpop.f32.mrf.mxu0
    %2910 = vdwg.mxu0
    %2911 = vmatpush.bf16.msra.mxu0 %v1249
    %2912 = vmatpush.bf16.msra.mxu0 %v1241
    %2913 = vmatpush.bf16.msra.mxu0 %v1233
    %2914 = vmatpush.bf16.msra.mxu0 %v1225
    %2915 = vmatpush.bf16.msra.mxu0 %v1217
    %2916 = vmatpush.bf16.msra.mxu0 %v1209
    %2917 = vmatpush.bf16.msra.mxu0 %v1201
    %2918 = vmatpush.bf16.msra.mxu0 %v1193
    %2919 = vmatmul.bf16.gmra.mxu0 %v2831
    %v2920 = vpop.f32.mrf.mxu0
    %v2921 = vadd.f32 0.0, %v2920
    %v2922 = vpop.f32.mrf.mxu0
    %2923 = vdwg.mxu0
    %2924 = vmatpush.bf16.msra.mxu0 %v1313
    %2925 = vmatpush.bf16.msra.mxu0 %v1305
    %2926 = vmatpush.bf16.msra.mxu0 %v1297
    %2927 = vmatpush.bf16.msra.mxu0 %v1289
    %2928 = vmatpush.bf16.msra.mxu0 %v1281
    %2929 = vmatpush.bf16.msra.mxu0 %v1273
    %2930 = vmatpush.bf16.msra.mxu0 %v1265
    %2931 = vmatpush.bf16.msra.mxu0 %v1257
    %2932 = vmatmul.bf16.gmra.mxu0 %v2832
    %v2933 = vpop.f32.mrf.mxu0
    %v2934 = vadd.f32 %v2921, %v2933
    %v2935 = vpop.f32.mrf.mxu0
    %2936 = vdwg.mxu0
    %2937 = vmatpush.bf16.msra.mxu0 %v1250
    %2938 = vmatpush.bf16.msra.mxu0 %v1242
    %2939 = vmatpush.bf16.msra.mxu0 %v1234
    %2940 = vmatpush.bf16.msra.mxu0 %v1226
    %2941 = vmatpush.bf16.msra.mxu0 %v1218
    %2942 = vmatpush.bf16.msra.mxu0 %v1210
    %2943 = vmatpush.bf16.msra.mxu0 %v1202
    %2944 = vmatpush.bf16.msra.mxu0 %v1194
    %2945 = vmatmul.bf16.gmra.mxu0 %v2831
    %v2946 = vpop.f32.mrf.mxu0
    %v2947 = vadd.f32 0.0, %v2946
    %v2948 = vpop.f32.mrf.mxu0
    %2949 = vdwg.mxu0
    %2950 = vmatpush.bf16.msra.mxu0 %v1314
    %2951 = vmatpush.bf16.msra.mxu0 %v1306
    %2952 = vmatpush.bf16.msra.mxu0 %v1298
    %2953 = vmatpush.bf16.msra.mxu0 %v1290
    %2954 = vmatpush.bf16.msra.mxu0 %v1282
    %2955 = vmatpush.bf16.msra.mxu0 %v1274
    %2956 = vmatpush.bf16.msra.mxu0 %v1266
    %2957 = vmatpush.bf16.msra.mxu0 %v1258
    %2958 = vmatmul.bf16.gmra.mxu0 %v2832
    %v2959 = vpop.f32.mrf.mxu0
    %v2960 = vadd.f32 %v2947, %v2959
    %v2961 = vpop.f32.mrf.mxu0
    %2962 = vdwg.mxu0
    %2963 = vmatpush.bf16.msra.mxu0 %v1251
    %2964 = vmatpush.bf16.msra.mxu0 %v1243
    %2965 = vmatpush.bf16.msra.mxu0 %v1235
    %2966 = vmatpush.bf16.msra.mxu0 %v1227
    %2967 = vmatpush.bf16.msra.mxu0 %v1219
    %2968 = vmatpush.bf16.msra.mxu0 %v1211
    %2969 = vmatpush.bf16.msra.mxu0 %v1203
    %2970 = vmatpush.bf16.msra.mxu0 %v1195
    %2971 = vmatmul.bf16.gmra.mxu0 %v2831
    %v2972 = vpop.f32.mrf.mxu0
    %v2973 = vadd.f32 0.0, %v2972
    %v2974 = vpop.f32.mrf.mxu0
    %2975 = vdwg.mxu0
    %2976 = vmatpush.bf16.msra.mxu0 %v1315
    %2977 = vmatpush.bf16.msra.mxu0 %v1307
    %2978 = vmatpush.bf16.msra.mxu0 %v1299
    %2979 = vmatpush.bf16.msra.mxu0 %v1291
    %2980 = vmatpush.bf16.msra.mxu0 %v1283
    %2981 = vmatpush.bf16.msra.mxu0 %v1275
    %2982 = vmatpush.bf16.msra.mxu0 %v1267
    %2983 = vmatpush.bf16.msra.mxu0 %v1259
    %2984 = vmatmul.bf16.gmra.mxu0 %v2832
    %v2985 = vpop.f32.mrf.mxu0
    %v2986 = vadd.f32 %v2973, %v2985
    %v2987 = vpop.f32.mrf.mxu0
    %2988 = vdwg.mxu0
    %2989 = vmatpush.bf16.msra.mxu0 %v1252
    %2990 = vmatpush.bf16.msra.mxu0 %v1244
    %2991 = vmatpush.bf16.msra.mxu0 %v1236
    %2992 = vmatpush.bf16.msra.mxu0 %v1228
    %2993 = vmatpush.bf16.msra.mxu0 %v1220
    %2994 = vmatpush.bf16.msra.mxu0 %v1212
    %2995 = vmatpush.bf16.msra.mxu0 %v1204
    %2996 = vmatpush.bf16.msra.mxu0 %v1196
    %2997 = vmatmul.bf16.gmra.mxu0 %v2831
    %v2998 = vpop.f32.mrf.mxu0
    %v2999 = vadd.f32 0.0, %v2998
    %v3000 = vpop.f32.mrf.mxu0
    %3001 = vdwg.mxu0
    %3002 = vmatpush.bf16.msra.mxu0 %v1316
    %3003 = vmatpush.bf16.msra.mxu0 %v1308
    %3004 = vmatpush.bf16.msra.mxu0 %v1300
    %3005 = vmatpush.bf16.msra.mxu0 %v1292
    %3006 = vmatpush.bf16.msra.mxu0 %v1284
    %3007 = vmatpush.bf16.msra.mxu0 %v1276
    %3008 = vmatpush.bf16.msra.mxu0 %v1268
    %3009 = vmatpush.bf16.msra.mxu0 %v1260
    %3010 = vmatmul.bf16.gmra.mxu0 %v2832
    %v3011 = vpop.f32.mrf.mxu0
    %v3012 = vadd.f32 %v2999, %v3011
    %v3013 = vpop.f32.mrf.mxu0
    %3014 = vdwg.mxu0
    %3015 = vmatpush.bf16.msra.mxu0 %v1253
    %3016 = vmatpush.bf16.msra.mxu0 %v1245
    %3017 = vmatpush.bf16.msra.mxu0 %v1237
    %3018 = vmatpush.bf16.msra.mxu0 %v1229
    %3019 = vmatpush.bf16.msra.mxu0 %v1221
    %3020 = vmatpush.bf16.msra.mxu0 %v1213
    %3021 = vmatpush.bf16.msra.mxu0 %v1205
    %3022 = vmatpush.bf16.msra.mxu0 %v1197
    %3023 = vmatmul.bf16.gmra.mxu0 %v2831
    %v3024 = vpop.f32.mrf.mxu0
    %v3025 = vadd.f32 0.0, %v3024
    %v3026 = vpop.f32.mrf.mxu0
    %3027 = vdwg.mxu0
    %3028 = vmatpush.bf16.msra.mxu0 %v1317
    %3029 = vmatpush.bf16.msra.mxu0 %v1309
    %3030 = vmatpush.bf16.msra.mxu0 %v1301
    %3031 = vmatpush.bf16.msra.mxu0 %v1293
    %3032 = vmatpush.bf16.msra.mxu0 %v1285
    %3033 = vmatpush.bf16.msra.mxu0 %v1277
    %3034 = vmatpush.bf16.msra.mxu0 %v1269
    %3035 = vmatpush.bf16.msra.mxu0 %v1261
    %3036 = vmatmul.bf16.gmra.mxu0 %v2832
    %v3037 = vpop.f32.mrf.mxu0
    %v3038 = vadd.f32 %v3025, %v3037
    %v3039 = vpop.f32.mrf.mxu0
    %3040 = vdwg.mxu0
    %v3049 = vrot.slane %v2882, 7
    %v3050 = vrot.slane %v2908, 6
    %v3051 = vrot.slane %v2934, 5
    %v3052 = vrot.slane %v2960, 4
    %v3053 = vrot.slane %v2986, 3
    %v3054 = vrot.slane %v3012, 2
    %v3055 = vrot.slane %v3038, 1
    %v3056 = vsel %vm1669, %v2856, %v3049
    %v3057 = vsel %vm1671, %v3050, %v3051
    %v3058 = vsel %vm1673, %v3056, %v3057
    %v3059 = vsel %vm1675, %v3052, %v3053
    %v3060 = vsel %vm1677, %v3054, %v3055
    %v3061 = vsel %vm1679, %v3059, %v3060
    %v3062 = vsel %vm1681, %v3058, %v3061
    %v3064 = vadd.f32 %v2825, %v3062
    %v3065 = vxor.u32 %v3064, 2147483648
    %v3066 = vmul.f32 %v3065, 1.442695
    %v3067 = vpow.pop %v3066
    %v3068 = vadd.f32 %v3067, 1.0
    %v3069 = vrcp.pop %v3068
    %v3070 = vmul.f32 %v3068, %v3069
    %v3071 = vsub.f32 1.0, %v3070
    %v3072 = vmul.f32 %v3069, %v3071
    %v3073 = vadd.f32 %v3069, %v3072
    %vm3074 = vweird.f32 %v3068
    %vm3075 = vweird.f32 %v3069
    %vm3076 = vmor %vm3074, %vm3075
    %v3077 = vsel %vm3076, %v3069, %v3073
    %v3078 = vand.u32 2147483647, %v3068
    %vm3079 = vcmp.eq.f32.partialorder %v3078, 8.507059e+37
    %v3080 = vand.u32 %v3068, 2147483648
    %v3081 = vor.u32 1.1754944e-38, %v3080
    %v3082 = vsel %vm3079, %v3081, %v3077
    %v3083 = vmul.f32 1.0, %v3082
    %v3085 = vrot.slane %v3064, 6
    %v3087 = vtanh.pop %v3085
    %v3089 = vrot.slane %v3083, 2
    %v3091 = vmul.f32 %v3089, %v2817
    %v3092 = vmul.f32 %v3083, %v3087
    %v3093 = vadd.f32 %v3091, %v3092
    %v3094 = vtanh.pop %v3093
    %v3095 = vrot.slane %v3083, 4
    %v3097 = vmul.f32 %v3095, %v3094
    %s3098 = scalar_lea.vmem [#allocation2], 7
    %v3099 = vld [vmem:[%s3098] ss:$8 sm:$0xf]
    %v3100 = vld [vmem:[%s3098] ss:$8 sm:$0xf0]
    %v3101 = vor.u32 %v3099, %v3100
    %v3103 = vperm.slane %v3097, 0
    %v3104 = vperm.slane %v3097, 1
    %v3107 = vpack.c.bf16 %v3103, %v3103
    %v3108 = vpack.c.bf16 %v3104, %v3104
    %3109 = vmatpush.bf16.msra.mxu0 %v1246
    %3110 = vmatpush.bf16.msra.mxu0 %v1238
    %3111 = vmatpush.bf16.msra.mxu0 %v1230
    %3112 = vmatpush.bf16.msra.mxu0 %v1222
    %3113 = vmatpush.bf16.msra.mxu0 %v1214
    %3114 = vmatpush.bf16.msra.mxu0 %v1206
    %3115 = vmatpush.bf16.msra.mxu0 %v1198
    %3116 = vmatpush.bf16.msra.mxu0 %v1190
    %3117 = vmatmul.bf16.gmra.mxu0 %v3107
    %v3118 = vpop.f32.mrf.mxu0
    %v3119 = vadd.f32 0.0, %v3118
    %v3120 = vpop.f32.mrf.mxu0
    %3121 = vdwg.mxu0
    %3122 = vmatpush.bf16.msra.mxu0 %v1310
    %3123 = vmatpush.bf16.msra.mxu0 %v1302
    %3124 = vmatpush.bf16.msra.mxu0 %v1294
    %3125 = vmatpush.bf16.msra.mxu0 %v1286
    %3126 = vmatpush.bf16.msra.mxu0 %v1278
    %3127 = vmatpush.bf16.msra.mxu0 %v1270
    %3128 = vmatpush.bf16.msra.mxu0 %v1262
    %3129 = vmatpush.bf16.msra.mxu0 %v1254
    %3130 = vmatmul.bf16.gmra.mxu0 %v3108
    %v3131 = vpop.f32.mrf.mxu0
    %v3132 = vadd.f32 %v3119, %v3131
    %v3133 = vpop.f32.mrf.mxu0
    %3134 = vdwg.mxu0
    %3135 = vmatpush.bf16.msra.mxu0 %v1247
    %3136 = vmatpush.bf16.msra.mxu0 %v1239
    %3137 = vmatpush.bf16.msra.mxu0 %v1231
    %3138 = vmatpush.bf16.msra.mxu0 %v1223
    %3139 = vmatpush.bf16.msra.mxu0 %v1215
    %3140 = vmatpush.bf16.msra.mxu0 %v1207
    %3141 = vmatpush.bf16.msra.mxu0 %v1199
    %3142 = vmatpush.bf16.msra.mxu0 %v1191
    %3143 = vmatmul.bf16.gmra.mxu0 %v3107
    %v3144 = vpop.f32.mrf.mxu0
    %v3145 = vadd.f32 0.0, %v3144
    %v3146 = vpop.f32.mrf.mxu0
    %3147 = vdwg.mxu0
    %3148 = vmatpush.bf16.msra.mxu0 %v1311
    %3149 = vmatpush.bf16.msra.mxu0 %v1303
    %3150 = vmatpush.bf16.msra.mxu0 %v1295
    %3151 = vmatpush.bf16.msra.mxu0 %v1287
    %3152 = vmatpush.bf16.msra.mxu0 %v1279
    %3153 = vmatpush.bf16.msra.mxu0 %v1271
    %3154 = vmatpush.bf16.msra.mxu0 %v1263
    %3155 = vmatpush.bf16.msra.mxu0 %v1255
    %3156 = vmatmul.bf16.gmra.mxu0 %v3108
    %v3157 = vpop.f32.mrf.mxu0
    %v3158 = vadd.f32 %v3145, %v3157
    %v3159 = vpop.f32.mrf.mxu0
    %3160 = vdwg.mxu0
    %3161 = vmatpush.bf16.msra.mxu0 %v1248
    %3162 = vmatpush.bf16.msra.mxu0 %v1240
    %3163 = vmatpush.bf16.msra.mxu0 %v1232
    %3164 = vmatpush.bf16.msra.mxu0 %v1224
    %3165 = vmatpush.bf16.msra.mxu0 %v1216
    %3166 = vmatpush.bf16.msra.mxu0 %v1208
    %3167 = vmatpush.bf16.msra.mxu0 %v1200
    %3168 = vmatpush.bf16.msra.mxu0 %v1192
    %3169 = vmatmul.bf16.gmra.mxu0 %v3107
    %v3170 = vpop.f32.mrf.mxu0
    %v3171 = vadd.f32 0.0, %v3170
    %v3172 = vpop.f32.mrf.mxu0
    %3173 = vdwg.mxu0
    %3174 = vmatpush.bf16.msra.mxu0 %v1312
    %3175 = vmatpush.bf16.msra.mxu0 %v1304
    %3176 = vmatpush.bf16.msra.mxu0 %v1296
    %3177 = vmatpush.bf16.msra.mxu0 %v1288
    %3178 = vmatpush.bf16.msra.mxu0 %v1280
    %3179 = vmatpush.bf16.msra.mxu0 %v1272
    %3180 = vmatpush.bf16.msra.mxu0 %v1264
    %3181 = vmatpush.bf16.msra.mxu0 %v1256
    %3182 = vmatmul.bf16.gmra.mxu0 %v3108
    %v3183 = vpop.f32.mrf.mxu0
    %v3184 = vadd.f32 %v3171, %v3183
    %v3185 = vpop.f32.mrf.mxu0
    %3186 = vdwg.mxu0
    %3187 = vmatpush.bf16.msra.mxu0 %v1249
    %3188 = vmatpush.bf16.msra.mxu0 %v1241
    %3189 = vmatpush.bf16.msra.mxu0 %v1233
    %3190 = vmatpush.bf16.msra.mxu0 %v1225
    %3191 = vmatpush.bf16.msra.mxu0 %v1217
    %3192 = vmatpush.bf16.msra.mxu0 %v1209
    %3193 = vmatpush.bf16.msra.mxu0 %v1201
    %3194 = vmatpush.bf16.msra.mxu0 %v1193
    %3195 = vmatmul.bf16.gmra.mxu0 %v3107
    %v3196 = vpop.f32.mrf.mxu0
    %v3197 = vadd.f32 0.0, %v3196
    %v3198 = vpop.f32.mrf.mxu0
    %3199 = vdwg.mxu0
    %3200 = vmatpush.bf16.msra.mxu0 %v1313
    %3201 = vmatpush.bf16.msra.mxu0 %v1305
    %3202 = vmatpush.bf16.msra.mxu0 %v1297
    %3203 = vmatpush.bf16.msra.mxu0 %v1289
    %3204 = vmatpush.bf16.msra.mxu0 %v1281
    %3205 = vmatpush.bf16.msra.mxu0 %v1273
    %3206 = vmatpush.bf16.msra.mxu0 %v1265
    %3207 = vmatpush.bf16.msra.mxu0 %v1257
    %3208 = vmatmul.bf16.gmra.mxu0 %v3108
    %v3209 = vpop.f32.mrf.mxu0
    %v3210 = vadd.f32 %v3197, %v3209
    %v3211 = vpop.f32.mrf.mxu0
    %3212 = vdwg.mxu0
    %3213 = vmatpush.bf16.msra.mxu0 %v1250
    %3214 = vmatpush.bf16.msra.mxu0 %v1242
    %3215 = vmatpush.bf16.msra.mxu0 %v1234
    %3216 = vmatpush.bf16.msra.mxu0 %v1226
    %3217 = vmatpush.bf16.msra.mxu0 %v1218
    %3218 = vmatpush.bf16.msra.mxu0 %v1210
    %3219 = vmatpush.bf16.msra.mxu0 %v1202
    %3220 = vmatpush.bf16.msra.mxu0 %v1194
    %3221 = vmatmul.bf16.gmra.mxu0 %v3107
    %v3222 = vpop.f32.mrf.mxu0
    %v3223 = vadd.f32 0.0, %v3222
    %v3224 = vpop.f32.mrf.mxu0
    %3225 = vdwg.mxu0
    %3226 = vmatpush.bf16.msra.mxu0 %v1314
    %3227 = vmatpush.bf16.msra.mxu0 %v1306
    %3228 = vmatpush.bf16.msra.mxu0 %v1298
    %3229 = vmatpush.bf16.msra.mxu0 %v1290
    %3230 = vmatpush.bf16.msra.mxu0 %v1282
    %3231 = vmatpush.bf16.msra.mxu0 %v1274
    %3232 = vmatpush.bf16.msra.mxu0 %v1266
    %3233 = vmatpush.bf16.msra.mxu0 %v1258
    %3234 = vmatmul.bf16.gmra.mxu0 %v3108
    %v3235 = vpop.f32.mrf.mxu0
    %v3236 = vadd.f32 %v3223, %v3235
    %v3237 = vpop.f32.mrf.mxu0
    %3238 = vdwg.mxu0
    %3239 = vmatpush.bf16.msra.mxu0 %v1251
    %3240 = vmatpush.bf16.msra.mxu0 %v1243
    %3241 = vmatpush.bf16.msra.mxu0 %v1235
    %3242 = vmatpush.bf16.msra.mxu0 %v1227
    %3243 = vmatpush.bf16.msra.mxu0 %v1219
    %3244 = vmatpush.bf16.msra.mxu0 %v1211
    %3245 = vmatpush.bf16.msra.mxu0 %v1203
    %3246 = vmatpush.bf16.msra.mxu0 %v1195
    %3247 = vmatmul.bf16.gmra.mxu0 %v3107
    %v3248 = vpop.f32.mrf.mxu0
    %v3249 = vadd.f32 0.0, %v3248
    %v3250 = vpop.f32.mrf.mxu0
    %3251 = vdwg.mxu0
    %3252 = vmatpush.bf16.msra.mxu0 %v1315
    %3253 = vmatpush.bf16.msra.mxu0 %v1307
    %3254 = vmatpush.bf16.msra.mxu0 %v1299
    %3255 = vmatpush.bf16.msra.mxu0 %v1291
    %3256 = vmatpush.bf16.msra.mxu0 %v1283
    %3257 = vmatpush.bf16.msra.mxu0 %v1275
    %3258 = vmatpush.bf16.msra.mxu0 %v1267
    %3259 = vmatpush.bf16.msra.mxu0 %v1259
    %3260 = vmatmul.bf16.gmra.mxu0 %v3108
    %v3261 = vpop.f32.mrf.mxu0
    %v3262 = vadd.f32 %v3249, %v3261
    %v3263 = vpop.f32.mrf.mxu0
    %3264 = vdwg.mxu0
    %3265 = vmatpush.bf16.msra.mxu0 %v1252
    %3266 = vmatpush.bf16.msra.mxu0 %v1244
    %3267 = vmatpush.bf16.msra.mxu0 %v1236
    %3268 = vmatpush.bf16.msra.mxu0 %v1228
    %3269 = vmatpush.bf16.msra.mxu0 %v1220
    %3270 = vmatpush.bf16.msra.mxu0 %v1212
    %3271 = vmatpush.bf16.msra.mxu0 %v1204
    %3272 = vmatpush.bf16.msra.mxu0 %v1196
    %3273 = vmatmul.bf16.gmra.mxu0 %v3107
    %v3274 = vpop.f32.mrf.mxu0
    %v3275 = vadd.f32 0.0, %v3274
    %v3276 = vpop.f32.mrf.mxu0
    %3277 = vdwg.mxu0
    %3278 = vmatpush.bf16.msra.mxu0 %v1316
    %3279 = vmatpush.bf16.msra.mxu0 %v1308
    %3280 = vmatpush.bf16.msra.mxu0 %v1300
    %3281 = vmatpush.bf16.msra.mxu0 %v1292
    %3282 = vmatpush.bf16.msra.mxu0 %v1284
    %3283 = vmatpush.bf16.msra.mxu0 %v1276
    %3284 = vmatpush.bf16.msra.mxu0 %v1268
    %3285 = vmatpush.bf16.msra.mxu0 %v1260
    %3286 = vmatmul.bf16.gmra.mxu0 %v3108
    %v3287 = vpop.f32.mrf.mxu0
    %v3288 = vadd.f32 %v3275, %v3287
    %v3289 = vpop.f32.mrf.mxu0
    %3290 = vdwg.mxu0
    %3291 = vmatpush.bf16.msra.mxu0 %v1253
    %3292 = vmatpush.bf16.msra.mxu0 %v1245
    %3293 = vmatpush.bf16.msra.mxu0 %v1237
    %3294 = vmatpush.bf16.msra.mxu0 %v1229
    %3295 = vmatpush.bf16.msra.mxu0 %v1221
    %3296 = vmatpush.bf16.msra.mxu0 %v1213
    %3297 = vmatpush.bf16.msra.mxu0 %v1205
    %3298 = vmatpush.bf16.msra.mxu0 %v1197
    %3299 = vmatmul.bf16.gmra.mxu0 %v3107
    %v3300 = vpop.f32.mrf.mxu0
    %v3301 = vadd.f32 0.0, %v3300
    %v3302 = vpop.f32.mrf.mxu0
    %3303 = vdwg.mxu0
    %3304 = vmatpush.bf16.msra.mxu0 %v1317
    %3305 = vmatpush.bf16.msra.mxu0 %v1309
    %3306 = vmatpush.bf16.msra.mxu0 %v1301
    %3307 = vmatpush.bf16.msra.mxu0 %v1293
    %3308 = vmatpush.bf16.msra.mxu0 %v1285
    %3309 = vmatpush.bf16.msra.mxu0 %v1277
    %3310 = vmatpush.bf16.msra.mxu0 %v1269
    %3311 = vmatpush.bf16.msra.mxu0 %v1261
    %3312 = vmatmul.bf16.gmra.mxu0 %v3108
    %v3313 = vpop.f32.mrf.mxu0
    %v3314 = vadd.f32 %v3301, %v3313
    %v3315 = vpop.f32.mrf.mxu0
    %3316 = vdwg.mxu0
    %v3325 = vrot.slane %v3158, 7
    %v3326 = vrot.slane %v3184, 6
    %v3327 = vrot.slane %v3210, 5
    %v3328 = vrot.slane %v3236, 4
    %v3329 = vrot.slane %v3262, 3
    %v3330 = vrot.slane %v3288, 2
    %v3331 = vrot.slane %v3314, 1
    %v3332 = vsel %vm1669, %v3132, %v3325
    %v3333 = vsel %vm1671, %v3326, %v3327
    %v3334 = vsel %vm1673, %v3332, %v3333
    %v3335 = vsel %vm1675, %v3328, %v3329
    %v3336 = vsel %vm1677, %v3330, %v3331
    %v3337 = vsel %vm1679, %v3335, %v3336
    %v3338 = vsel %vm1681, %v3334, %v3337
    %v3340 = vadd.f32 %v3101, %v3338
    %v3341 = vxor.u32 %v3340, 2147483648
    %v3342 = vmul.f32 %v3341, 1.442695
    %v3343 = vpow.pop %v3342
    %v3344 = vadd.f32 %v3343, 1.0
    %v3345 = vrcp.pop %v3344
    %v3346 = vmul.f32 %v3344, %v3345
    %v3347 = vsub.f32 1.0, %v3346
    %v3348 = vmul.f32 %v3345, %v3347
    %v3349 = vadd.f32 %v3345, %v3348
    %vm3350 = vweird.f32 %v3344
    %vm3351 = vweird.f32 %v3345
    %vm3352 = vmor %vm3350, %vm3351
    %v3353 = vsel %vm3352, %v3345, %v3349
    %v3354 = vand.u32 2147483647, %v3344
    %vm3355 = vcmp.eq.f32.partialorder %v3354, 8.507059e+37
    %v3356 = vand.u32 %v3344, 2147483648
    %v3357 = vor.u32 1.1754944e-38, %v3356
    %v3358 = vsel %vm3355, %v3357, %v3353
    %v3359 = vmul.f32 1.0, %v3358
    %v3361 = vrot.slane %v3340, 6
    %v3363 = vtanh.pop %v3361
    %v3365 = vrot.slane %v3359, 2
    %v3367 = vmul.f32 %v3365, %v3093
    %v3368 = vmul.f32 %v3359, %v3363
    %v3369 = vadd.f32 %v3367, %v3368
    %v3370 = vtanh.pop %v3369
    %v3371 = vrot.slane %v3359, 4
    %v3373 = vmul.f32 %v3371, %v3370
    %s3374 = scalar_lea.vmem [#allocation2], 64
    %v3375 = vld [vmem:[%s3374] ss:$8 sm:$0xf]
    %v3376 = vld [vmem:[%s3374] ss:$8 sm:$0xf0]
    %v3377 = vor.u32 %v3375, %v3376
    %v3379 = vperm.slane %v3373, 0
    %v3380 = vperm.slane %v3373, 1
    %v3383 = vpack.c.bf16 %v3379, %v3379
    %v3384 = vpack.c.bf16 %v3380, %v3380
    %3385 = vmatpush.bf16.msra.mxu0 %v1246
    %3386 = vmatpush.bf16.msra.mxu0 %v1238
    %3387 = vmatpush.bf16.msra.mxu0 %v1230
    %3388 = vmatpush.bf16.msra.mxu0 %v1222
    %3389 = vmatpush.bf16.msra.mxu0 %v1214
    %3390 = vmatpush.bf16.msra.mxu0 %v1206
    %3391 = vmatpush.bf16.msra.mxu0 %v1198
    %3392 = vmatpush.bf16.msra.mxu0 %v1190
    %3393 = vmatmul.bf16.gmra.mxu0 %v3383
    %v3394 = vpop.f32.mrf.mxu0
    %v3395 = vadd.f32 0.0, %v3394
    %v3396 = vpop.f32.mrf.mxu0
    %3397 = vdwg.mxu0
    %3398 = vmatpush.bf16.msra.mxu0 %v1310
    %3399 = vmatpush.bf16.msra.mxu0 %v1302
    %3400 = vmatpush.bf16.msra.mxu0 %v1294
    %3401 = vmatpush.bf16.msra.mxu0 %v1286
    %3402 = vmatpush.bf16.msra.mxu0 %v1278
    %3403 = vmatpush.bf16.msra.mxu0 %v1270
    %3404 = vmatpush.bf16.msra.mxu0 %v1262
    %3405 = vmatpush.bf16.msra.mxu0 %v1254
    %3406 = vmatmul.bf16.gmra.mxu0 %v3384
    %v3407 = vpop.f32.mrf.mxu0
    %v3408 = vadd.f32 %v3395, %v3407
    %v3409 = vpop.f32.mrf.mxu0
    %3410 = vdwg.mxu0
    %3411 = vmatpush.bf16.msra.mxu0 %v1247
    %3412 = vmatpush.bf16.msra.mxu0 %v1239
    %3413 = vmatpush.bf16.msra.mxu0 %v1231
    %3414 = vmatpush.bf16.msra.mxu0 %v1223
    %3415 = vmatpush.bf16.msra.mxu0 %v1215
    %3416 = vmatpush.bf16.msra.mxu0 %v1207
    %3417 = vmatpush.bf16.msra.mxu0 %v1199
    %3418 = vmatpush.bf16.msra.mxu0 %v1191
    %3419 = vmatmul.bf16.gmra.mxu0 %v3383
    %v3420 = vpop.f32.mrf.mxu0
    %v3421 = vadd.f32 0.0, %v3420
    %v3422 = vpop.f32.mrf.mxu0
    %3423 = vdwg.mxu0
    %3424 = vmatpush.bf16.msra.mxu0 %v1311
    %3425 = vmatpush.bf16.msra.mxu0 %v1303
    %3426 = vmatpush.bf16.msra.mxu0 %v1295
    %3427 = vmatpush.bf16.msra.mxu0 %v1287
    %3428 = vmatpush.bf16.msra.mxu0 %v1279
    %3429 = vmatpush.bf16.msra.mxu0 %v1271
    %3430 = vmatpush.bf16.msra.mxu0 %v1263
    %3431 = vmatpush.bf16.msra.mxu0 %v1255
    %3432 = vmatmul.bf16.gmra.mxu0 %v3384
    %v3433 = vpop.f32.mrf.mxu0
    %v3434 = vadd.f32 %v3421, %v3433
    %v3435 = vpop.f32.mrf.mxu0
    %3436 = vdwg.mxu0
    %3437 = vmatpush.bf16.msra.mxu0 %v1248
    %3438 = vmatpush.bf16.msra.mxu0 %v1240
    %3439 = vmatpush.bf16.msra.mxu0 %v1232
    %3440 = vmatpush.bf16.msra.mxu0 %v1224
    %3441 = vmatpush.bf16.msra.mxu0 %v1216
    %3442 = vmatpush.bf16.msra.mxu0 %v1208
    %3443 = vmatpush.bf16.msra.mxu0 %v1200
    %3444 = vmatpush.bf16.msra.mxu0 %v1192
    %3445 = vmatmul.bf16.gmra.mxu0 %v3383
    %v3446 = vpop.f32.mrf.mxu0
    %v3447 = vadd.f32 0.0, %v3446
    %v3448 = vpop.f32.mrf.mxu0
    %3449 = vdwg.mxu0
    %3450 = vmatpush.bf16.msra.mxu0 %v1312
    %3451 = vmatpush.bf16.msra.mxu0 %v1304
    %3452 = vmatpush.bf16.msra.mxu0 %v1296
    %3453 = vmatpush.bf16.msra.mxu0 %v1288
    %3454 = vmatpush.bf16.msra.mxu0 %v1280
    %3455 = vmatpush.bf16.msra.mxu0 %v1272
    %3456 = vmatpush.bf16.msra.mxu0 %v1264
    %3457 = vmatpush.bf16.msra.mxu0 %v1256
    %3458 = vmatmul.bf16.gmra.mxu0 %v3384
    %v3459 = vpop.f32.mrf.mxu0
    %v3460 = vadd.f32 %v3447, %v3459
    %v3461 = vpop.f32.mrf.mxu0
    %3462 = vdwg.mxu0
    %3463 = vmatpush.bf16.msra.mxu0 %v1249
    %3464 = vmatpush.bf16.msra.mxu0 %v1241
    %3465 = vmatpush.bf16.msra.mxu0 %v1233
    %3466 = vmatpush.bf16.msra.mxu0 %v1225
    %3467 = vmatpush.bf16.msra.mxu0 %v1217
    %3468 = vmatpush.bf16.msra.mxu0 %v1209
    %3469 = vmatpush.bf16.msra.mxu0 %v1201
    %3470 = vmatpush.bf16.msra.mxu0 %v1193
    %3471 = vmatmul.bf16.gmra.mxu0 %v3383
    %v3472 = vpop.f32.mrf.mxu0
    %v3473 = vadd.f32 0.0, %v3472
    %v3474 = vpop.f32.mrf.mxu0
    %3475 = vdwg.mxu0
    %3476 = vmatpush.bf16.msra.mxu0 %v1313
    %3477 = vmatpush.bf16.msra.mxu0 %v1305
    %3478 = vmatpush.bf16.msra.mxu0 %v1297
    %3479 = vmatpush.bf16.msra.mxu0 %v1289
    %3480 = vmatpush.bf16.msra.mxu0 %v1281
    %3481 = vmatpush.bf16.msra.mxu0 %v1273
    %3482 = vmatpush.bf16.msra.mxu0 %v1265
    %3483 = vmatpush.bf16.msra.mxu0 %v1257
    %3484 = vmatmul.bf16.gmra.mxu0 %v3384
    %v3485 = vpop.f32.mrf.mxu0
    %v3486 = vadd.f32 %v3473, %v3485
    %v3487 = vpop.f32.mrf.mxu0
    %3488 = vdwg.mxu0
    %3489 = vmatpush.bf16.msra.mxu0 %v1250
    %3490 = vmatpush.bf16.msra.mxu0 %v1242
    %3491 = vmatpush.bf16.msra.mxu0 %v1234
    %3492 = vmatpush.bf16.msra.mxu0 %v1226
    %3493 = vmatpush.bf16.msra.mxu0 %v1218
    %3494 = vmatpush.bf16.msra.mxu0 %v1210
    %3495 = vmatpush.bf16.msra.mxu0 %v1202
    %3496 = vmatpush.bf16.msra.mxu0 %v1194
    %3497 = vmatmul.bf16.gmra.mxu0 %v3383
    %v3498 = vpop.f32.mrf.mxu0
    %v3499 = vadd.f32 0.0, %v3498
    %v3500 = vpop.f32.mrf.mxu0
    %3501 = vdwg.mxu0
    %3502 = vmatpush.bf16.msra.mxu0 %v1314
    %3503 = vmatpush.bf16.msra.mxu0 %v1306
    %3504 = vmatpush.bf16.msra.mxu0 %v1298
    %3505 = vmatpush.bf16.msra.mxu0 %v1290
    %3506 = vmatpush.bf16.msra.mxu0 %v1282
    %3507 = vmatpush.bf16.msra.mxu0 %v1274
    %3508 = vmatpush.bf16.msra.mxu0 %v1266
    %3509 = vmatpush.bf16.msra.mxu0 %v1258
    %3510 = vmatmul.bf16.gmra.mxu0 %v3384
    %v3511 = vpop.f32.mrf.mxu0
    %v3512 = vadd.f32 %v3499, %v3511
    %v3513 = vpop.f32.mrf.mxu0
    %3514 = vdwg.mxu0
    %3515 = vmatpush.bf16.msra.mxu0 %v1251
    %3516 = vmatpush.bf16.msra.mxu0 %v1243
    %3517 = vmatpush.bf16.msra.mxu0 %v1235
    %3518 = vmatpush.bf16.msra.mxu0 %v1227
    %3519 = vmatpush.bf16.msra.mxu0 %v1219
    %3520 = vmatpush.bf16.msra.mxu0 %v1211
    %3521 = vmatpush.bf16.msra.mxu0 %v1203
    %3522 = vmatpush.bf16.msra.mxu0 %v1195
    %3523 = vmatmul.bf16.gmra.mxu0 %v3383
    %v3524 = vpop.f32.mrf.mxu0
    %v3525 = vadd.f32 0.0, %v3524
    %v3526 = vpop.f32.mrf.mxu0
    %3527 = vdwg.mxu0
    %3528 = vmatpush.bf16.msra.mxu0 %v1315
    %3529 = vmatpush.bf16.msra.mxu0 %v1307
    %3530 = vmatpush.bf16.msra.mxu0 %v1299
    %3531 = vmatpush.bf16.msra.mxu0 %v1291
    %3532 = vmatpush.bf16.msra.mxu0 %v1283
    %3533 = vmatpush.bf16.msra.mxu0 %v1275
    %3534 = vmatpush.bf16.msra.mxu0 %v1267
    %3535 = vmatpush.bf16.msra.mxu0 %v1259
    %3536 = vmatmul.bf16.gmra.mxu0 %v3384
    %v3537 = vpop.f32.mrf.mxu0
    %v3538 = vadd.f32 %v3525, %v3537
    %v3539 = vpop.f32.mrf.mxu0
    %3540 = vdwg.mxu0
    %3541 = vmatpush.bf16.msra.mxu0 %v1252
    %3542 = vmatpush.bf16.msra.mxu0 %v1244
    %3543 = vmatpush.bf16.msra.mxu0 %v1236
    %3544 = vmatpush.bf16.msra.mxu0 %v1228
    %3545 = vmatpush.bf16.msra.mxu0 %v1220
    %3546 = vmatpush.bf16.msra.mxu0 %v1212
    %3547 = vmatpush.bf16.msra.mxu0 %v1204
    %3548 = vmatpush.bf16.msra.mxu0 %v1196
    %3549 = vmatmul.bf16.gmra.mxu0 %v3383
    %v3550 = vpop.f32.mrf.mxu0
    %v3551 = vadd.f32 0.0, %v3550
    %v3552 = vpop.f32.mrf.mxu0
    %3553 = vdwg.mxu0
    %3554 = vmatpush.bf16.msra.mxu0 %v1316
    %3555 = vmatpush.bf16.msra.mxu0 %v1308
    %3556 = vmatpush.bf16.msra.mxu0 %v1300
    %3557 = vmatpush.bf16.msra.mxu0 %v1292
    %3558 = vmatpush.bf16.msra.mxu0 %v1284
    %3559 = vmatpush.bf16.msra.mxu0 %v1276
    %3560 = vmatpush.bf16.msra.mxu0 %v1268
    %3561 = vmatpush.bf16.msra.mxu0 %v1260
    %3562 = vmatmul.bf16.gmra.mxu0 %v3384
    %v3563 = vpop.f32.mrf.mxu0
    %v3564 = vadd.f32 %v3551, %v3563
    %v3565 = vpop.f32.mrf.mxu0
    %3566 = vdwg.mxu0
    %3567 = vmatpush.bf16.msra.mxu0 %v1253
    %3568 = vmatpush.bf16.msra.mxu0 %v1245
    %3569 = vmatpush.bf16.msra.mxu0 %v1237
    %3570 = vmatpush.bf16.msra.mxu0 %v1229
    %3571 = vmatpush.bf16.msra.mxu0 %v1221
    %3572 = vmatpush.bf16.msra.mxu0 %v1213
    %3573 = vmatpush.bf16.msra.mxu0 %v1205
    %3574 = vmatpush.bf16.msra.mxu0 %v1197
    %3575 = vmatmul.bf16.gmra.mxu0 %v3383
    %v3576 = vpop.f32.mrf.mxu0
    %v3577 = vadd.f32 0.0, %v3576
    %v3578 = vpop.f32.mrf.mxu0
    %3579 = vdwg.mxu0
    %3580 = vmatpush.bf16.msra.mxu0 %v1317
    %3581 = vmatpush.bf16.msra.mxu0 %v1309
    %3582 = vmatpush.bf16.msra.mxu0 %v1301
    %3583 = vmatpush.bf16.msra.mxu0 %v1293
    %3584 = vmatpush.bf16.msra.mxu0 %v1285
    %3585 = vmatpush.bf16.msra.mxu0 %v1277
    %3586 = vmatpush.bf16.msra.mxu0 %v1269
    %3587 = vmatpush.bf16.msra.mxu0 %v1261
    %3588 = vmatmul.bf16.gmra.mxu0 %v3384
    %v3589 = vpop.f32.mrf.mxu0
    %v3590 = vadd.f32 %v3577, %v3589
    %v3591 = vpop.f32.mrf.mxu0
    %3592 = vdwg.mxu0
    %v3601 = vrot.slane %v3434, 7
    %v3602 = vrot.slane %v3460, 6
    %v3603 = vrot.slane %v3486, 5
    %v3604 = vrot.slane %v3512, 4
    %v3605 = vrot.slane %v3538, 3
    %v3606 = vrot.slane %v3564, 2
    %v3607 = vrot.slane %v3590, 1
    %v3608 = vsel %vm1669, %v3408, %v3601
    %v3609 = vsel %vm1671, %v3602, %v3603
    %v3610 = vsel %vm1673, %v3608, %v3609
    %v3611 = vsel %vm1675, %v3604, %v3605
    %v3612 = vsel %vm1677, %v3606, %v3607
    %v3613 = vsel %vm1679, %v3611, %v3612
    %v3614 = vsel %vm1681, %v3610, %v3613
    %v3616 = vadd.f32 %v3377, %v3614
    %v3617 = vxor.u32 %v3616, 2147483648
    %v3618 = vmul.f32 %v3617, 1.442695
    %v3619 = vpow.pop %v3618
    %v3620 = vadd.f32 %v3619, 1.0
    %v3621 = vrcp.pop %v3620
    %v3622 = vmul.f32 %v3620, %v3621
    %v3623 = vsub.f32 1.0, %v3622
    %v3624 = vmul.f32 %v3621, %v3623
    %v3625 = vadd.f32 %v3621, %v3624
    %vm3626 = vweird.f32 %v3620
    %vm3627 = vweird.f32 %v3621
    %vm3628 = vmor %vm3626, %vm3627
    %v3629 = vsel %vm3628, %v3621, %v3625
    %v3630 = vand.u32 2147483647, %v3620
    %vm3631 = vcmp.eq.f32.partialorder %v3630, 8.507059e+37
    %v3632 = vand.u32 %v3620, 2147483648
    %v3633 = vor.u32 1.1754944e-38, %v3632
    %v3634 = vsel %vm3631, %v3633, %v3629
    %v3635 = vmul.f32 1.0, %v3634
    %v3637 = vrot.slane %v3616, 6
    %v3639 = vtanh.pop %v3637
    %v3641 = vrot.slane %v3635, 2
    %v3643 = vmul.f32 %v3641, %v3369
    %v3644 = vmul.f32 %v3635, %v3639
    %v3645 = vadd.f32 %v3643, %v3644
    %v3646 = vtanh.pop %v3645
    %v3647 = vrot.slane %v3635, 4
    %v3649 = vmul.f32 %v3647, %v3646
    %v3651 = vperm.slane %v3649, 1
    %v3653 = vpack.c.bf16 %v3651, %v3651
    %v3654 = vld [vmem:[#allocation8] sm:$0xf]
    %v3655 = vld [vmem:[#allocation8 + $0x4] sm:$0xf]
    %v3656 = vld [vmem:[#allocation8 + $0x8] sm:$0xf]
    %v3657 = vld [vmem:[#allocation8 + $0xc] sm:$0xf]
    %v3658 = vld [vmem:[#allocation8 + $0x10] sm:$0xf]
    %v3659 = vld [vmem:[#allocation8 + $0x14] sm:$0xf]
    %v3660 = vld [vmem:[#allocation8 + $0x18] sm:$0xf]
    %v3661 = vld [vmem:[#allocation8 + $0x1c] sm:$0xf]
    %v3662 = vld [vmem:[#allocation8 + $0x20] sm:$0xf]
    %v3663 = vld [vmem:[#allocation8 + $0x24] sm:$0xf]
    %v3664 = vld [vmem:[#allocation8 + $0x28] sm:$0xf]
    %v3665 = vld [vmem:[#allocation8 + $0x2c] sm:$0xf]
    %v3666 = vld [vmem:[#allocation8 + $0x30] sm:$0xf]
    %v3667 = vld [vmem:[#allocation8 + $0x34] sm:$0xf]
    %v3668 = vld [vmem:[#allocation8 + $0x38] sm:$0xf]
    %v3669 = vld [vmem:[#allocation8 + $0x3c] sm:$0xf]
    %v3670 = vld [vmem:[%s4] sm:$0x1]
    %v3687 = vunpack.c.l.b16 %v3654
    %v3688 = vunpack.c.l.b16 %v3655
    %v3689 = vunpack.c.l.b16 %v3656
    %v3690 = vunpack.c.l.b16 %v3657
    %v3691 = vunpack.c.l.b16 %v3658
    %v3692 = vunpack.c.l.b16 %v3659
    %v3693 = vunpack.c.l.b16 %v3660
    %v3694 = vunpack.c.l.b16 %v3661
    %v3695 = vunpack.c.l.b16 %v3662
    %v3696 = vunpack.c.l.b16 %v3663
    %v3697 = vunpack.c.l.b16 %v3664
    %v3698 = vunpack.c.l.b16 %v3665
    %v3699 = vunpack.c.l.b16 %v3666
    %v3700 = vunpack.c.l.b16 %v3667
    %v3701 = vunpack.c.l.b16 %v3668
    %v3702 = vunpack.c.l.b16 %v3669
    %v3703 = vpack.c.b16 %v3688, %v3687
    %v3704 = vpack.c.b16 %v3690, %v3689
    %v3705 = vpack.c.b16 %v3692, %v3691
    %v3706 = vpack.c.b16 %v3694, %v3693
    %v3707 = vpack.c.b16 %v3696, %v3695
    %v3708 = vpack.c.b16 %v3698, %v3697
    %v3709 = vpack.c.b16 %v3700, %v3699
    %v3710 = vpack.c.b16 %v3702, %v3701
    %3719 = vmatpush.bf16.msra.mxu0 %v3710
    %3720 = vmatpush.bf16.msra.mxu0 %v3709
    %3721 = vmatpush.bf16.msra.mxu0 %v3708
    %3722 = vmatpush.bf16.msra.mxu0 %v3707
    %3723 = vmatpush.bf16.msra.mxu0 %v3706
    %3724 = vmatpush.bf16.msra.mxu0 %v3705
    %3725 = vmatpush.bf16.msra.mxu0 %v3704
    %3726 = vmatpush.bf16.msra.mxu0 %v3703
    %3727 = vmatmul.bf16.gmra.mxu0 %v3653
    %v3728 = vpop.f32.mrf.mxu0
    %v3729 = vadd.f32 %v3670, %v3728
    %v3730 = vpop.f32.mrf.mxu0
    %3731 = vdwg.mxu0
    %v3732 = vmax.f32 %v3729, 0.0
    %v3733 = vpack.c.bf16 %v3732, %v3732
    %v3734 = vld [vmem:[#allocation9] sm:$0xf]
    %v3735 = vld [vmem:[#allocation9 + $0x4] sm:$0xf]
    %v3736 = vld [vmem:[#allocation9 + $0x8] sm:$0xf]
    %v3737 = vld [vmem:[#allocation9 + $0xc] sm:$0xf]
    %v3738 = vld [vmem:[#allocation9 + $0x10] sm:$0xf]
    %v3739 = vld [vmem:[#allocation9 + $0x14] sm:$0xf]
    %v3740 = vld [vmem:[#allocation9 + $0x18] sm:$0xf]
    %v3741 = vld [vmem:[#allocation9 + $0x1c] sm:$0xf]
    %v3742 = vld [vmem:[#allocation9 + $0x20] sm:$0xf]
    %v3743 = vld [vmem:[#allocation9 + $0x24] sm:$0xf]
    %v3744 = vld [vmem:[#allocation9 + $0x28] sm:$0xf]
    %v3745 = vld [vmem:[#allocation9 + $0x2c] sm:$0xf]
    %v3746 = vld [vmem:[#allocation9 + $0x30] sm:$0xf]
    %v3747 = vld [vmem:[#allocation9 + $0x34] sm:$0xf]
    %v3748 = vld [vmem:[#allocation9 + $0x38] sm:$0xf]
    %v3749 = vld [vmem:[#allocation9 + $0x3c] sm:$0xf]
    %v3750 = vld [vmem:[%s6] sm:$0x1]
    %v3767 = vunpack.c.l.b16 %v3734
    %v3768 = vunpack.c.l.b16 %v3735
    %v3769 = vunpack.c.l.b16 %v3736
    %v3770 = vunpack.c.l.b16 %v3737
    %v3771 = vunpack.c.l.b16 %v3738
    %v3772 = vunpack.c.l.b16 %v3739
    %v3773 = vunpack.c.l.b16 %v3740
    %v3774 = vunpack.c.l.b16 %v3741
    %v3775 = vunpack.c.l.b16 %v3742
    %v3776 = vunpack.c.l.b16 %v3743
    %v3777 = vunpack.c.l.b16 %v3744
    %v3778 = vunpack.c.l.b16 %v3745
    %v3779 = vunpack.c.l.b16 %v3746
    %v3780 = vunpack.c.l.b16 %v3747
    %v3781 = vunpack.c.l.b16 %v3748
    %v3782 = vunpack.c.l.b16 %v3749
    %v3783 = vpack.c.b16 %v3768, %v3767
    %v3784 = vpack.c.b16 %v3770, %v3769
    %v3785 = vpack.c.b16 %v3772, %v3771
    %v3786 = vpack.c.b16 %v3774, %v3773
    %v3787 = vpack.c.b16 %v3776, %v3775
    %v3788 = vpack.c.b16 %v3778, %v3777
    %v3789 = vpack.c.b16 %v3780, %v3779
    %v3790 = vpack.c.b16 %v3782, %v3781
    %3799 = vmatpush.bf16.msra.mxu0 %v3790
    %3800 = vmatpush.bf16.msra.mxu0 %v3789
    %3801 = vmatpush.bf16.msra.mxu0 %v3788
    %3802 = vmatpush.bf16.msra.mxu0 %v3787
    %3803 = vmatpush.bf16.msra.mxu0 %v3786
    %3804 = vmatpush.bf16.msra.mxu0 %v3785
    %3805 = vmatpush.bf16.msra.mxu0 %v3784
    %3806 = vmatpush.bf16.msra.mxu0 %v3783
    %3807 = vmatmul.bf16.gmra.mxu0 %v3733
    %v3808 = vpop.f32.mrf.mxu0
    %v3809 = vadd.f32 %v3750, %v3808
    %v3810 = vpop.f32.mrf.mxu0
    %3811 = vdwg.mxu0
    %v3812 = vmax.f32 %v3809, 0.0
    %v3813 = vpack.c.bf16 %v3812, %v3812
    %v3814 = vld [vmem:[#allocation11] sm:$0xf]
    %v3815 = vld [vmem:[#allocation11 + $0x4] sm:$0xf]
    %v3816 = vld [vmem:[#allocation11 + $0x8] sm:$0xf]
    %v3817 = vld [vmem:[#allocation11 + $0xc] sm:$0xf]
    %v3818 = vld [vmem:[#allocation11 + $0x10] sm:$0xf]
    %v3819 = vld [vmem:[#allocation11 + $0x14] sm:$0xf]
    %v3820 = vld [vmem:[#allocation11 + $0x18] sm:$0xf]
    %v3821 = vld [vmem:[#allocation11 + $0x1c] sm:$0xf]
    %v3822 = vld [vmem:[#allocation11 + $0x20] sm:$0xf]
    %v3823 = vld [vmem:[#allocation11 + $0x24] sm:$0xf]
    %v3824 = vld [vmem:[#allocation11 + $0x28] sm:$0xf]
    %v3825 = vld [vmem:[#allocation11 + $0x2c] sm:$0xf]
    %v3826 = vld [vmem:[#allocation11 + $0x30] sm:$0xf]
    %v3827 = vld [vmem:[#allocation11 + $0x34] sm:$0xf]
    %v3828 = vld [vmem:[#allocation11 + $0x38] sm:$0xf]
    %v3829 = vld [vmem:[#allocation11 + $0x3c] sm:$0xf]
    %v3830 = vld [vmem:[%s8] sm:$0x1]
    %v3847 = vunpack.c.l.b16 %v3814
    %v3848 = vunpack.c.l.b16 %v3815
    %v3849 = vunpack.c.l.b16 %v3816
    %v3850 = vunpack.c.l.b16 %v3817
    %v3851 = vunpack.c.l.b16 %v3818
    %v3852 = vunpack.c.l.b16 %v3819
    %v3853 = vunpack.c.l.b16 %v3820
    %v3854 = vunpack.c.l.b16 %v3821
    %v3855 = vunpack.c.l.b16 %v3822
    %v3856 = vunpack.c.l.b16 %v3823
    %v3857 = vunpack.c.l.b16 %v3824
    %v3858 = vunpack.c.l.b16 %v3825
    %v3859 = vunpack.c.l.b16 %v3826
    %v3860 = vunpack.c.l.b16 %v3827
    %v3861 = vunpack.c.l.b16 %v3828
    %v3862 = vunpack.c.l.b16 %v3829
    %v3863 = vpack.c.b16 %v3848, %v3847
    %v3864 = vpack.c.b16 %v3850, %v3849
    %v3865 = vpack.c.b16 %v3852, %v3851
    %v3866 = vpack.c.b16 %v3854, %v3853
    %v3867 = vpack.c.b16 %v3856, %v3855
    %v3868 = vpack.c.b16 %v3858, %v3857
    %v3869 = vpack.c.b16 %v3860, %v3859
    %v3870 = vpack.c.b16 %v3862, %v3861
    %3879 = vmatpush.bf16.msra.mxu0 %v3870
    %3880 = vmatpush.bf16.msra.mxu0 %v3869
    %3881 = vmatpush.bf16.msra.mxu0 %v3868
    %3882 = vmatpush.bf16.msra.mxu0 %v3867
    %3883 = vmatpush.bf16.msra.mxu0 %v3866
    %3884 = vmatpush.bf16.msra.mxu0 %v3865
    %3885 = vmatpush.bf16.msra.mxu0 %v3864
    %3886 = vmatpush.bf16.msra.mxu0 %v3863
    %3887 = vmatmul.bf16.gmra.mxu0 %v3813
    %v3888 = vpop.f32.mrf.mxu0
    %v3889 = vadd.f32 %v3830, %v3888
    %v3890 = vpop.f32.mrf.mxu0
    %3891 = vdwg.mxu0
    %3892 = vst [vmem:[#allocation12] sm:$0x1] %v3889
    // Predicated region
    $region58: #{sepsis_forward.1} parent=1 // pred_check
      _
    $region59: #{sepsis_forward.1} parent=1 // pred_check_branch
      %3894 = sbr.rel (0) target = $region61
    $region60: #{sepsis_forward.1} parent=1 // pred_region
      %3896 = vsyncadd [#allocation5], 0
      %s3898 = sshll.u32 [#allocation12], 4
      %s3899 = int_to_ptr.vmem [resolvable:$true] %s3898
      %s3900 = sshll.u32 %s9, 4
      %s3901 = int_to_ptr.hbm [resolvable:$true] %s3900
      %3903 = dma.vmem_to_hbm [thread:$0]  %s3899, 16, %s3901, [#allocation5]
    $region61: #{sepsis_forward.1} parent=1 // pred_fallthru
      _
    // Predicated region
    $region62: #{sepsis_forward.1} parent=1 // pred_check
      _
    $region63: #{sepsis_forward.1} parent=1 // pred_check_branch
      %3905 = sbr.rel (0) target = $region65
    $region64: #{sepsis_forward.1} parent=1 // pred_region
      %3907 = dma.done [#allocation5], 16
    $region65: #{sepsis_forward.1} parent=1 // pred_fallthru
      _
    %3908 = vsyncpa [#allocation4], 1
    %3909 = vsyncpa [#allocation7], 1
    %3910 = vsyncpa [#allocation10], 1
    %3911 = vsyncpa [#allocation5], 1

</llo_original>
